<compile_context>
chip_gen: v7x
topology: tpu7x:2x2x1
jax: 0.10.0
libtpu: 0.0.40
codegen_flags: <defaults>
</compile_context>

<pallas_src>
import jax
import jax.numpy as jnp
from jax import lax
from jax.experimental import pallas as pl
from jax.experimental.pallas import tpu as pltpu

SELU_ALPHA = 1.6732632423543772848170429916717
SELU_SCALE = 1.0507009873554804934193349852946
RA_SCALE = 1.1 - 0.1 * 1.0    # Ra = 1
RB_SCALE = 1.1 - 0.1 * 1.0    # Rb = 1


# ----------------------------- in-kernel helpers -----------------------------

def _softmax(x, axis):
    m = jnp.max(x, axis=axis, keepdims=True)
    e = jnp.exp(x - m)
    return e * pl.reciprocal(jnp.sum(e, axis=axis, keepdims=True), approx=True)


def _sigmoid(x):
    return pl.reciprocal(1.0 + jnp.exp(-x), approx=True)


# ------------------------------ fused Fusion3 kernel --------------------------

def _fusion3_kernel(feats_ref, ta_w_ref, ta_b_ref,
                    roi_cw_ref, roi_cb_ref, roi_gw_ref, roi_gb_ref,
                    head_w_ref, head_b_ref, out_ref):
    feats0 = feats_ref[...]                        # [2B, C, P]  (pseudo batches, then valid)
    twoB, C, P = feats0.shape
    B = twoB // 2
    M = B * P                                      # rows per stream
    R = 2 * M

    # single layout change at entry: NCW -> lane-dense row-major [row=(stream,b,p), C]
    feats_t = jnp.transpose(feats0, (0, 2, 1))     # [2B, P, C]
    feats_2d = feats_t.reshape(R, C)

    # TransAttention.fc1 folded host-side to 2 matmuls (Linear x4 | SELU | Linear x3)
    wA = ta_w_ref[0]                               # [C, C]
    wB = ta_w_ref[1]
    ta_b = ta_b_ref[...]                           # [2, C]
    bA = ta_b[0:1]
    bB = ta_b[1:2]

    def fc1(x):
        h = jnp.dot(x, wA, preferred_element_type=jnp.float32) + bA
        h = SELU_SCALE * jnp.where(h > 0, h, SELU_ALPHA * (jnp.exp(h) - 1.0))
        # TODO(synk): Dropout(p=0.1) is identity here (eval-mode semantics).
        return jnp.dot(h, wB, preferred_element_type=jnp.float32) + bB

    # ------------------- TransAttention (pse & val batched over 2B) ------------
    qk = fc1(feats_2d).reshape(twoB, P, C)         # fc1(x) feeds both Q and K
    Q = _softmax(qk, axis=-2)                      # softmax over points
    K = _softmax(qk, axis=-1)                      # softmax over channels
    K_cross = jnp.concatenate([K[B:], K[:B]], axis=0)   # pse_Q<->val_K, val_Q<->pse_K

    attn = jnp.einsum('xpc,xqc->xpq', Q, K_cross,
                      preferred_element_type=jnp.float32) * (1.0 / C)   # dn == channels
    end = jnp.einsum('xpq,xqc->xpc', attn, feats_t,
                     preferred_element_type=jnp.float32)
    end = fc1(end.reshape(R, C)).reshape(twoB, P, C)

    # F.normalize(dim=-1) on the [B, C, P] tensor == L2-normalize over the P axis.
    ss = jnp.sum(end * end, axis=1, keepdims=True)              # [2B, 1, C]
    end = end * lax.rsqrt(jnp.maximum(ss, 1e-24))               # == x / max(||x||, 1e-12)
    feats_2d = (end * 0.1 + feats_t * RA_SCALE).reshape(R, C)

    # ------------------------------ 2 x ROIAttention ---------------------------
    roi_cb = roi_cb_ref[...]                       # [4, C]
    roi_gw = roi_gw_ref[...]                       # [8, C]
    for k in range(2):
        pse = feats_2d[:M]
        val = feats_2d[M:]
        u_p = roi_gw[4 * k + 0:4 * k + 1]          # [1, C]
        v_p = roi_gw[4 * k + 1:4 * k + 2]
        u_v = roi_gw[4 * k + 2:4 * k + 3]
        v_v = roi_gw[4 * k + 3:4 * k + 4]
        # fc1->fc2->fc3->fc4{p,v}->fc5{p,v} folded host-side into one affine gate/row
        gate_p = _sigmoid(jnp.sum(pse * u_p + val * v_p, axis=-1, keepdims=True)
                          + roi_gb_ref[k, 0])
        gate_v = _sigmoid(jnp.sum(pse * u_v + val * v_v, axis=-1, keepdims=True)
                          + roi_gb_ref[k, 1])
        gated_p = pse * (gate_p * RB_SCALE)
        gated_v = val * (gate_v * RB_SCALE)
        # 1x1 Conv1d + folded BatchNorm + ReLU
        out_p = jnp.maximum(
            jnp.dot(gated_p, roi_cw_ref[2 * k + 0], preferred_element_type=jnp.float32)
            + roi_cb[2 * k + 0:2 * k + 1], 0.0)
        out_v = jnp.maximum(
            jnp.dot(gated_v, roi_cw_ref[2 * k + 1], preferred_element_type=jnp.float32)
            + roi_cb[2 * k + 1:2 * k + 2], 0.0)
        feats_2d = jnp.concatenate([out_p, out_v], axis=0)

    # ------------ cat([valid, pseudo], dim=1) + 1x1 conv + BN + ReLU -----------
    pse = feats_2d[:M]
    val = feats_2d[M:]
    y = jnp.maximum(
        jnp.dot(val, head_w_ref[0], preferred_element_type=jnp.float32)
        + jnp.dot(pse, head_w_ref[1], preferred_element_type=jnp.float32)
        + head_b_ref[...], 0.0)                                  # [M, OUT]
    out_c = y.shape[-1]
    # single layout change at exit, back to NCW [B, OUT, P]
    out_ref[...] = jnp.transpose(y.reshape(B, P, out_c), (0, 2, 1))


def fusion3_forward(valid_features, pseudo_features, params):
    B, C, P = valid_features.shape
    out_c = params['head_w'].shape[-1]
    vmem = pl.BlockSpec(memory_space=pltpu.MemorySpace.VMEM)
    smem = pl.BlockSpec(memory_space=pltpu.MemorySpace.SMEM)
    # stack pse/val along batch -> one activation DMA, shared fc1/softmax work batched
    feats0 = jnp.concatenate([pseudo_features, valid_features], axis=0)   # [2B, C, P]
    return pl.pallas_call(
        _fusion3_kernel,
        out_shape=jax.ShapeDtypeStruct((B, out_c, P), jnp.float32),
        in_specs=[vmem, vmem, vmem, vmem, vmem, vmem, smem, vmem, vmem],
        out_specs=vmem,
    )(feats0, params['ta_w'], params['ta_b'],
      params['roi_cw'], params['roi_cb'], params['roi_gw'], params['roi_gb'],
      params['head_w'], params['head_b'])


fusion3_forward = jax.jit(fusion3_forward)


# ----------------------------- parameter creation -----------------------------

def init_raw_params(key, channels, outplanes):
    """Random params mimicking the PyTorch module structure (weights stored [out, in])."""
    C = channels
    keys = iter(jax.random.split(key, 80))

    def linear(out_d, in_d):
        return dict(w=jax.random.normal(next(keys), (out_d, in_d), jnp.float32) * 0.1,
                    b=jax.random.normal(next(keys), (out_d,), jnp.float32) * 0.1)

    def conv_bn(out_c, in_c):
        ks = jax.random.split(next(keys), 6)
        return dict(w=jax.random.normal(ks[0], (out_c, in_c), jnp.float32) * 0.1,  # 1x1 conv
                    b=jax.random.normal(ks[1], (out_c,), jnp.float32) * 0.1,
                    gamma=jax.random.uniform(ks[2], (out_c,), jnp.float32, minval=0.5, maxval=1.5),
                    beta=jax.random.normal(ks[3], (out_c,), jnp.float32) * 0.1,
                    mean=jax.random.normal(ks[4], (out_c,), jnp.float32) * 0.1,
                    var=jax.random.uniform(ks[5], (out_c,), jnp.float32, minval=0.5, maxval=1.5))

    ta = [linear(C, C) for _ in range(7)]

    def roi():
        return dict(fc1=linear(4 * C, 2 * C), fc2=linear(2 * C, 4 * C), fc3=linear(C, 2 * C),
                    fc4p=linear(C // 4, C // 2), fc4v=linear(C // 4, C // 2),
                    fc5p=linear(1, C // 4), fc5v=linear(1, C // 4),
                    conv1=conv_bn(C, C), conv2=conv_bn(C, C))

    return dict(ta=ta, roi=[roi(), roi()], head=conv_bn(outplanes, 2 * C))


def fold_params(raw, channels):
    """Host-side eval-mode folding (exact: no nonlinearity inside each folded chain)."""
    C = channels

    def chain(layers):
        # compose consecutive Linears: y = x @ w + b with w = [in, out]
        w = layers[0]['w'].T
        b = layers[0]['b']
        for l in layers[1:]:
            wt = l['w'].T
            w = w @ wt
            b = b @ wt + l['b']
        return w, b

    def fold_conv_bn(p, eps=1e-5):
        scale = p['gamma'] / jnp.sqrt(p['var'] + eps)
        return (p['w'] * scale[:, None]).T, (p['b'] - p['mean']) * scale + p['beta']

    # TransAttention.fc1: Linear x4 (before SELU) and Linear x3 (after SELU/Dropout)
    wA, bA = chain(raw['ta'][:4])
    wB, bB = chain(raw['ta'][4:])

    Ch = C // 2
    roi_cw, roi_cb, roi_gw, roi_gb = [], [], [], []
    for r in raw['roi']:
        Wf, bf = chain([r['fc1'], r['fc2'], r['fc3']])     # [2C, C], [C]
        Gp, gbp = chain([r['fc4p'], r['fc5p']])            # [C/2, 1], [1]
        Gv, gbv = chain([r['fc4v'], r['fc5v']])
        Wf_p, Wf_v = Wf[:C], Wf[C:]
        u_p = (Wf_p[:, :Ch] @ Gp)[:, 0]                    # gate_p = sigm(pse·u_p + val·v_p + c_p)
        v_p = (Wf_v[:, :Ch] @ Gp)[:, 0]
        u_v = (Wf_p[:, Ch:] @ Gv)[:, 0]
        v_v = (Wf_v[:, Ch:] @ Gv)[:, 0]
        c_p = bf[:Ch] @ Gp + gbp                           # [1]
        c_v = bf[Ch:] @ Gv + gbv
        cw1, cb1 = fold_conv_bn(r['conv1'])
        cw2, cb2 = fold_conv_bn(r['conv2'])
        roi_gw.append(jnp.stack([u_p, v_p, u_v, v_v]))     # [4, C]
        roi_gb.append(jnp.concatenate([c_p, c_v]))         # [2]
        roi_cw.append(jnp.stack([cw1, cw2]))               # [2, C, C]
        roi_cb.append(jnp.stack([cb1, cb2]))               # [2, C]

    hw, hb = fold_conv_bn(raw['head'])                     # [2C, out], [out]
    return dict(ta_w=jnp.stack([wA, wB]),                  # [2, C, C]
                ta_b=jnp.stack([bA, bB]),                  # [2, C]
                roi_cw=jnp.concatenate(roi_cw, axis=0),    # [4, C, C]
                roi_cb=jnp.concatenate(roi_cb, axis=0),    # [4, C]
                roi_gw=jnp.concatenate(roi_gw, axis=0),    # [8, C]
                roi_gb=jnp.stack(roi_gb),                  # [2, 2]  (SMEM scalars)
                head_w=jnp.stack([hw[:C], hw[C:]]),        # [2, C, out] (valid, pseudo)
                head_b=hb[None, :])                        # [1, out]


# --------------------------------- entry point ---------------------------------

if __name__ == "__main__":
    B, C, P = 2, 32, 16           # pseudo_in = valid_in = 32 channels, 16 points
    outplanes = 32
    key = jax.random.PRNGKey(0)
    k_par, k_val, k_pse = jax.random.split(key, 3)
    raw = init_raw_params(k_par, C, outplanes)
    params = fold_params(raw, C)
    valid_features = jax.random.normal(k_val, (B, C, P), jnp.float32)
    pseudo_features = jax.random.normal(k_pse, (B, C, P), jnp.float32)

    out = fusion3_forward(valid_features, pseudo_features, params)
    jax.block_until_ready(out)
    assert out.shape == (B, outplanes, P), out.shape
    print("KERNEL_OK")
</pallas_src>

<mosaic_0001>
module attributes {stable_mosaic.version = 11 : i64} {
  func.func @_fusion3_kernel(%arg0: memref<4x32x16xf32, #tpu.memory_space<vmem>>, %arg1: memref<2x32x32xf32, #tpu.memory_space<vmem>>, %arg2: memref<2x32xf32, #tpu.memory_space<vmem>>, %arg3: memref<4x32x32xf32, #tpu.memory_space<vmem>>, %arg4: memref<4x32xf32, #tpu.memory_space<vmem>>, %arg5: memref<8x32xf32, #tpu.memory_space<vmem>>, %arg6: memref<2x2xf32, #tpu.memory_space<smem>>, %arg7: memref<2x32x32xf32, #tpu.memory_space<vmem>>, %arg8: memref<1x32xf32, #tpu.memory_space<vmem>>, %arg9: memref<2x32x16xf32, #tpu.memory_space<vmem>>) attributes {dimension_semantics = [], scalar_prefetch = 0 : i64, scratch_operands = 0 : i64, tpu.core_type = #tpu.core_type<tc>} {
    %c0 = arith.constant 0 : index
    %c0_0 = arith.constant 0 : index
    %c0_1 = arith.constant 0 : index
    %0 = vector.load %arg0[%c0, %c0_0, %c0_1] : memref<4x32x16xf32, #tpu.memory_space<vmem>>, vector<4x32x16xf32>
    %1 = tpu.transpose %0, [0, 2, 1] : vector<4x32x16xf32> -> vector<4x16x32xf32>
    %2 = vector.shape_cast %1 : vector<4x16x32xf32> to vector<64x32xf32>
    %c0_2 = arith.constant 0 : index
    %c0_3 = arith.constant 0 : index
    %c0_4 = arith.constant 0 : index
    %3 = vector.load %arg1[%c0_2, %c0_3, %c0_4] : memref<2x32x32xf32, #tpu.memory_space<vmem>>, vector<1x32x32xf32>
    %4 = vector.shape_cast %3 : vector<1x32x32xf32> to vector<32x32xf32>
    %c1 = arith.constant 1 : index
    %c0_5 = arith.constant 0 : index
    %c0_6 = arith.constant 0 : index
    %5 = vector.load %arg1[%c1, %c0_5, %c0_6] : memref<2x32x32xf32, #tpu.memory_space<vmem>>, vector<1x32x32xf32>
    %6 = vector.shape_cast %5 : vector<1x32x32xf32> to vector<32x32xf32>
    %c0_7 = arith.constant 0 : index
    %c0_8 = arith.constant 0 : index
    %7 = vector.load %arg2[%c0_7, %c0_8] : memref<2x32xf32, #tpu.memory_space<vmem>>, vector<2x32xf32>
    %8 = vector.extract_strided_slice %7 {offsets = [0, 0], sizes = [1, 32], strides = [1, 1]} : vector<2x32xf32> to vector<1x32xf32>
    %9 = vector.extract_strided_slice %7 {offsets = [1, 0], sizes = [1, 32], strides = [1, 1]} : vector<2x32xf32> to vector<1x32xf32>
    %cst = arith.constant dense<0.000000e+00> : vector<64x32xf32>
    %10 = tpu.matmul %2, %4, %cst {dimension_numbers = #tpu.dot_dimension_numbers<[1], [0], [0], [1], [0, 0, 1, 1], [], []>} : vector<64x32xf32>, vector<32x32xf32>, vector<64x32xf32> -> vector<64x32xf32>
    %11 = vector.broadcast %8 : vector<1x32xf32> to vector<64x32xf32>
    %12 = arith.addf %10, %11 : vector<64x32xf32>
    %cst_9 = arith.constant 0.000000e+00 : f32
    %13 = vector.broadcast %cst_9 : f32 to vector<64x32xf32>
    %14 = arith.cmpf ogt, %12, %13 : vector<64x32xf32>
    %15 = math.exp %12 : vector<64x32xf32>
    %cst_10 = arith.constant 1.000000e+00 : f32
    %16 = vector.broadcast %cst_10 : f32 to vector<64x32xf32>
    %17 = arith.subf %15, %16 : vector<64x32xf32>
    %cst_11 = arith.constant 1.67326319 : f32
    %18 = vector.broadcast %cst_11 : f32 to vector<64x32xf32>
    %19 = arith.mulf %18, %17 : vector<64x32xf32>
    %20 = arith.select %14, %12, %19 : vector<64x32xi1>, vector<64x32xf32>
    %cst_12 = arith.constant 1.05070102 : f32
    %21 = vector.broadcast %cst_12 : f32 to vector<64x32xf32>
    %22 = arith.mulf %21, %20 : vector<64x32xf32>
    %cst_13 = arith.constant dense<0.000000e+00> : vector<64x32xf32>
    %23 = tpu.matmul %22, %6, %cst_13 {dimension_numbers = #tpu.dot_dimension_numbers<[1], [0], [0], [1], [0, 0, 1, 1], [], []>} : vector<64x32xf32>, vector<32x32xf32>, vector<64x32xf32> -> vector<64x32xf32>
    %24 = vector.broadcast %9 : vector<1x32xf32> to vector<64x32xf32>
    %25 = arith.addf %23, %24 : vector<64x32xf32>
    %26 = vector.shape_cast %25 : vector<64x32xf32> to vector<4x16x32xf32>
    %cst_14 = arith.constant dense<0xFF800000> : vector<4x32xf32>
    %27 = vector.multi_reduction <maximumf>, %26, %cst_14 [1] : vector<4x16x32xf32> to vector<4x32xf32>
    %28 = vector.shape_cast %27 : vector<4x32xf32> to vector<4x1x32xf32>
    %29 = vector.broadcast %28 : vector<4x1x32xf32> to vector<4x16x32xf32>
    %30 = arith.subf %26, %29 : vector<4x16x32xf32>
    %31 = math.exp %30 : vector<4x16x32xf32>
    %cst_15 = arith.constant dense<0.000000e+00> : vector<4x32xf32>
    %32 = vector.multi_reduction <add>, %31, %cst_15 [1] : vector<4x16x32xf32> to vector<4x32xf32>
    %33 = vector.shape_cast %32 : vector<4x32xf32> to vector<4x1x32xf32>
    %34 = tpu.reciprocal %33 {approx = true} : vector<4x1x32xf32> -> vector<4x1x32xf32>
    %35 = vector.broadcast %34 : vector<4x1x32xf32> to vector<4x16x32xf32>
    %36 = arith.mulf %31, %35 : vector<4x16x32xf32>
    %cst_16 = arith.constant dense<0xFF800000> : vector<4x16xf32>
    %37 = vector.multi_reduction <maximumf>, %26, %cst_16 [2] : vector<4x16x32xf32> to vector<4x16xf32>
    %38 = vector.shape_cast %37 : vector<4x16xf32> to vector<4x16x1xf32>
    %39 = vector.broadcast %38 : vector<4x16x1xf32> to vector<4x16x32xf32>
    %40 = arith.subf %26, %39 : vector<4x16x32xf32>
    %41 = math.exp %40 : vector<4x16x32xf32>
    %cst_17 = arith.constant dense<0.000000e+00> : vector<4x16xf32>
    %42 = vector.multi_reduction <add>, %41, %cst_17 [2] : vector<4x16x32xf32> to vector<4x16xf32>
    %43 = vector.shape_cast %42 : vector<4x16xf32> to vector<4x16x1xf32>
    %44 = tpu.reciprocal %43 {approx = true} : vector<4x16x1xf32> -> vector<4x16x1xf32>
    %45 = vector.broadcast %44 : vector<4x16x1xf32> to vector<4x16x32xf32>
    %46 = arith.mulf %41, %45 : vector<4x16x32xf32>
    %47 = vector.extract_strided_slice %46 {offsets = [2, 0, 0], sizes = [2, 16, 32], strides = [1, 1, 1]} : vector<4x16x32xf32> to vector<2x16x32xf32>
    %48 = vector.extract_strided_slice %46 {offsets = [0, 0, 0], sizes = [2, 16, 32], strides = [1, 1, 1]} : vector<4x16x32xf32> to vector<2x16x32xf32>
    %49 = tpu.concatenate %47, %48 in 0 : vector<2x16x32xf32>, vector<2x16x32xf32> -> vector<4x16x32xf32>
    "tpu.trace_start"() <{level = 10 : i32, message = "xpc,xqc->xpq"}> : () -> ()
    %cst_18 = arith.constant dense<0.000000e+00> : vector<4x16x16xf32>
    %50 = tpu.matmul %36, %49, %cst_18 {dimension_numbers = #tpu.dot_dimension_numbers<[2], [2], [1], [1], [0, 0, 0, 1, 1, 1], [0], [0]>} : vector<4x16x32xf32>, vector<4x16x32xf32>, vector<4x16x16xf32> -> vector<4x16x16xf32>
    "tpu.trace_stop"() : () -> ()
    %cst_19 = arith.constant 3.125000e-02 : f32
    %51 = vector.broadcast %cst_19 : f32 to vector<4x16x16xf32>
    %52 = arith.mulf %50, %51 : vector<4x16x16xf32>
    "tpu.trace_start"() <{level = 10 : i32, message = "xpq,xqc->xpc"}> : () -> ()
    %cst_20 = arith.constant dense<0.000000e+00> : vector<4x16x32xf32>
    %53 = tpu.matmul %52, %1, %cst_20 {dimension_numbers = #tpu.dot_dimension_numbers<[2], [1], [1], [2], [0, 0, 0, 1, 1, 2], [0], [0]>} : vector<4x16x16xf32>, vector<4x16x32xf32>, vector<4x16x32xf32> -> vector<4x16x32xf32>
    "tpu.trace_stop"() : () -> ()
    %54 = vector.shape_cast %53 : vector<4x16x32xf32> to vector<64x32xf32>
    %cst_21 = arith.constant dense<0.000000e+00> : vector<64x32xf32>
    %55 = tpu.matmul %54, %4, %cst_21 {dimension_numbers = #tpu.dot_dimension_numbers<[1], [0], [0], [1], [0, 0, 1, 1], [], []>} : vector<64x32xf32>, vector<32x32xf32>, vector<64x32xf32> -> vector<64x32xf32>
    %56 = vector.broadcast %8 : vector<1x32xf32> to vector<64x32xf32>
    %57 = arith.addf %55, %56 : vector<64x32xf32>
    %cst_22 = arith.constant 0.000000e+00 : f32
    %58 = vector.broadcast %cst_22 : f32 to vector<64x32xf32>
    %59 = arith.cmpf ogt, %57, %58 : vector<64x32xf32>
    %60 = math.exp %57 : vector<64x32xf32>
    %cst_23 = arith.constant 1.000000e+00 : f32
    %61 = vector.broadcast %cst_23 : f32 to vector<64x32xf32>
    %62 = arith.subf %60, %61 : vector<64x32xf32>
    %cst_24 = arith.constant 1.67326319 : f32
    %63 = vector.broadcast %cst_24 : f32 to vector<64x32xf32>
    %64 = arith.mulf %63, %62 : vector<64x32xf32>
    %65 = arith.select %59, %57, %64 : vector<64x32xi1>, vector<64x32xf32>
    %cst_25 = arith.constant 1.05070102 : f32
    %66 = vector.broadcast %cst_25 : f32 to vector<64x32xf32>
    %67 = arith.mulf %66, %65 : vector<64x32xf32>
    %cst_26 = arith.constant dense<0.000000e+00> : vector<64x32xf32>
    %68 = tpu.matmul %67, %6, %cst_26 {dimension_numbers = #tpu.dot_dimension_numbers<[1], [0], [0], [1], [0, 0, 1, 1], [], []>} : vector<64x32xf32>, vector<32x32xf32>, vector<64x32xf32> -> vector<64x32xf32>
    %69 = vector.broadcast %9 : vector<1x32xf32> to vector<64x32xf32>
    %70 = arith.addf %68, %69 : vector<64x32xf32>
    %71 = vector.shape_cast %70 : vector<64x32xf32> to vector<4x16x32xf32>
    %72 = arith.mulf %71, %71 : vector<4x16x32xf32>
    %cst_27 = arith.constant dense<0.000000e+00> : vector<4x32xf32>
    %73 = vector.multi_reduction <add>, %72, %cst_27 [1] : vector<4x16x32xf32> to vector<4x32xf32>
    %74 = vector.shape_cast %73 : vector<4x32xf32> to vector<4x1x32xf32>
    %cst_28 = arith.constant 1.000000e-24 : f32
    %75 = vector.broadcast %cst_28 : f32 to vector<4x1x32xf32>
    %76 = arith.maximumf %74, %75 : vector<4x1x32xf32>
    %77 = math.rsqrt %76 : vector<4x1x32xf32>
    %78 = vector.broadcast %77 : vector<4x1x32xf32> to vector<4x16x32xf32>
    %79 = arith.mulf %71, %78 : vector<4x16x32xf32>
    %cst_29 = arith.constant 1.000000e-01 : f32
    %80 = vector.broadcast %cst_29 : f32 to vector<4x16x32xf32>
    %81 = arith.mulf %79, %80 : vector<4x16x32xf32>
    %cst_30 = arith.constant 1.000000e+00 : f32
    %82 = vector.broadcast %cst_30 : f32 to vector<4x16x32xf32>
    %83 = arith.mulf %1, %82 : vector<4x16x32xf32>
    %84 = arith.addf %81, %83 : vector<4x16x32xf32>
    %85 = vector.shape_cast %84 : vector<4x16x32xf32> to vector<64x32xf32>
    %c0_31 = arith.constant 0 : index
    %c0_32 = arith.constant 0 : index
    %86 = vector.load %arg4[%c0_31, %c0_32] : memref<4x32xf32, #tpu.memory_space<vmem>>, vector<4x32xf32>
    %c0_33 = arith.constant 0 : index
    %c0_34 = arith.constant 0 : index
    %87 = vector.load %arg5[%c0_33, %c0_34] : memref<8x32xf32, #tpu.memory_space<vmem>>, vector<8x32xf32>
    %88 = vector.extract_strided_slice %85 {offsets = [0, 0], sizes = [32, 32], strides = [1, 1]} : vector<64x32xf32> to vector<32x32xf32>
    %89 = vector.extract_strided_slice %85 {offsets = [32, 0], sizes = [32, 32], strides = [1, 1]} : vector<64x32xf32> to vector<32x32xf32>
    %90 = vector.extract_strided_slice %87 {offsets = [0, 0], sizes = [1, 32], strides = [1, 1]} : vector<8x32xf32> to vector<1x32xf32>
    %91 = vector.extract_strided_slice %87 {offsets = [1, 0], sizes = [1, 32], strides = [1, 1]} : vector<8x32xf32> to vector<1x32xf32>
    %92 = vector.extract_strided_slice %87 {offsets = [2, 0], sizes = [1, 32], strides = [1, 1]} : vector<8x32xf32> to vector<1x32xf32>
    %93 = vector.extract_strided_slice %87 {offsets = [3, 0], sizes = [1, 32], strides = [1, 1]} : vector<8x32xf32> to vector<1x32xf32>
    %94 = vector.broadcast %90 : vector<1x32xf32> to vector<32x32xf32>
    %95 = arith.mulf %88, %94 : vector<32x32xf32>
    %96 = vector.broadcast %91 : vector<1x32xf32> to vector<32x32xf32>
    %97 = arith.mulf %89, %96 : vector<32x32xf32>
    %98 = arith.addf %95, %97 : vector<32x32xf32>
    %cst_35 = arith.constant dense<0.000000e+00> : vector<32xf32>
    %99 = vector.multi_reduction <add>, %98, %cst_35 [1] : vector<32x32xf32> to vector<32xf32>
    %100 = vector.shape_cast %99 : vector<32xf32> to vector<32x1xf32>
    %c0_36 = arith.constant 0 : index
    %c0_37 = arith.constant 0 : index
    %101 = memref.load %arg6[%c0_36, %c0_37] : memref<2x2xf32, #tpu.memory_space<smem>>
    %102 = vector.broadcast %101 : f32 to vector<32x1xf32>
    %103 = arith.addf %100, %102 : vector<32x1xf32>
    %cst_38 = arith.constant 0.000000e+00 : f32
    %104 = vector.broadcast %cst_38 : f32 to vector<32x1xf32>
    %105 = arith.subf %104, %103 : vector<32x1xf32>
    %106 = math.exp %105 : vector<32x1xf32>
    %cst_39 = arith.constant 1.000000e+00 : f32
    %107 = vector.broadcast %cst_39 : f32 to vector<32x1xf32>
    %108 = arith.addf %107, %106 : vector<32x1xf32>
    %109 = tpu.reciprocal %108 {approx = true} : vector<32x1xf32> -> vector<32x1xf32>
    %110 = vector.broadcast %92 : vector<1x32xf32> to vector<32x32xf32>
    %111 = arith.mulf %88, %110 : vector<32x32xf32>
    %112 = vector.broadcast %93 : vector<1x32xf32> to vector<32x32xf32>
    %113 = arith.mulf %89, %112 : vector<32x32xf32>
    %114 = arith.addf %111, %113 : vector<32x32xf32>
    %cst_40 = arith.constant dense<0.000000e+00> : vector<32xf32>
    %115 = vector.multi_reduction <add>, %114, %cst_40 [1] : vector<32x32xf32> to vector<32xf32>
    %116 = vector.shape_cast %115 : vector<32xf32> to vector<32x1xf32>
    %c0_41 = arith.constant 0 : index
    %c1_42 = arith.constant 1 : index
    %117 = memref.load %arg6[%c0_41, %c1_42] : memref<2x2xf32, #tpu.memory_space<smem>>
    %118 = vector.broadcast %117 : f32 to vector<32x1xf32>
    %119 = arith.addf %116, %118 : vector<32x1xf32>
    %cst_43 = arith.constant 0.000000e+00 : f32
    %120 = vector.broadcast %cst_43 : f32 to vector<32x1xf32>
    %121 = arith.subf %120, %119 : vector<32x1xf32>
    %122 = math.exp %121 : vector<32x1xf32>
    %cst_44 = arith.constant 1.000000e+00 : f32
    %123 = vector.broadcast %cst_44 : f32 to vector<32x1xf32>
    %124 = arith.addf %123, %122 : vector<32x1xf32>
    %125 = tpu.reciprocal %124 {approx = true} : vector<32x1xf32> -> vector<32x1xf32>
    %cst_45 = arith.constant 1.000000e+00 : f32
    %126 = vector.broadcast %cst_45 : f32 to vector<32x1xf32>
    %127 = arith.mulf %109, %126 : vector<32x1xf32>
    %128 = vector.broadcast %127 : vector<32x1xf32> to vector<32x32xf32>
    %129 = arith.mulf %88, %128 : vector<32x32xf32>
    %cst_46 = arith.constant 1.000000e+00 : f32
    %130 = vector.broadcast %cst_46 : f32 to vector<32x1xf32>
    %131 = arith.mulf %125, %130 : vector<32x1xf32>
    %132 = vector.broadcast %131 : vector<32x1xf32> to vector<32x32xf32>
    %133 = arith.mulf %89, %132 : vector<32x32xf32>
    %c0_47 = arith.constant 0 : index
    %c0_48 = arith.constant 0 : index
    %c0_49 = arith.constant 0 : index
    %134 = vector.load %arg3[%c0_47, %c0_48, %c0_49] : memref<4x32x32xf32, #tpu.memory_space<vmem>>, vector<1x32x32xf32>
    %135 = vector.shape_cast %134 : vector<1x32x32xf32> to vector<32x32xf32>
    %cst_50 = arith.constant dense<0.000000e+00> : vector<32x32xf32>
    %136 = tpu.matmul %129, %135, %cst_50 {dimension_numbers = #tpu.dot_dimension_numbers<[1], [0], [0], [1], [0, 0, 1, 1], [], []>} : vector<32x32xf32>, vector<32x32xf32>, vector<32x32xf32> -> vector<32x32xf32>
    %137 = vector.extract_strided_slice %86 {offsets = [0, 0], sizes = [1, 32], strides = [1, 1]} : vector<4x32xf32> to vector<1x32xf32>
    %138 = vector.broadcast %137 : vector<1x32xf32> to vector<32x32xf32>
    %139 = arith.addf %136, %138 : vector<32x32xf32>
    %cst_51 = arith.constant 0.000000e+00 : f32
    %140 = vector.broadcast %cst_51 : f32 to vector<32x32xf32>
    %141 = arith.maximumf %139, %140 : vector<32x32xf32>
    %c1_52 = arith.constant 1 : index
    %c0_53 = arith.constant 0 : index
    %c0_54 = arith.constant 0 : index
    %142 = vector.load %arg3[%c1_52, %c0_53, %c0_54] : memref<4x32x32xf32, #tpu.memory_space<vmem>>, vector<1x32x32xf32>
    %143 = vector.shape_cast %142 : vector<1x32x32xf32> to vector<32x32xf32>
    %cst_55 = arith.constant dense<0.000000e+00> : vector<32x32xf32>
    %144 = tpu.matmul %133, %143, %cst_55 {dimension_numbers = #tpu.dot_dimension_numbers<[1], [0], [0], [1], [0, 0, 1, 1], [], []>} : vector<32x32xf32>, vector<32x32xf32>, vector<32x32xf32> -> vector<32x32xf32>
    %145 = vector.extract_strided_slice %86 {offsets = [1, 0], sizes = [1, 32], strides = [1, 1]} : vector<4x32xf32> to vector<1x32xf32>
    %146 = vector.broadcast %145 : vector<1x32xf32> to vector<32x32xf32>
    %147 = arith.addf %144, %146 : vector<32x32xf32>
    %cst_56 = arith.constant 0.000000e+00 : f32
    %148 = vector.broadcast %cst_56 : f32 to vector<32x32xf32>
    %149 = arith.maximumf %147, %148 : vector<32x32xf32>
    %150 = tpu.concatenate %141, %149 in 0 : vector<32x32xf32>, vector<32x32xf32> -> vector<64x32xf32>
    %151 = vector.extract_strided_slice %150 {offsets = [0, 0], sizes = [32, 32], strides = [1, 1]} : vector<64x32xf32> to vector<32x32xf32>
    %152 = vector.extract_strided_slice %150 {offsets = [32, 0], sizes = [32, 32], strides = [1, 1]} : vector<64x32xf32> to vector<32x32xf32>
    %153 = vector.extract_strided_slice %87 {offsets = [4, 0], sizes = [1, 32], strides = [1, 1]} : vector<8x32xf32> to vector<1x32xf32>
    %154 = vector.extract_strided_slice %87 {offsets = [5, 0], sizes = [1, 32], strides = [1, 1]} : vector<8x32xf32> to vector<1x32xf32>
    %155 = vector.extract_strided_slice %87 {offsets = [6, 0], sizes = [1, 32], strides = [1, 1]} : vector<8x32xf32> to vector<1x32xf32>
    %156 = vector.extract_strided_slice %87 {offsets = [7, 0], sizes = [1, 32], strides = [1, 1]} : vector<8x32xf32> to vector<1x32xf32>
    %157 = vector.broadcast %153 : vector<1x32xf32> to vector<32x32xf32>
    %158 = arith.mulf %151, %157 : vector<32x32xf32>
    %159 = vector.broadcast %154 : vector<1x32xf32> to vector<32x32xf32>
    %160 = arith.mulf %152, %159 : vector<32x32xf32>
    %161 = arith.addf %158, %160 : vector<32x32xf32>
    %cst_57 = arith.constant dense<0.000000e+00> : vector<32xf32>
    %162 = vector.multi_reduction <add>, %161, %cst_57 [1] : vector<32x32xf32> to vector<32xf32>
    %163 = vector.shape_cast %162 : vector<32xf32> to vector<32x1xf32>
    %c1_58 = arith.constant 1 : index
    %c0_59 = arith.constant 0 : index
    %164 = memref.load %arg6[%c1_58, %c0_59] : memref<2x2xf32, #tpu.memory_space<smem>>
    %165 = vector.broadcast %164 : f32 to vector<32x1xf32>
    %166 = arith.addf %163, %165 : vector<32x1xf32>
    %cst_60 = arith.constant 0.000000e+00 : f32
    %167 = vector.broadcast %cst_60 : f32 to vector<32x1xf32>
    %168 = arith.subf %167, %166 : vector<32x1xf32>
    %169 = math.exp %168 : vector<32x1xf32>
    %cst_61 = arith.constant 1.000000e+00 : f32
    %170 = vector.broadcast %cst_61 : f32 to vector<32x1xf32>
    %171 = arith.addf %170, %169 : vector<32x1xf32>
    %172 = tpu.reciprocal %171 {approx = true} : vector<32x1xf32> -> vector<32x1xf32>
    %173 = vector.broadcast %155 : vector<1x32xf32> to vector<32x32xf32>
    %174 = arith.mulf %151, %173 : vector<32x32xf32>
    %175 = vector.broadcast %156 : vector<1x32xf32> to vector<32x32xf32>
    %176 = arith.mulf %152, %175 : vector<32x32xf32>
    %177 = arith.addf %174, %176 : vector<32x32xf32>
    %cst_62 = arith.constant dense<0.000000e+00> : vector<32xf32>
    %178 = vector.multi_reduction <add>, %177, %cst_62 [1] : vector<32x32xf32> to vector<32xf32>
    %179 = vector.shape_cast %178 : vector<32xf32> to vector<32x1xf32>
    %c1_63 = arith.constant 1 : index
    %c1_64 = arith.constant 1 : index
    %180 = memref.load %arg6[%c1_63, %c1_64] : memref<2x2xf32, #tpu.memory_space<smem>>
    %181 = vector.broadcast %180 : f32 to vector<32x1xf32>
    %182 = arith.addf %179, %181 : vector<32x1xf32>
    %cst_65 = arith.constant 0.000000e+00 : f32
    %183 = vector.broadcast %cst_65 : f32 to vector<32x1xf32>
    %184 = arith.subf %183, %182 : vector<32x1xf32>
    %185 = math.exp %184 : vector<32x1xf32>
    %cst_66 = arith.constant 1.000000e+00 : f32
    %186 = vector.broadcast %cst_66 : f32 to vector<32x1xf32>
    %187 = arith.addf %186, %185 : vector<32x1xf32>
    %188 = tpu.reciprocal %187 {approx = true} : vector<32x1xf32> -> vector<32x1xf32>
    %cst_67 = arith.constant 1.000000e+00 : f32
    %189 = vector.broadcast %cst_67 : f32 to vector<32x1xf32>
    %190 = arith.mulf %172, %189 : vector<32x1xf32>
    %191 = vector.broadcast %190 : vector<32x1xf32> to vector<32x32xf32>
    %192 = arith.mulf %151, %191 : vector<32x32xf32>
    %cst_68 = arith.constant 1.000000e+00 : f32
    %193 = vector.broadcast %cst_68 : f32 to vector<32x1xf32>
    %194 = arith.mulf %188, %193 : vector<32x1xf32>
    %195 = vector.broadcast %194 : vector<32x1xf32> to vector<32x32xf32>
    %196 = arith.mulf %152, %195 : vector<32x32xf32>
    %c2 = arith.constant 2 : index
    %c0_69 = arith.constant 0 : index
    %c0_70 = arith.constant 0 : index
    %197 = vector.load %arg3[%c2, %c0_69, %c0_70] : memref<4x32x32xf32, #tpu.memory_space<vmem>>, vector<1x32x32xf32>
    %198 = vector.shape_cast %197 : vector<1x32x32xf32> to vector<32x32xf32>
    %cst_71 = arith.constant dense<0.000000e+00> : vector<32x32xf32>
    %199 = tpu.matmul %192, %198, %cst_71 {dimension_numbers = #tpu.dot_dimension_numbers<[1], [0], [0], [1], [0, 0, 1, 1], [], []>} : vector<32x32xf32>, vector<32x32xf32>, vector<32x32xf32> -> vector<32x32xf32>
    %200 = vector.extract_strided_slice %86 {offsets = [2, 0], sizes = [1, 32], strides = [1, 1]} : vector<4x32xf32> to vector<1x32xf32>
    %201 = vector.broadcast %200 : vector<1x32xf32> to vector<32x32xf32>
    %202 = arith.addf %199, %201 : vector<32x32xf32>
    %cst_72 = arith.constant 0.000000e+00 : f32
    %203 = vector.broadcast %cst_72 : f32 to vector<32x32xf32>
    %204 = arith.maximumf %202, %203 : vector<32x32xf32>
    %c3 = arith.constant 3 : index
    %c0_73 = arith.constant 0 : index
    %c0_74 = arith.constant 0 : index
    %205 = vector.load %arg3[%c3, %c0_73, %c0_74] : memref<4x32x32xf32, #tpu.memory_space<vmem>>, vector<1x32x32xf32>
    %206 = vector.shape_cast %205 : vector<1x32x32xf32> to vector<32x32xf32>
    %cst_75 = arith.constant dense<0.000000e+00> : vector<32x32xf32>
    %207 = tpu.matmul %196, %206, %cst_75 {dimension_numbers = #tpu.dot_dimension_numbers<[1], [0], [0], [1], [0, 0, 1, 1], [], []>} : vector<32x32xf32>, vector<32x32xf32>, vector<32x32xf32> -> vector<32x32xf32>
    %208 = vector.extract_strided_slice %86 {offsets = [3, 0], sizes = [1, 32], strides = [1, 1]} : vector<4x32xf32> to vector<1x32xf32>
    %209 = vector.broadcast %208 : vector<1x32xf32> to vector<32x32xf32>
    %210 = arith.addf %207, %209 : vector<32x32xf32>
    %cst_76 = arith.constant 0.000000e+00 : f32
    %211 = vector.broadcast %cst_76 : f32 to vector<32x32xf32>
    %212 = arith.maximumf %210, %211 : vector<32x32xf32>
    %213 = tpu.concatenate %204, %212 in 0 : vector<32x32xf32>, vector<32x32xf32> -> vector<64x32xf32>
    %214 = vector.extract_strided_slice %213 {offsets = [0, 0], sizes = [32, 32], strides = [1, 1]} : vector<64x32xf32> to vector<32x32xf32>
    %215 = vector.extract_strided_slice %213 {offsets = [32, 0], sizes = [32, 32], strides = [1, 1]} : vector<64x32xf32> to vector<32x32xf32>
    %c0_77 = arith.constant 0 : index
    %c0_78 = arith.constant 0 : index
    %c0_79 = arith.constant 0 : index
    %216 = vector.load %arg7[%c0_77, %c0_78, %c0_79] : memref<2x32x32xf32, #tpu.memory_space<vmem>>, vector<1x32x32xf32>
    %217 = vector.shape_cast %216 : vector<1x32x32xf32> to vector<32x32xf32>
    %cst_80 = arith.constant dense<0.000000e+00> : vector<32x32xf32>
    %218 = tpu.matmul %215, %217, %cst_80 {dimension_numbers = #tpu.dot_dimension_numbers<[1], [0], [0], [1], [0, 0, 1, 1], [], []>} : vector<32x32xf32>, vector<32x32xf32>, vector<32x32xf32> -> vector<32x32xf32>
    %c1_81 = arith.constant 1 : index
    %c0_82 = arith.constant 0 : index
    %c0_83 = arith.constant 0 : index
    %219 = vector.load %arg7[%c1_81, %c0_82, %c0_83] : memref<2x32x32xf32, #tpu.memory_space<vmem>>, vector<1x32x32xf32>
    %220 = vector.shape_cast %219 : vector<1x32x32xf32> to vector<32x32xf32>
    %cst_84 = arith.constant dense<0.000000e+00> : vector<32x32xf32>
    %221 = tpu.matmul %214, %220, %cst_84 {dimension_numbers = #tpu.dot_dimension_numbers<[1], [0], [0], [1], [0, 0, 1, 1], [], []>} : vector<32x32xf32>, vector<32x32xf32>, vector<32x32xf32> -> vector<32x32xf32>
    %222 = arith.addf %218, %221 : vector<32x32xf32>
    %c0_85 = arith.constant 0 : index
    %c0_86 = arith.constant 0 : index
    %223 = vector.load %arg8[%c0_85, %c0_86] : memref<1x32xf32, #tpu.memory_space<vmem>>, vector<1x32xf32>
    %224 = vector.broadcast %223 : vector<1x32xf32> to vector<32x32xf32>
    %225 = arith.addf %222, %224 : vector<32x32xf32>
    %cst_87 = arith.constant 0.000000e+00 : f32
    %226 = vector.broadcast %cst_87 : f32 to vector<32x32xf32>
    %227 = arith.maximumf %225, %226 : vector<32x32xf32>
    %228 = vector.shape_cast %227 : vector<32x32xf32> to vector<2x16x32xf32>
    %229 = tpu.transpose %228, [0, 2, 1] : vector<2x16x32xf32> -> vector<2x32x16xf32>
    %c0_88 = arith.constant 0 : index
    %c0_89 = arith.constant 0 : index
    %c0_90 = arith.constant 0 : index
    %230 = vector.load %arg9[%c0_88, %c0_89, %c0_90] : memref<2x32x16xf32, #tpu.memory_space<vmem>>, vector<2x32x16xf32>
    tpu.vector_store %arg9[%c0_88, %c0_89, %c0_90], %229 {strides = array<i32>} : memref<2x32x16xf32, #tpu.memory_space<vmem>>, vector<2x32x16xf32>,
    return
  }
}

</mosaic_0001>

<llo_original>
// kernel: fusion3_forward.1
$region0: #{fusion3_forward.1}
  #allocation0 [shape = 'u32[]', space=smem, size = 0x4, offset = 0x4, fixed_abs, tag = 'smem constant byte address 0x4 - core index']
  #allocation1 [shape = 'u32[144,128]{1,0:T(1,128)}', space=vmem, size = 0x12000, scoped, tag = 'internal scratch']
  %s0 = inlined_call_operand.vmem [shape: f32[4,32,16], index: 0, kind: input, shape index: {}]
  %s1 = inlined_call_operand.vmem [shape: f32[2,32,32], index: 1, kind: input, shape index: {}]
  %s2 = inlined_call_operand.vmem [shape: f32[2,32], index: 2, kind: input, shape index: {}]
  %s3 = inlined_call_operand.vmem [shape: f32[4,32,32], index: 3, kind: input, shape index: {}]
  %s4 = inlined_call_operand.vmem [shape: f32[4,32], index: 4, kind: input, shape index: {}]
  %s5 = inlined_call_operand.vmem [shape: f32[8,32], index: 5, kind: input, shape index: {}]
  %s6 = inlined_call_operand.vmem [shape: f32[2,2], index: 6, kind: input, shape index: {}]
  %s7 = inlined_call_operand.vmem [shape: f32[2,32,32], index: 7, kind: input, shape index: {}]
  %s8 = inlined_call_operand.vmem [shape: f32[1,32], index: 8, kind: input, shape index: {}]
  %s9 = inlined_call_operand.vmem [shape: f32[2,32,16], index: 9, kind: output, shape index: {}]
  %s10 = sld [smem:[#allocation0]]
  $region50: #{fusion3_forward.1} parent=0
    _
  %s12 = ssub.s32 1, %s10
  %s13 = scalar_select 0, %s12, %s10
  $region1: #{fusion3_forward.1} parent=0
    #allocation2 [shape = 'u8[1024]{0}', space=smem, size = 0x400, scoped, tag = 'input window, operand 6, single buffered']
    #allocation3 [shape = 's32[1]{0}', space=sflag, size = 0x4, scoped, tag = 'scoped memory for fusion3_forward.1']
    %14 = vsyncpa [#allocation3], 0
    // Predicated region
    $region2: #{fusion3_forward.1} parent=1 // pred_check
      _
    $region3: #{fusion3_forward.1} parent=1 // pred_check_branch
      %16 = sbr.rel (0) target = $region5
    $region4: #{fusion3_forward.1} parent=1 // pred_region
      _
    $region5: #{fusion3_forward.1} parent=1 // pred_fallthru
      _
    // Predicated region
    $region6: #{fusion3_forward.1} parent=1 // pred_check
      _
    $region7: #{fusion3_forward.1} parent=1 // pred_check_branch
      %18 = sbr.rel (0) target = $region9
    $region8: #{fusion3_forward.1} parent=1 // pred_region
      _
    $region9: #{fusion3_forward.1} parent=1 // pred_fallthru
      _
    // Predicated region
    $region10: #{fusion3_forward.1} parent=1 // pred_check
      _
    $region11: #{fusion3_forward.1} parent=1 // pred_check_branch
      %20 = sbr.rel (0) target = $region13
    $region12: #{fusion3_forward.1} parent=1 // pred_region
      _
    $region13: #{fusion3_forward.1} parent=1 // pred_fallthru
      _
    // Predicated region
    $region14: #{fusion3_forward.1} parent=1 // pred_check
      _
    $region15: #{fusion3_forward.1} parent=1 // pred_check_branch
      %22 = sbr.rel (0) target = $region17
    $region16: #{fusion3_forward.1} parent=1 // pred_region
      _
    $region17: #{fusion3_forward.1} parent=1 // pred_fallthru
      _
    // Predicated region
    $region18: #{fusion3_forward.1} parent=1 // pred_check
      _
    $region19: #{fusion3_forward.1} parent=1 // pred_check_branch
      %24 = sbr.rel (0) target = $region21
    $region20: #{fusion3_forward.1} parent=1 // pred_region
      _
    $region21: #{fusion3_forward.1} parent=1 // pred_fallthru
      _
    // Predicated region
    $region22: #{fusion3_forward.1} parent=1 // pred_check
      _
    $region23: #{fusion3_forward.1} parent=1 // pred_check_branch
      %26 = sbr.rel (0) target = $region25
    $region24: #{fusion3_forward.1} parent=1 // pred_region
      _
    $region25: #{fusion3_forward.1} parent=1 // pred_fallthru
      _
    // Predicated region
    $region26: #{fusion3_forward.1} parent=1 // pred_check
      _
    $region27: #{fusion3_forward.1} parent=1 // pred_check_branch
      %28 = sbr.rel (0) target = $region29
    $region28: #{fusion3_forward.1} parent=1 // pred_region
      %s30 = ssub.s32 32, 32
      %31 = vsyncadd [#allocation3], %s30
      %s33 = sshll.u32 %s6, 4
      %s34 = int_to_ptr.vmem [resolvable:$true] %s33
      %36 = dma.vmem_to_smem %s34, 32, [#allocation2], [#allocation3]
    $region29: #{fusion3_forward.1} parent=1 // pred_fallthru
      _
    // Predicated region
    $region30: #{fusion3_forward.1} parent=1 // pred_check
      _
    $region31: #{fusion3_forward.1} parent=1 // pred_check_branch
      %38 = sbr.rel (0) target = $region33
    $region32: #{fusion3_forward.1} parent=1 // pred_region
      _
    $region33: #{fusion3_forward.1} parent=1 // pred_fallthru
      _
    // Predicated region
    $region34: #{fusion3_forward.1} parent=1 // pred_check
      _
    $region35: #{fusion3_forward.1} parent=1 // pred_check_branch
      %40 = sbr.rel (0) target = $region37
    $region36: #{fusion3_forward.1} parent=1 // pred_region
      _
    $region37: #{fusion3_forward.1} parent=1 // pred_fallthru
      _
    // Predicated region
    $region38: #{fusion3_forward.1} parent=1 // pred_check
      _
    $region39: #{fusion3_forward.1} parent=1 // pred_check_branch
      %42 = sbr.rel (0) target = $region41
    $region40: #{fusion3_forward.1} parent=1 // pred_region
      %43 = dma.done [#allocation3], 32
    $region41: #{fusion3_forward.1} parent=1 // pred_fallthru
      _
    %44 = sfence
    %v45 = vld [vmem:[%s0] sm:$0xff]
    %v46 = vld [vmem:[%s0 + $0x8] sm:$0xff]
    %v47 = vld [vmem:[%s0 + $0x10] sm:$0xff]
    %v48 = vld [vmem:[%s0 + $0x18] sm:$0xff]
    %v49 = vld [vmem:[%s0 + $0x20] sm:$0xff]
    %v50 = vld [vmem:[%s0 + $0x28] sm:$0xff]
    %v51 = vld [vmem:[%s0 + $0x30] sm:$0xff]
    %v52 = vld [vmem:[%s0 + $0x38] sm:$0xff]
    %v53 = vld [vmem:[%s0 + $0x40] sm:$0xff]
    %v54 = vld [vmem:[%s0 + $0x48] sm:$0xff]
    %v55 = vld [vmem:[%s0 + $0x50] sm:$0xff]
    %v56 = vld [vmem:[%s0 + $0x58] sm:$0xff]
    %v57 = vld [vmem:[%s0 + $0x60] sm:$0xff]
    %v58 = vld [vmem:[%s0 + $0x68] sm:$0xff]
    %v59 = vld [vmem:[%s0 + $0x70] sm:$0xff]
    %v60 = vld [vmem:[%s0 + $0x78] sm:$0xff]
    %61 = vxpose.xlu0.b32.start [1/16] %v45, 128
    %62 = vxpose.xlu0.b32.cont [2/16] %v46, 128
    %63 = vxpose.xlu0.b32.cont [3/16] %v47, 128
    %64 = vxpose.xlu0.b32.cont [4/16] %v48, 128
    %65 = vxpose.xlu0.b32.cont [5/16] 0.0, 128
    %66 = vxpose.xlu0.b32.cont [6/16] 0.0, 128
    %67 = vxpose.xlu0.b32.cont [7/16] 0.0, 128
    %68 = vxpose.xlu0.b32.cont [8/16] 0.0, 128
    %69 = vxpose.xlu0.b32.cont [9/16] 0.0, 128
    %70 = vxpose.xlu0.b32.cont [10/16] 0.0, 128
    %71 = vxpose.xlu0.b32.cont [11/16] 0.0, 128
    %72 = vxpose.xlu0.b32.cont [12/16] 0.0, 128
    %73 = vxpose.xlu0.b32.cont [13/16] 0.0, 128
    %74 = vxpose.xlu0.b32.cont [14/16] 0.0, 128
    %75 = vxpose.xlu0.b32.cont [15/16] 0.0, 128
    %76 = vxpose.xlu0.b32.end [16/16] 0.0, 128
    %v77 = vpop.trf.xlu0
    %v78 = vpop.trf.xlu0
    %v79 = vpop.trf.xlu0
    %v80 = vpop.trf.xlu0
    %v81 = vpop.trf.xlu0
    %v82 = vpop.trf.xlu0
    %v83 = vpop.trf.xlu0
    %v84 = vpop.trf.xlu0
    %v85 = vpop.trf.xlu0
    %v86 = vpop.trf.xlu0
    %v87 = vpop.trf.xlu0
    %v88 = vpop.trf.xlu0
    %v89 = vpop.trf.xlu0
    %v90 = vpop.trf.xlu0
    %v91 = vpop.trf.xlu0
    %v92 = vpop.trf.xlu0
    %93 = vxpose.xlu0.b32.start [1/16] %v49, 128
    %94 = vxpose.xlu0.b32.cont [2/16] %v50, 128
    %95 = vxpose.xlu0.b32.cont [3/16] %v51, 128
    %96 = vxpose.xlu0.b32.cont [4/16] %v52, 128
    %97 = vxpose.xlu0.b32.cont [5/16] 0.0, 128
    %98 = vxpose.xlu0.b32.cont [6/16] 0.0, 128
    %99 = vxpose.xlu0.b32.cont [7/16] 0.0, 128
    %100 = vxpose.xlu0.b32.cont [8/16] 0.0, 128
    %101 = vxpose.xlu0.b32.cont [9/16] 0.0, 128
    %102 = vxpose.xlu0.b32.cont [10/16] 0.0, 128
    %103 = vxpose.xlu0.b32.cont [11/16] 0.0, 128
    %104 = vxpose.xlu0.b32.cont [12/16] 0.0, 128
    %105 = vxpose.xlu0.b32.cont [13/16] 0.0, 128
    %106 = vxpose.xlu0.b32.cont [14/16] 0.0, 128
    %107 = vxpose.xlu0.b32.cont [15/16] 0.0, 128
    %108 = vxpose.xlu0.b32.end [16/16] 0.0, 128
    %v109 = vpop.trf.xlu0
    %v110 = vpop.trf.xlu0
    %v111 = vpop.trf.xlu0
    %v112 = vpop.trf.xlu0
    %v113 = vpop.trf.xlu0
    %v114 = vpop.trf.xlu0
    %v115 = vpop.trf.xlu0
    %v116 = vpop.trf.xlu0
    %v117 = vpop.trf.xlu0
    %v118 = vpop.trf.xlu0
    %v119 = vpop.trf.xlu0
    %v120 = vpop.trf.xlu0
    %v121 = vpop.trf.xlu0
    %v122 = vpop.trf.xlu0
    %v123 = vpop.trf.xlu0
    %v124 = vpop.trf.xlu0
    %125 = vxpose.xlu0.b32.start [1/16] %v53, 128
    %126 = vxpose.xlu0.b32.cont [2/16] %v54, 128
    %127 = vxpose.xlu0.b32.cont [3/16] %v55, 128
    %128 = vxpose.xlu0.b32.cont [4/16] %v56, 128
    %129 = vxpose.xlu0.b32.cont [5/16] 0.0, 128
    %130 = vxpose.xlu0.b32.cont [6/16] 0.0, 128
    %131 = vxpose.xlu0.b32.cont [7/16] 0.0, 128
    %132 = vxpose.xlu0.b32.cont [8/16] 0.0, 128
    %133 = vxpose.xlu0.b32.cont [9/16] 0.0, 128
    %134 = vxpose.xlu0.b32.cont [10/16] 0.0, 128
    %135 = vxpose.xlu0.b32.cont [11/16] 0.0, 128
    %136 = vxpose.xlu0.b32.cont [12/16] 0.0, 128
    %137 = vxpose.xlu0.b32.cont [13/16] 0.0, 128
    %138 = vxpose.xlu0.b32.cont [14/16] 0.0, 128
    %139 = vxpose.xlu0.b32.cont [15/16] 0.0, 128
    %140 = vxpose.xlu0.b32.end [16/16] 0.0, 128
    %v141 = vpop.trf.xlu0
    %v142 = vpop.trf.xlu0
    %v143 = vpop.trf.xlu0
    %v144 = vpop.trf.xlu0
    %v145 = vpop.trf.xlu0
    %v146 = vpop.trf.xlu0
    %v147 = vpop.trf.xlu0
    %v148 = vpop.trf.xlu0
    %v149 = vpop.trf.xlu0
    %v150 = vpop.trf.xlu0
    %v151 = vpop.trf.xlu0
    %v152 = vpop.trf.xlu0
    %v153 = vpop.trf.xlu0
    %v154 = vpop.trf.xlu0
    %v155 = vpop.trf.xlu0
    %v156 = vpop.trf.xlu0
    %157 = vxpose.xlu0.b32.start [1/16] %v57, 128
    %158 = vxpose.xlu0.b32.cont [2/16] %v58, 128
    %159 = vxpose.xlu0.b32.cont [3/16] %v59, 128
    %160 = vxpose.xlu0.b32.cont [4/16] %v60, 128
    %161 = vxpose.xlu0.b32.cont [5/16] 0.0, 128
    %162 = vxpose.xlu0.b32.cont [6/16] 0.0, 128
    %163 = vxpose.xlu0.b32.cont [7/16] 0.0, 128
    %164 = vxpose.xlu0.b32.cont [8/16] 0.0, 128
    %165 = vxpose.xlu0.b32.cont [9/16] 0.0, 128
    %166 = vxpose.xlu0.b32.cont [10/16] 0.0, 128
    %167 = vxpose.xlu0.b32.cont [11/16] 0.0, 128
    %168 = vxpose.xlu0.b32.cont [12/16] 0.0, 128
    %169 = vxpose.xlu0.b32.cont [13/16] 0.0, 128
    %170 = vxpose.xlu0.b32.cont [14/16] 0.0, 128
    %171 = vxpose.xlu0.b32.cont [15/16] 0.0, 128
    %172 = vxpose.xlu0.b32.end [16/16] 0.0, 128
    %v173 = vpop.trf.xlu0
    %v174 = vpop.trf.xlu0
    %v175 = vpop.trf.xlu0
    %v176 = vpop.trf.xlu0
    %v177 = vpop.trf.xlu0
    %v178 = vpop.trf.xlu0
    %v179 = vpop.trf.xlu0
    %v180 = vpop.trf.xlu0
    %v181 = vpop.trf.xlu0
    %v182 = vpop.trf.xlu0
    %v183 = vpop.trf.xlu0
    %v184 = vpop.trf.xlu0
    %v185 = vpop.trf.xlu0
    %v186 = vpop.trf.xlu0
    %v187 = vpop.trf.xlu0
    %v188 = vpop.trf.xlu0
    %v189 = vld [vmem:[%s1] sm:$0xff]
    %v190 = vld [vmem:[%s1 + $0x8] sm:$0xff]
    %v191 = vld [vmem:[%s1 + $0x10] sm:$0xff]
    %v192 = vld [vmem:[%s1 + $0x18] sm:$0xff]
    %s193 = scalar_lea.vmem %s1, 32
    %v194 = vld [vmem:[%s193] sm:$0xff]
    %v195 = vld [vmem:[%s193 + $0x8] sm:$0xff]
    %v196 = vld [vmem:[%s193 + $0x10] sm:$0xff]
    %v197 = vld [vmem:[%s193 + $0x18] sm:$0xff]
    %v198 = vld [vmem:[%s2] sm:$0x3]
    %v199 = vlaneseq
    %v200 = vshrl.u32 %v199, 7
    %v201 = vsub.s32 0, %v200
    %v202 = vrot.slane %v198, %v201
    %vm203 = vcmask 261120
    %v205 = vsel %vm203, %v77, 0
    %v208 = vsel %vm203, %v78, 0
    %v211 = vsel %vm203, %v109, 0
    %v214 = vsel %vm203, %v110, 0
    %v217 = vsel %vm203, %v141, 0
    %v220 = vsel %vm203, %v142, 0
    %v223 = vsel %vm203, %v173, 0
    %v226 = vsel %vm203, %v174, 0
    %228 = vmatprep.subr.mxu0 0.0
    %229 = vmatpush1.msra.mxu0 %v189
    %230 = vmatprep.subr.mxu0 0.0
    %231 = vmatpush1.msra.mxu0 %v190
    %232 = vmatprep.subr.mxu0 0.0
    %233 = vmatpush1.msra.mxu0 %v191
    %234 = vmatprep.subr.mxu0 0.0
    %235 = vmatpush1.msra.mxu0 %v192
    %236 = vmatprep.subr.mxu0 0.0
    %237 = vmatpush1.msra.mxu0 0.0
    %238 = vmatprep.subr.mxu0 0.0
    %239 = vmatpush1.msra.mxu0 0.0
    %240 = vmatprep.subr.mxu0 0.0
    %241 = vmatpush1.msra.mxu0 0.0
    %242 = vmatprep.subr.mxu0 0.0
    %243 = vmatpush1.msra.mxu0 0.0
    %244 = vmatprep.subr.mxu0 0.0
    %245 = vmatpush1.msra.mxu0 0.0
    %246 = vmatprep.subr.mxu0 0.0
    %247 = vmatpush1.msra.mxu0 0.0
    %248 = vmatprep.subr.mxu0 0.0
    %249 = vmatpush1.msra.mxu0 0.0
    %250 = vmatprep.subr.mxu0 0.0
    %251 = vmatpush1.msra.mxu0 0.0
    %252 = vmatprep.subr.mxu0 0.0
    %253 = vmatpush1.msra.mxu0 0.0
    %254 = vmatprep.subr.mxu0 0.0
    %255 = vmatpush1.msra.mxu0 0.0
    %256 = vmatprep.subr.mxu0 0.0
    %257 = vmatpush1.msra.mxu0 0.0
    %258 = vmatprep.subr.mxu0 0.0
    %259 = vmatpush1.msra.mxu0 0.0
    %260 = vmatprep.subr.mxu0 0.0
    %261 = vmatpush1.msra.mxu0 0.0
    %262 = vmatprep.subr.mxu0 0.0
    %263 = vmatpush1.msra.mxu0 0.0
    %264 = vmatprep.subr.mxu0 0.0
    %265 = vmatpush1.msra.mxu0 0.0
    %266 = vmatprep.subr.mxu0 0.0
    %267 = vmatpush1.msra.mxu0 0.0
    %268 = vmatprep.subr.mxu0 0.0
    %269 = vmatpush1.msra.mxu0 0.0
    %270 = vmatprep.subr.mxu0 0.0
    %271 = vmatpush1.msra.mxu0 0.0
    %272 = vmatprep.subr.mxu0 0.0
    %273 = vmatpush1.msra.mxu0 0.0
    %274 = vmatprep.subr.mxu0 0.0
    %275 = vmatpush1.msra.mxu0 0.0
    %276 = vmatprep.subr.mxu0 0.0
    %277 = vmatpush1.msra.mxu0 0.0
    %278 = vmatprep.subr.mxu0 0.0
    %279 = vmatpush1.msra.mxu0 0.0
    %280 = vmatprep.subr.mxu0 0.0
    %281 = vmatpush1.msra.mxu0 0.0
    %282 = vmatprep.subr.mxu0 0.0
    %283 = vmatpush1.msra.mxu0 0.0
    %284 = vmatprep.subr.mxu0 0.0
    %285 = vmatpush1.msra.mxu0 0.0
    %286 = vmatprep.subr.mxu0 0.0
    %287 = vmatpush1.msra.mxu0 0.0
    %288 = vmatprep.subr.mxu0 0.0
    %289 = vmatpush1.msra.mxu0 0.0
    %290 = vmatprep.subr.mxu0 0.0
    %291 = vmatpush1.msra.mxu0 0.0
    %292 = vmatprep.mubr.f32.mxu0 0.0
    %293 = vmatmul.mubr.f32.gmra.mrb[0].mxu0 %v205
    %v294 = vpop.f32.mrb[0].mxu0
    %v295 = vadd.f32 %v202, %v294
    %v296 = vpop.f32.mrb[0].mxu0
    %297 = vmatprep.mubr.f32.mxu0 0.0
    %298 = vmatmul.mubr.f32.gmra.mrb[0].mxu0 %v208
    %v299 = vpop.f32.mrb[0].mxu0
    %v300 = vadd.f32 %v202, %v299
    %v301 = vpop.f32.mrb[0].mxu0
    %302 = vmatprep.mubr.f32.mxu0 0.0
    %303 = vmatmul.mubr.f32.gmra.mrb[0].mxu0 %v211
    %v304 = vpop.f32.mrb[0].mxu0
    %v305 = vadd.f32 %v202, %v304
    %v306 = vpop.f32.mrb[0].mxu0
    %307 = vmatprep.mubr.f32.mxu0 0.0
    %308 = vmatmul.mubr.f32.gmra.mrb[0].mxu0 %v214
    %v309 = vpop.f32.mrb[0].mxu0
    %v310 = vadd.f32 %v202, %v309
    %v311 = vpop.f32.mrb[0].mxu0
    %312 = vmatprep.mubr.f32.mxu0 0.0
    %313 = vmatmul.mubr.f32.gmra.mrb[0].mxu0 %v217
    %v314 = vpop.f32.mrb[0].mxu0
    %v315 = vadd.f32 %v202, %v314
    %v316 = vpop.f32.mrb[0].mxu0
    %317 = vmatprep.mubr.f32.mxu0 0.0
    %318 = vmatmul.mubr.f32.gmra.mrb[0].mxu0 %v220
    %v319 = vpop.f32.mrb[0].mxu0
    %v320 = vadd.f32 %v202, %v319
    %v321 = vpop.f32.mrb[0].mxu0
    %322 = vmatprep.mubr.f32.mxu0 0.0
    %323 = vmatmul.mubr.f32.gmra.mrb[0].mxu0 %v223
    %v324 = vpop.f32.mrb[0].mxu0
    %v325 = vadd.f32 %v202, %v324
    %v326 = vpop.f32.mrb[0].mxu0
    %327 = vmatprep.mubr.f32.mxu0 0.0
    %328 = vmatmul.mubr.f32.gmra.mrb[0].mxu0 %v226
    %v329 = vpop.f32.mrb[0].mxu0
    %v330 = vadd.f32 %v202, %v329
    %v331 = vpop.f32.mrb[0].mxu0
    %332 = vdwg.mxu0
    %vm333 = vcmp.gt.f32.partialorder %v295, 0.0
    %vm334 = vcmp.gt.f32.partialorder %v300, 0.0
    %vm335 = vcmp.gt.f32.partialorder %v305, 0.0
    %vm336 = vcmp.gt.f32.partialorder %v310, 0.0
    %vm337 = vcmp.gt.f32.partialorder %v315, 0.0
    %vm338 = vcmp.gt.f32.partialorder %v320, 0.0
    %vm339 = vcmp.gt.f32.partialorder %v325, 0.0
    %vm340 = vcmp.gt.f32.partialorder %v330, 0.0
    %v341 = vmul.f32 %v295, 1.442695
    %v342 = vpow.pop %v341
    %v343 = vmul.f32 %v300, 1.442695
    %v344 = vpow.pop %v343
    %v345 = vmul.f32 %v305, 1.442695
    %v346 = vpow.pop %v345
    %v347 = vmul.f32 %v310, 1.442695
    %v348 = vpow.pop %v347
    %v349 = vmul.f32 %v315, 1.442695
    %v350 = vpow.pop %v349
    %v351 = vmul.f32 %v320, 1.442695
    %v352 = vpow.pop %v351
    %v353 = vmul.f32 %v325, 1.442695
    %v354 = vpow.pop %v353
    %v355 = vmul.f32 %v330, 1.442695
    %v356 = vpow.pop %v355
    %v357 = vsub.f32 %v342, 1.0
    %v358 = vsub.f32 %v344, 1.0
    %v359 = vsub.f32 %v346, 1.0
    %v360 = vsub.f32 %v348, 1.0
    %v361 = vsub.f32 %v350, 1.0
    %v362 = vsub.f32 %v352, 1.0
    %v363 = vsub.f32 %v354, 1.0
    %v364 = vsub.f32 %v356, 1.0
    %v365 = vmul.f32 %v357, 1.6732632
    %v366 = vmul.f32 %v358, 1.6732632
    %v367 = vmul.f32 %v359, 1.6732632
    %v368 = vmul.f32 %v360, 1.6732632
    %v369 = vmul.f32 %v361, 1.6732632
    %v370 = vmul.f32 %v362, 1.6732632
    %v371 = vmul.f32 %v363, 1.6732632
    %v372 = vmul.f32 %v364, 1.6732632
    %v373 = vsel %vm333, %v295, %v365
    %v374 = vsel %vm334, %v300, %v366
    %v375 = vsel %vm335, %v305, %v367
    %v376 = vsel %vm336, %v310, %v368
    %v377 = vsel %vm337, %v315, %v369
    %v378 = vsel %vm338, %v320, %v370
    %v379 = vsel %vm339, %v325, %v371
    %v380 = vsel %vm340, %v330, %v372
    %v381 = vmul.f32 %v373, 1.050701
    %v382 = vmul.f32 %v374, 1.050701
    %v383 = vmul.f32 %v375, 1.050701
    %v384 = vmul.f32 %v376, 1.050701
    %v385 = vmul.f32 %v377, 1.050701
    %v386 = vmul.f32 %v378, 1.050701
    %v387 = vmul.f32 %v379, 1.050701
    %v388 = vmul.f32 %v380, 1.050701
    %v389 = vlaneseq
    %v390 = vshrl.u32 %v389, 7
    %v391 = vsub.s32 1, %v390
    %v392 = vrot.slane %v198, %v391
    %v394 = vsel %vm203, %v381, 0
    %v397 = vsel %vm203, %v382, 0
    %v400 = vsel %vm203, %v383, 0
    %v403 = vsel %vm203, %v384, 0
    %v406 = vsel %vm203, %v385, 0
    %v409 = vsel %vm203, %v386, 0
    %v412 = vsel %vm203, %v387, 0
    %v415 = vsel %vm203, %v388, 0
    %417 = vmatprep.subr.mxu0 0.0
    %418 = vmatpush1.msra.mxu0 %v194
    %419 = vmatprep.subr.mxu0 0.0
    %420 = vmatpush1.msra.mxu0 %v195
    %421 = vmatprep.subr.mxu0 0.0
    %422 = vmatpush1.msra.mxu0 %v196
    %423 = vmatprep.subr.mxu0 0.0
    %424 = vmatpush1.msra.mxu0 %v197
    %425 = vmatprep.subr.mxu0 0.0
    %426 = vmatpush1.msra.mxu0 0.0
    %427 = vmatprep.subr.mxu0 0.0
    %428 = vmatpush1.msra.mxu0 0.0
    %429 = vmatprep.subr.mxu0 0.0
    %430 = vmatpush1.msra.mxu0 0.0
    %431 = vmatprep.subr.mxu0 0.0
    %432 = vmatpush1.msra.mxu0 0.0
    %433 = vmatprep.subr.mxu0 0.0
    %434 = vmatpush1.msra.mxu0 0.0
    %435 = vmatprep.subr.mxu0 0.0
    %436 = vmatpush1.msra.mxu0 0.0
    %437 = vmatprep.subr.mxu0 0.0
    %438 = vmatpush1.msra.mxu0 0.0
    %439 = vmatprep.subr.mxu0 0.0
    %440 = vmatpush1.msra.mxu0 0.0
    %441 = vmatprep.subr.mxu0 0.0
    %442 = vmatpush1.msra.mxu0 0.0
    %443 = vmatprep.subr.mxu0 0.0
    %444 = vmatpush1.msra.mxu0 0.0
    %445 = vmatprep.subr.mxu0 0.0
    %446 = vmatpush1.msra.mxu0 0.0
    %447 = vmatprep.subr.mxu0 0.0
    %448 = vmatpush1.msra.mxu0 0.0
    %449 = vmatprep.subr.mxu0 0.0
    %450 = vmatpush1.msra.mxu0 0.0
    %451 = vmatprep.subr.mxu0 0.0
    %452 = vmatpush1.msra.mxu0 0.0
    %453 = vmatprep.subr.mxu0 0.0
    %454 = vmatpush1.msra.mxu0 0.0
    %455 = vmatprep.subr.mxu0 0.0
    %456 = vmatpush1.msra.mxu0 0.0
    %457 = vmatprep.subr.mxu0 0.0
    %458 = vmatpush1.msra.mxu0 0.0
    %459 = vmatprep.subr.mxu0 0.0
    %460 = vmatpush1.msra.mxu0 0.0
    %461 = vmatprep.subr.mxu0 0.0
    %462 = vmatpush1.msra.mxu0 0.0
    %463 = vmatprep.subr.mxu0 0.0
    %464 = vmatpush1.msra.mxu0 0.0
    %465 = vmatprep.subr.mxu0 0.0
    %466 = vmatpush1.msra.mxu0 0.0
    %467 = vmatprep.subr.mxu0 0.0
    %468 = vmatpush1.msra.mxu0 0.0
    %469 = vmatprep.subr.mxu0 0.0
    %470 = vmatpush1.msra.mxu0 0.0
    %471 = vmatprep.subr.mxu0 0.0
    %472 = vmatpush1.msra.mxu0 0.0
    %473 = vmatprep.subr.mxu0 0.0
    %474 = vmatpush1.msra.mxu0 0.0
    %475 = vmatprep.subr.mxu0 0.0
    %476 = vmatpush1.msra.mxu0 0.0
    %477 = vmatprep.subr.mxu0 0.0
    %478 = vmatpush1.msra.mxu0 0.0
    %479 = vmatprep.subr.mxu0 0.0
    %480 = vmatpush1.msra.mxu0 0.0
    %481 = vmatprep.mubr.f32.mxu0 0.0
    %482 = vmatmul.mubr.f32.gmra.mrb[0].mxu0 %v394
    %v483 = vpop.f32.mrb[0].mxu0
    %v484 = vadd.f32 %v392, %v483
    %v485 = vpop.f32.mrb[0].mxu0
    %486 = vmatprep.mubr.f32.mxu0 0.0
    %487 = vmatmul.mubr.f32.gmra.mrb[0].mxu0 %v397
    %v488 = vpop.f32.mrb[0].mxu0
    %v489 = vadd.f32 %v392, %v488
    %v490 = vpop.f32.mrb[0].mxu0
    %491 = vmatprep.mubr.f32.mxu0 0.0
    %492 = vmatmul.mubr.f32.gmra.mrb[0].mxu0 %v400
    %v493 = vpop.f32.mrb[0].mxu0
    %v494 = vadd.f32 %v392, %v493
    %v495 = vpop.f32.mrb[0].mxu0
    %496 = vmatprep.mubr.f32.mxu0 0.0
    %497 = vmatmul.mubr.f32.gmra.mrb[0].mxu0 %v403
    %v498 = vpop.f32.mrb[0].mxu0
    %v499 = vadd.f32 %v392, %v498
    %v500 = vpop.f32.mrb[0].mxu0
    %501 = vmatprep.mubr.f32.mxu0 0.0
    %502 = vmatmul.mubr.f32.gmra.mrb[0].mxu0 %v406
    %v503 = vpop.f32.mrb[0].mxu0
    %v504 = vadd.f32 %v392, %v503
    %v505 = vpop.f32.mrb[0].mxu0
    %506 = vmatprep.mubr.f32.mxu0 0.0
    %507 = vmatmul.mubr.f32.gmra.mrb[0].mxu0 %v409
    %v508 = vpop.f32.mrb[0].mxu0
    %v509 = vadd.f32 %v392, %v508
    %v510 = vpop.f32.mrb[0].mxu0
    %511 = vmatprep.mubr.f32.mxu0 0.0
    %512 = vmatmul.mubr.f32.gmra.mrb[0].mxu0 %v412
    %v513 = vpop.f32.mrb[0].mxu0
    %v514 = vadd.f32 %v392, %v513
    %v515 = vpop.f32.mrb[0].mxu0
    %516 = vmatprep.mubr.f32.mxu0 0.0
    %517 = vmatmul.mubr.f32.gmra.mrb[0].mxu0 %v415
    %v518 = vpop.f32.mrb[0].mxu0
    %v519 = vadd.f32 %v392, %v518
    %v520 = vpop.f32.mrb[0].mxu0
    %521 = vdwg.mxu0
    %v522 = vsel %vm203, %v484, -inf
    %v523 = vsel %vm203, %v489, -inf
    %v524 = vmax.f32 %v522, %v523
    %v525 = vrot.slane %v524, 4
    %v526 = vmax.f32 %v524, %v525
    %v527 = vrot.slane %v526, 2
    %v528 = vmax.f32 %v526, %v527
    %v529 = vrot.slane %v528, 1
    %v530 = vmax.f32 %v528, %v529
    %v531 = vsel %vm203, %v494, -inf
    %v532 = vsel %vm203, %v499, -inf
    %v533 = vmax.f32 %v531, %v532
    %v534 = vrot.slane %v533, 4
    %v535 = vmax.f32 %v533, %v534
    %v536 = vrot.slane %v535, 2
    %v537 = vmax.f32 %v535, %v536
    %v538 = vrot.slane %v537, 1
    %v539 = vmax.f32 %v537, %v538
    %v540 = vsel %vm203, %v504, -inf
    %v541 = vsel %vm203, %v509, -inf
    %v542 = vmax.f32 %v540, %v541
    %v543 = vrot.slane %v542, 4
    %v544 = vmax.f32 %v542, %v543
    %v545 = vrot.slane %v544, 2
    %v546 = vmax.f32 %v544, %v545
    %v547 = vrot.slane %v546, 1
    %v548 = vmax.f32 %v546, %v547
    %v549 = vsel %vm203, %v514, -inf
    %v550 = vsel %vm203, %v519, -inf
    %v551 = vmax.f32 %v549, %v550
    %v552 = vrot.slane %v551, 4
    %v553 = vmax.f32 %v551, %v552
    %v554 = vrot.slane %v553, 2
    %v555 = vmax.f32 %v553, %v554
    %v556 = vrot.slane %v555, 1
    %v557 = vmax.f32 %v555, %v556
    %v558 = vsub.f32 %v484, %v530
    %v559 = vsub.f32 %v489, %v530
    %v560 = vsub.f32 %v494, %v539
    %v561 = vsub.f32 %v499, %v539
    %v562 = vsub.f32 %v504, %v548
    %v563 = vsub.f32 %v509, %v548
    %v564 = vsub.f32 %v514, %v557
    %v565 = vsub.f32 %v519, %v557
    %v566 = vmul.f32 %v558, 1.442695
    %v567 = vpow.pop %v566
    %v568 = vmul.f32 %v559, 1.442695
    %v569 = vpow.pop %v568
    %v570 = vmul.f32 %v560, 1.442695
    %v571 = vpow.pop %v570
    %v572 = vmul.f32 %v561, 1.442695
    %v573 = vpow.pop %v572
    %v574 = vmul.f32 %v562, 1.442695
    %v575 = vpow.pop %v574
    %v576 = vmul.f32 %v563, 1.442695
    %v577 = vpow.pop %v576
    %v578 = vmul.f32 %v564, 1.442695
    %v579 = vpow.pop %v578
    %v580 = vmul.f32 %v565, 1.442695
    %v581 = vpow.pop %v580
    %v582 = vsel %vm203, %v567, 0.0
    %v583 = vsel %vm203, %v569, 0.0
    %v584 = vadd.f32 %v582, %v583
    %v585 = vrot.slane %v584, 4
    %v586 = vadd.f32 %v584, %v585
    %v587 = vrot.slane %v586, 2
    %v588 = vadd.f32 %v586, %v587
    %v589 = vrot.slane %v588, 1
    %v590 = vadd.f32 %v588, %v589
    %v591 = vsel %vm203, %v571, 0.0
    %v592 = vsel %vm203, %v573, 0.0
    %v593 = vadd.f32 %v591, %v592
    %v594 = vrot.slane %v593, 4
    %v595 = vadd.f32 %v593, %v594
    %v596 = vrot.slane %v595, 2
    %v597 = vadd.f32 %v595, %v596
    %v598 = vrot.slane %v597, 1
    %v599 = vadd.f32 %v597, %v598
    %v600 = vsel %vm203, %v575, 0.0
    %v601 = vsel %vm203, %v577, 0.0
    %v602 = vadd.f32 %v600, %v601
    %v603 = vrot.slane %v602, 4
    %v604 = vadd.f32 %v602, %v603
    %v605 = vrot.slane %v604, 2
    %v606 = vadd.f32 %v604, %v605
    %v607 = vrot.slane %v606, 1
    %v608 = vadd.f32 %v606, %v607
    %v609 = vsel %vm203, %v579, 0.0
    %v610 = vsel %vm203, %v581, 0.0
    %v611 = vadd.f32 %v609, %v610
    %v612 = vrot.slane %v611, 4
    %v613 = vadd.f32 %v611, %v612
    %v614 = vrot.slane %v613, 2
    %v615 = vadd.f32 %v613, %v614
    %v616 = vrot.slane %v615, 1
    %v617 = vadd.f32 %v615, %v616
    %v618 = vrcp.pop %v590
    %v619 = vrcp.pop %v599
    %v620 = vrcp.pop %v608
    %v621 = vrcp.pop %v617
    %v622 = vmul.f32 %v567, %v618
    %v623 = vmul.f32 %v569, %v618
    %v624 = vmul.f32 %v571, %v619
    %v625 = vmul.f32 %v573, %v619
    %v626 = vmul.f32 %v575, %v620
    %v627 = vmul.f32 %v577, %v620
    %v628 = vmul.f32 %v579, %v621
    %v629 = vmul.f32 %v581, %v621
    %630 = vmax.xlane.f32.xlu0 %v522
    %v631 = vpop.xlane.xlu0 %630
    %632 = vmax.xlane.f32.xlu0 %v523
    %v633 = vpop.xlane.xlu0 %632
    %634 = vmax.xlane.f32.xlu0 %v531
    %v635 = vpop.xlane.xlu0 %634
    %636 = vmax.xlane.f32.xlu0 %v532
    %v637 = vpop.xlane.xlu0 %636
    %638 = vmax.xlane.f32.xlu0 %v540
    %v639 = vpop.xlane.xlu0 %638
    %640 = vmax.xlane.f32.xlu0 %v541
    %v641 = vpop.xlane.xlu0 %640
    %642 = vmax.xlane.f32.xlu0 %v549
    %v643 = vpop.xlane.xlu0 %642
    %644 = vmax.xlane.f32.xlu0 %v550
    %v645 = vpop.xlane.xlu0 %644
    %v646 = vsub.f32 %v484, %v631
    %v647 = vsub.f32 %v489, %v633
    %v648 = vsub.f32 %v494, %v635
    %v649 = vsub.f32 %v499, %v637
    %v650 = vsub.f32 %v504, %v639
    %v651 = vsub.f32 %v509, %v641
    %v652 = vsub.f32 %v514, %v643
    %v653 = vsub.f32 %v519, %v645
    %v654 = vmul.f32 %v646, 1.442695
    %v655 = vpow.pop %v654
    %v656 = vmul.f32 %v647, 1.442695
    %v657 = vpow.pop %v656
    %v658 = vmul.f32 %v648, 1.442695
    %v659 = vpow.pop %v658
    %v660 = vmul.f32 %v649, 1.442695
    %v661 = vpow.pop %v660
    %v662 = vmul.f32 %v650, 1.442695
    %v663 = vpow.pop %v662
    %v664 = vmul.f32 %v651, 1.442695
    %v665 = vpow.pop %v664
    %v666 = vmul.f32 %v652, 1.442695
    %v667 = vpow.pop %v666
    %v668 = vmul.f32 %v653, 1.442695
    %v669 = vpow.pop %v668
    %v670 = vsel %vm203, %v655, 0.0
    %671 = vadd.xlane.f32.xlu0 %v670
    %v672 = vpop.xlane.xlu0 %671
    %v673 = vsel %vm203, %v657, 0.0
    %674 = vadd.xlane.f32.xlu0 %v673
    %v675 = vpop.xlane.xlu0 %674
    %v676 = vsel %vm203, %v659, 0.0
    %677 = vadd.xlane.f32.xlu0 %v676
    %v678 = vpop.xlane.xlu0 %677
    %v679 = vsel %vm203, %v661, 0.0
    %680 = vadd.xlane.f32.xlu0 %v679
    %v681 = vpop.xlane.xlu0 %680
    %v682 = vsel %vm203, %v663, 0.0
    %683 = vadd.xlane.f32.xlu0 %v682
    %v684 = vpop.xlane.xlu0 %683
    %v685 = vsel %vm203, %v665, 0.0
    %686 = vadd.xlane.f32.xlu0 %v685
    %v687 = vpop.xlane.xlu0 %686
    %v688 = vsel %vm203, %v667, 0.0
    %689 = vadd.xlane.f32.xlu0 %v688
    %v690 = vpop.xlane.xlu0 %689
    %v691 = vsel %vm203, %v669, 0.0
    %692 = vadd.xlane.f32.xlu0 %v691
    %v693 = vpop.xlane.xlu0 %692
    %v694 = vrcp.pop %v672
    %v695 = vrcp.pop %v675
    %v696 = vrcp.pop %v678
    %v697 = vrcp.pop %v681
    %v698 = vrcp.pop %v684
    %v699 = vrcp.pop %v687
    %v700 = vrcp.pop %v690
    %v701 = vrcp.pop %v693
    %v702 = vmul.f32 %v655, %v694
    %v703 = vmul.f32 %v657, %v695
    %v704 = vmul.f32 %v659, %v696
    %v705 = vmul.f32 %v661, %v697
    %v706 = vmul.f32 %v663, %v698
    %v707 = vmul.f32 %v665, %v699
    %v708 = vmul.f32 %v667, %v700
    %v709 = vmul.f32 %v669, %v701
    %v711 = vsel %vm203, %v622, 0
    %v714 = vsel %vm203, %v623, 0
    %v717 = vsel %vm203, %v706, 0
    %v720 = vsel %vm203, %v707, 0
    %722 = vmatprep.subr.mxu0 0.0
    %723 = vmatpush1.xpose.msra.mxu0 %v717
    %724 = vmatprep.subr.mxu0 0.0
    %725 = vmatpush1.xpose.msra.mxu0 %v720
    %726 = vmatprep.subr.mxu0 0.0
    %727 = vmatpush1.xpose.msra.mxu0 0.0
    %728 = vmatprep.subr.mxu0 0.0
    %729 = vmatpush1.xpose.msra.mxu0 0.0
    %730 = vmatprep.subr.mxu0 0.0
    %731 = vmatpush1.xpose.msra.mxu0 0.0
    %732 = vmatprep.subr.mxu0 0.0
    %733 = vmatpush1.xpose.msra.mxu0 0.0
    %734 = vmatprep.subr.mxu0 0.0
    %735 = vmatpush1.xpose.msra.mxu0 0.0
    %736 = vmatprep.subr.mxu0 0.0
    %737 = vmatpush1.xpose.msra.mxu0 0.0
    %738 = vmatprep.subr.mxu0 0.0
    %739 = vmatpush1.xpose.msra.mxu0 0.0
    %740 = vmatprep.subr.mxu0 0.0
    %741 = vmatpush1.xpose.msra.mxu0 0.0
    %742 = vmatprep.subr.mxu0 0.0
    %743 = vmatpush1.xpose.msra.mxu0 0.0
    %744 = vmatprep.subr.mxu0 0.0
    %745 = vmatpush1.xpose.msra.mxu0 0.0
    %746 = vmatprep.subr.mxu0 0.0
    %747 = vmatpush1.xpose.msra.mxu0 0.0
    %748 = vmatprep.subr.mxu0 0.0
    %749 = vmatpush1.xpose.msra.mxu0 0.0
    %750 = vmatprep.subr.mxu0 0.0
    %751 = vmatpush1.xpose.msra.mxu0 0.0
    %752 = vmatprep.subr.mxu0 0.0
    %753 = vmatpush1.xpose.msra.mxu0 0.0
    %754 = vmatprep.subr.mxu0 0.0
    %755 = vmatpush1.xpose.msra.mxu0 0.0
    %756 = vmatprep.subr.mxu0 0.0
    %757 = vmatpush1.xpose.msra.mxu0 0.0
    %758 = vmatprep.subr.mxu0 0.0
    %759 = vmatpush1.xpose.msra.mxu0 0.0
    %760 = vmatprep.subr.mxu0 0.0
    %761 = vmatpush1.xpose.msra.mxu0 0.0
    %762 = vmatprep.subr.mxu0 0.0
    %763 = vmatpush1.xpose.msra.mxu0 0.0
    %764 = vmatprep.subr.mxu0 0.0
    %765 = vmatpush1.xpose.msra.mxu0 0.0
    %766 = vmatprep.subr.mxu0 0.0
    %767 = vmatpush1.xpose.msra.mxu0 0.0
    %768 = vmatprep.subr.mxu0 0.0
    %769 = vmatpush1.xpose.msra.mxu0 0.0
    %770 = vmatprep.subr.mxu0 0.0
    %771 = vmatpush1.xpose.msra.mxu0 0.0
    %772 = vmatprep.subr.mxu0 0.0
    %773 = vmatpush1.xpose.msra.mxu0 0.0
    %774 = vmatprep.subr.mxu0 0.0
    %775 = vmatpush1.xpose.msra.mxu0 0.0
    %776 = vmatprep.subr.mxu0 0.0
    %777 = vmatpush1.xpose.msra.mxu0 0.0
    %778 = vmatprep.subr.mxu0 0.0
    %779 = vmatpush1.xpose.msra.mxu0 0.0
    %780 = vmatprep.subr.mxu0 0.0
    %781 = vmatpush1.xpose.msra.mxu0 0.0
    %782 = vmatprep.subr.mxu0 0.0
    %783 = vmatpush1.xpose.msra.mxu0 0.0
    %784 = vmatprep.subr.mxu0 0.0
    %785 = vmatpush1.xpose.msra.mxu0 0.0
    %786 = vmatprep.mubr.f32.mxu0 0.0
    %787 = vmatmul.mubr.f32.gmra.mrb[0].mxu0 %v711
    %v788 = vpop.f32.mrb[0].mxu0
    %v789 = vadd.f32 0.0, %v788
    %v790 = vpop.f32.mrb[0].mxu0
    %791 = vmatprep.mubr.f32.mxu0 0.0
    %792 = vmatmul.mubr.f32.gmra.mrb[0].mxu0 %v714
    %v793 = vpop.f32.mrb[0].mxu0
    %v794 = vadd.f32 0.0, %v793
    %v795 = vpop.f32.mrb[0].mxu0
    %796 = vdwg.mxu0
    %v798 = vsel %vm203, %v624, 0
    %v801 = vsel %vm203, %v625, 0
    %v804 = vsel %vm203, %v708, 0
    %v807 = vsel %vm203, %v709, 0
    %809 = vmatprep.subr.mxu0 0.0
    %810 = vmatpush1.xpose.msra.mxu0 %v804
    %811 = vmatprep.subr.mxu0 0.0
    %812 = vmatpush1.xpose.msra.mxu0 %v807
    %813 = vmatprep.subr.mxu0 0.0
    %814 = vmatpush1.xpose.msra.mxu0 0.0
    %815 = vmatprep.subr.mxu0 0.0
    %816 = vmatpush1.xpose.msra.mxu0 0.0
    %817 = vmatprep.subr.mxu0 0.0
    %818 = vmatpush1.xpose.msra.mxu0 0.0
    %819 = vmatprep.subr.mxu0 0.0
    %820 = vmatpush1.xpose.msra.mxu0 0.0
    %821 = vmatprep.subr.mxu0 0.0
    %822 = vmatpush1.xpose.msra.mxu0 0.0
    %823 = vmatprep.subr.mxu0 0.0
    %824 = vmatpush1.xpose.msra.mxu0 0.0
    %825 = vmatprep.subr.mxu0 0.0
    %826 = vmatpush1.xpose.msra.mxu0 0.0
    %827 = vmatprep.subr.mxu0 0.0
    %828 = vmatpush1.xpose.msra.mxu0 0.0
    %829 = vmatprep.subr.mxu0 0.0
    %830 = vmatpush1.xpose.msra.mxu0 0.0
    %831 = vmatprep.subr.mxu0 0.0
    %832 = vmatpush1.xpose.msra.mxu0 0.0
    %833 = vmatprep.subr.mxu0 0.0
    %834 = vmatpush1.xpose.msra.mxu0 0.0
    %835 = vmatprep.subr.mxu0 0.0
    %836 = vmatpush1.xpose.msra.mxu0 0.0
    %837 = vmatprep.subr.mxu0 0.0
    %838 = vmatpush1.xpose.msra.mxu0 0.0
    %839 = vmatprep.subr.mxu0 0.0
    %840 = vmatpush1.xpose.msra.mxu0 0.0
    %841 = vmatprep.subr.mxu0 0.0
    %842 = vmatpush1.xpose.msra.mxu0 0.0
    %843 = vmatprep.subr.mxu0 0.0
    %844 = vmatpush1.xpose.msra.mxu0 0.0
    %845 = vmatprep.subr.mxu0 0.0
    %846 = vmatpush1.xpose.msra.mxu0 0.0
    %847 = vmatprep.subr.mxu0 0.0
    %848 = vmatpush1.xpose.msra.mxu0 0.0
    %849 = vmatprep.subr.mxu0 0.0
    %850 = vmatpush1.xpose.msra.mxu0 0.0
    %851 = vmatprep.subr.mxu0 0.0
    %852 = vmatpush1.xpose.msra.mxu0 0.0
    %853 = vmatprep.subr.mxu0 0.0
    %854 = vmatpush1.xpose.msra.mxu0 0.0
    %855 = vmatprep.subr.mxu0 0.0
    %856 = vmatpush1.xpose.msra.mxu0 0.0
    %857 = vmatprep.subr.mxu0 0.0
    %858 = vmatpush1.xpose.msra.mxu0 0.0
    %859 = vmatprep.subr.mxu0 0.0
    %860 = vmatpush1.xpose.msra.mxu0 0.0
    %861 = vmatprep.subr.mxu0 0.0
    %862 = vmatpush1.xpose.msra.mxu0 0.0
    %863 = vmatprep.subr.mxu0 0.0
    %864 = vmatpush1.xpose.msra.mxu0 0.0
    %865 = vmatprep.subr.mxu0 0.0
    %866 = vmatpush1.xpose.msra.mxu0 0.0
    %867 = vmatprep.subr.mxu0 0.0
    %868 = vmatpush1.xpose.msra.mxu0 0.0
    %869 = vmatprep.subr.mxu0 0.0
    %870 = vmatpush1.xpose.msra.mxu0 0.0
    %871 = vmatprep.subr.mxu0 0.0
    %872 = vmatpush1.xpose.msra.mxu0 0.0
    %873 = vmatprep.mubr.f32.mxu0 0.0
    %874 = vmatmul.mubr.f32.gmra.mrb[0].mxu0 %v798
    %v875 = vpop.f32.mrb[0].mxu0
    %v876 = vadd.f32 0.0, %v875
    %v877 = vpop.f32.mrb[0].mxu0
    %878 = vmatprep.mubr.f32.mxu0 0.0
    %879 = vmatmul.mubr.f32.gmra.mrb[0].mxu0 %v801
    %v880 = vpop.f32.mrb[0].mxu0
    %v881 = vadd.f32 0.0, %v880
    %v882 = vpop.f32.mrb[0].mxu0
    %883 = vdwg.mxu0
    %v885 = vsel %vm203, %v626, 0
    %v888 = vsel %vm203, %v627, 0
    %v891 = vsel %vm203, %v702, 0
    %v894 = vsel %vm203, %v703, 0
    %896 = vmatprep.subr.mxu0 0.0
    %897 = vmatpush1.xpose.msra.mxu0 %v891
    %898 = vmatprep.subr.mxu0 0.0
    %899 = vmatpush1.xpose.msra.mxu0 %v894
    %900 = vmatprep.subr.mxu0 0.0
    %901 = vmatpush1.xpose.msra.mxu0 0.0
    %902 = vmatprep.subr.mxu0 0.0
    %903 = vmatpush1.xpose.msra.mxu0 0.0
    %904 = vmatprep.subr.mxu0 0.0
    %905 = vmatpush1.xpose.msra.mxu0 0.0
    %906 = vmatprep.subr.mxu0 0.0
    %907 = vmatpush1.xpose.msra.mxu0 0.0
    %908 = vmatprep.subr.mxu0 0.0
    %909 = vmatpush1.xpose.msra.mxu0 0.0
    %910 = vmatprep.subr.mxu0 0.0
    %911 = vmatpush1.xpose.msra.mxu0 0.0
    %912 = vmatprep.subr.mxu0 0.0
    %913 = vmatpush1.xpose.msra.mxu0 0.0
    %914 = vmatprep.subr.mxu0 0.0
    %915 = vmatpush1.xpose.msra.mxu0 0.0
    %916 = vmatprep.subr.mxu0 0.0
    %917 = vmatpush1.xpose.msra.mxu0 0.0
    %918 = vmatprep.subr.mxu0 0.0
    %919 = vmatpush1.xpose.msra.mxu0 0.0
    %920 = vmatprep.subr.mxu0 0.0
    %921 = vmatpush1.xpose.msra.mxu0 0.0
    %922 = vmatprep.subr.mxu0 0.0
    %923 = vmatpush1.xpose.msra.mxu0 0.0
    %924 = vmatprep.subr.mxu0 0.0
    %925 = vmatpush1.xpose.msra.mxu0 0.0
    %926 = vmatprep.subr.mxu0 0.0
    %927 = vmatpush1.xpose.msra.mxu0 0.0
    %928 = vmatprep.subr.mxu0 0.0
    %929 = vmatpush1.xpose.msra.mxu0 0.0
    %930 = vmatprep.subr.mxu0 0.0
    %931 = vmatpush1.xpose.msra.mxu0 0.0
    %932 = vmatprep.subr.mxu0 0.0
    %933 = vmatpush1.xpose.msra.mxu0 0.0
    %934 = vmatprep.subr.mxu0 0.0
    %935 = vmatpush1.xpose.msra.mxu0 0.0
    %936 = vmatprep.subr.mxu0 0.0
    %937 = vmatpush1.xpose.msra.mxu0 0.0
    %938 = vmatprep.subr.mxu0 0.0
    %939 = vmatpush1.xpose.msra.mxu0 0.0
    %940 = vmatprep.subr.mxu0 0.0
    %941 = vmatpush1.xpose.msra.mxu0 0.0
    %942 = vmatprep.subr.mxu0 0.0
    %943 = vmatpush1.xpose.msra.mxu0 0.0
    %944 = vmatprep.subr.mxu0 0.0
    %945 = vmatpush1.xpose.msra.mxu0 0.0
    %946 = vmatprep.subr.mxu0 0.0
    %947 = vmatpush1.xpose.msra.mxu0 0.0
    %948 = vmatprep.subr.mxu0 0.0
    %949 = vmatpush1.xpose.msra.mxu0 0.0
    %950 = vmatprep.subr.mxu0 0.0
    %951 = vmatpush1.xpose.msra.mxu0 0.0
    %952 = vmatprep.subr.mxu0 0.0
    %953 = vmatpush1.xpose.msra.mxu0 0.0
    %954 = vmatprep.subr.mxu0 0.0
    %955 = vmatpush1.xpose.msra.mxu0 0.0
    %956 = vmatprep.subr.mxu0 0.0
    %957 = vmatpush1.xpose.msra.mxu0 0.0
    %958 = vmatprep.subr.mxu0 0.0
    %959 = vmatpush1.xpose.msra.mxu0 0.0
    %960 = vmatprep.mubr.f32.mxu0 0.0
    %961 = vmatmul.mubr.f32.gmra.mrb[0].mxu0 %v885
    %v962 = vpop.f32.mrb[0].mxu0
    %v963 = vadd.f32 0.0, %v962
    %v964 = vpop.f32.mrb[0].mxu0
    %965 = vmatprep.mubr.f32.mxu0 0.0
    %966 = vmatmul.mubr.f32.gmra.mrb[0].mxu0 %v888
    %v967 = vpop.f32.mrb[0].mxu0
    %v968 = vadd.f32 0.0, %v967
    %v969 = vpop.f32.mrb[0].mxu0
    %970 = vdwg.mxu0
    %v972 = vsel %vm203, %v628, 0
    %v975 = vsel %vm203, %v629, 0
    %v978 = vsel %vm203, %v704, 0
    %v981 = vsel %vm203, %v705, 0
    %983 = vmatprep.subr.mxu0 0.0
    %984 = vmatpush1.xpose.msra.mxu0 %v978
    %985 = vmatprep.subr.mxu0 0.0
    %986 = vmatpush1.xpose.msra.mxu0 %v981
    %987 = vmatprep.subr.mxu0 0.0
    %988 = vmatpush1.xpose.msra.mxu0 0.0
    %989 = vmatprep.subr.mxu0 0.0
    %990 = vmatpush1.xpose.msra.mxu0 0.0
    %991 = vmatprep.subr.mxu0 0.0
    %992 = vmatpush1.xpose.msra.mxu0 0.0
    %993 = vmatprep.subr.mxu0 0.0
    %994 = vmatpush1.xpose.msra.mxu0 0.0
    %995 = vmatprep.subr.mxu0 0.0
    %996 = vmatpush1.xpose.msra.mxu0 0.0
    %997 = vmatprep.subr.mxu0 0.0
    %998 = vmatpush1.xpose.msra.mxu0 0.0
    %999 = vmatprep.subr.mxu0 0.0
    %1000 = vmatpush1.xpose.msra.mxu0 0.0
    %1001 = vmatprep.subr.mxu0 0.0
    %1002 = vmatpush1.xpose.msra.mxu0 0.0
    %1003 = vmatprep.subr.mxu0 0.0
    %1004 = vmatpush1.xpose.msra.mxu0 0.0
    %1005 = vmatprep.subr.mxu0 0.0
    %1006 = vmatpush1.xpose.msra.mxu0 0.0
    %1007 = vmatprep.subr.mxu0 0.0
    %1008 = vmatpush1.xpose.msra.mxu0 0.0
    %1009 = vmatprep.subr.mxu0 0.0
    %1010 = vmatpush1.xpose.msra.mxu0 0.0
    %1011 = vmatprep.subr.mxu0 0.0
    %1012 = vmatpush1.xpose.msra.mxu0 0.0
    %1013 = vmatprep.subr.mxu0 0.0
    %1014 = vmatpush1.xpose.msra.mxu0 0.0
    %1015 = vmatprep.subr.mxu0 0.0
    %1016 = vmatpush1.xpose.msra.mxu0 0.0
    %1017 = vmatprep.subr.mxu0 0.0
    %1018 = vmatpush1.xpose.msra.mxu0 0.0
    %1019 = vmatprep.subr.mxu0 0.0
    %1020 = vmatpush1.xpose.msra.mxu0 0.0
    %1021 = vmatprep.subr.mxu0 0.0
    %1022 = vmatpush1.xpose.msra.mxu0 0.0
    %1023 = vmatprep.subr.mxu0 0.0
    %1024 = vmatpush1.xpose.msra.mxu0 0.0
    %1025 = vmatprep.subr.mxu0 0.0
    %1026 = vmatpush1.xpose.msra.mxu0 0.0
    %1027 = vmatprep.subr.mxu0 0.0
    %1028 = vmatpush1.xpose.msra.mxu0 0.0
    %1029 = vmatprep.subr.mxu0 0.0
    %1030 = vmatpush1.xpose.msra.mxu0 0.0
    %1031 = vmatprep.subr.mxu0 0.0
    %1032 = vmatpush1.xpose.msra.mxu0 0.0
    %1033 = vmatprep.subr.mxu0 0.0
    %1034 = vmatpush1.xpose.msra.mxu0 0.0
    %1035 = vmatprep.subr.mxu0 0.0
    %1036 = vmatpush1.xpose.msra.mxu0 0.0
    %1037 = vmatprep.subr.mxu0 0.0
    %1038 = vmatpush1.xpose.msra.mxu0 0.0
    %1039 = vmatprep.subr.mxu0 0.0
    %1040 = vmatpush1.xpose.msra.mxu0 0.0
    %1041 = vmatprep.subr.mxu0 0.0
    %1042 = vmatpush1.xpose.msra.mxu0 0.0
    %1043 = vmatprep.subr.mxu0 0.0
    %1044 = vmatpush1.xpose.msra.mxu0 0.0
    %1045 = vmatprep.subr.mxu0 0.0
    %1046 = vmatpush1.xpose.msra.mxu0 0.0
    %1047 = vmatprep.mubr.f32.mxu0 0.0
    %1048 = vmatmul.mubr.f32.gmra.mrb[0].mxu0 %v972
    %v1049 = vpop.f32.mrb[0].mxu0
    %v1050 = vadd.f32 0.0, %v1049
    %v1051 = vpop.f32.mrb[0].mxu0
    %1052 = vmatprep.mubr.f32.mxu0 0.0
    %1053 = vmatmul.mubr.f32.gmra.mrb[0].mxu0 %v975
    %v1054 = vpop.f32.mrb[0].mxu0
    %v1055 = vadd.f32 0.0, %v1054
    %v1056 = vpop.f32.mrb[0].mxu0
    %1057 = vdwg.mxu0
    %v1058 = vmul.f32 %v789, 0.03125
    %v1059 = vmul.f32 %v794, 0.03125
    %v1060 = vmul.f32 %v876, 0.03125
    %v1061 = vmul.f32 %v881, 0.03125
    %v1062 = vmul.f32 %v963, 0.03125
    %v1063 = vmul.f32 %v968, 0.03125
    %v1064 = vmul.f32 %v1050, 0.03125
    %v1065 = vmul.f32 %v1055, 0.03125
    %vm1066 = vcmask 130048
    %v1068 = vsel %vm1066, %v1058, 0
    %v1071 = vsel %vm1066, %v1059, 0
    %1073 = vmatprep.subr.mxu0 0.0
    %1074 = vmatpush1.msra.mxu0 %v77
    %1075 = vmatprep.subr.mxu0 0.0
    %1076 = vmatpush1.msra.mxu0 %v78
    %1077 = vmatprep.subr.mxu0 0.0
    %1078 = vmatpush1.msra.mxu0 0.0
    %1079 = vmatprep.subr.mxu0 0.0
    %1080 = vmatpush1.msra.mxu0 0.0
    %1081 = vmatprep.subr.mxu0 0.0
    %1082 = vmatpush1.msra.mxu0 0.0
    %1083 = vmatprep.subr.mxu0 0.0
    %1084 = vmatpush1.msra.mxu0 0.0
    %1085 = vmatprep.subr.mxu0 0.0
    %1086 = vmatpush1.msra.mxu0 0.0
    %1087 = vmatprep.subr.mxu0 0.0
    %1088 = vmatpush1.msra.mxu0 0.0
    %1089 = vmatprep.subr.mxu0 0.0
    %1090 = vmatpush1.msra.mxu0 0.0
    %1091 = vmatprep.subr.mxu0 0.0
    %1092 = vmatpush1.msra.mxu0 0.0
    %1093 = vmatprep.subr.mxu0 0.0
    %1094 = vmatpush1.msra.mxu0 0.0
    %1095 = vmatprep.subr.mxu0 0.0
    %1096 = vmatpush1.msra.mxu0 0.0
    %1097 = vmatprep.subr.mxu0 0.0
    %1098 = vmatpush1.msra.mxu0 0.0
    %1099 = vmatprep.subr.mxu0 0.0
    %1100 = vmatpush1.msra.mxu0 0.0
    %1101 = vmatprep.subr.mxu0 0.0
    %1102 = vmatpush1.msra.mxu0 0.0
    %1103 = vmatprep.subr.mxu0 0.0
    %1104 = vmatpush1.msra.mxu0 0.0
    %1105 = vmatprep.subr.mxu0 0.0
    %1106 = vmatpush1.msra.mxu0 0.0
    %1107 = vmatprep.subr.mxu0 0.0
    %1108 = vmatpush1.msra.mxu0 0.0
    %1109 = vmatprep.subr.mxu0 0.0
    %1110 = vmatpush1.msra.mxu0 0.0
    %1111 = vmatprep.subr.mxu0 0.0
    %1112 = vmatpush1.msra.mxu0 0.0
    %1113 = vmatprep.subr.mxu0 0.0
    %1114 = vmatpush1.msra.mxu0 0.0
    %1115 = vmatprep.subr.mxu0 0.0
    %1116 = vmatpush1.msra.mxu0 0.0
    %1117 = vmatprep.subr.mxu0 0.0
    %1118 = vmatpush1.msra.mxu0 0.0
    %1119 = vmatprep.subr.mxu0 0.0
    %1120 = vmatpush1.msra.mxu0 0.0
    %1121 = vmatprep.subr.mxu0 0.0
    %1122 = vmatpush1.msra.mxu0 0.0
    %1123 = vmatprep.subr.mxu0 0.0
    %1124 = vmatpush1.msra.mxu0 0.0
    %1125 = vmatprep.subr.mxu0 0.0
    %1126 = vmatpush1.msra.mxu0 0.0
    %1127 = vmatprep.subr.mxu0 0.0
    %1128 = vmatpush1.msra.mxu0 0.0
    %1129 = vmatprep.subr.mxu0 0.0
    %1130 = vmatpush1.msra.mxu0 0.0
    %1131 = vmatprep.subr.mxu0 0.0
    %1132 = vmatpush1.msra.mxu0 0.0
    %1133 = vmatprep.subr.mxu0 0.0
    %1134 = vmatpush1.msra.mxu0 0.0
    %1135 = vmatprep.subr.mxu0 0.0
    %1136 = vmatpush1.msra.mxu0 0.0
    %1137 = vmatprep.mubr.f32.mxu0 0.0
    %1138 = vmatmul.mubr.f32.gmra.mrb[0].mxu0 %v1068
    %v1139 = vpop.f32.mrb[0].mxu0
    %v1140 = vadd.f32 0.0, %v1139
    %v1141 = vpop.f32.mrb[0].mxu0
    %1142 = vmatprep.mubr.f32.mxu0 0.0
    %1143 = vmatmul.mubr.f32.gmra.mrb[0].mxu0 %v1071
    %v1144 = vpop.f32.mrb[0].mxu0
    %v1145 = vadd.f32 0.0, %v1144
    %v1146 = vpop.f32.mrb[0].mxu0
    %1147 = vdwg.mxu0
    %v1149 = vsel %vm1066, %v1060, 0
    %v1152 = vsel %vm1066, %v1061, 0
    %1154 = vmatprep.subr.mxu0 0.0
    %1155 = vmatpush1.msra.mxu0 %v109
    %1156 = vmatprep.subr.mxu0 0.0
    %1157 = vmatpush1.msra.mxu0 %v110
    %1158 = vmatprep.subr.mxu0 0.0
    %1159 = vmatpush1.msra.mxu0 0.0
    %1160 = vmatprep.subr.mxu0 0.0
    %1161 = vmatpush1.msra.mxu0 0.0
    %1162 = vmatprep.subr.mxu0 0.0
    %1163 = vmatpush1.msra.mxu0 0.0
    %1164 = vmatprep.subr.mxu0 0.0
    %1165 = vmatpush1.msra.mxu0 0.0
    %1166 = vmatprep.subr.mxu0 0.0
    %1167 = vmatpush1.msra.mxu0 0.0
    %1168 = vmatprep.subr.mxu0 0.0
    %1169 = vmatpush1.msra.mxu0 0.0
    %1170 = vmatprep.subr.mxu0 0.0
    %1171 = vmatpush1.msra.mxu0 0.0
    %1172 = vmatprep.subr.mxu0 0.0
    %1173 = vmatpush1.msra.mxu0 0.0
    %1174 = vmatprep.subr.mxu0 0.0
    %1175 = vmatpush1.msra.mxu0 0.0
    %1176 = vmatprep.subr.mxu0 0.0
    %1177 = vmatpush1.msra.mxu0 0.0
    %1178 = vmatprep.subr.mxu0 0.0
    %1179 = vmatpush1.msra.mxu0 0.0
    %1180 = vmatprep.subr.mxu0 0.0
    %1181 = vmatpush1.msra.mxu0 0.0
    %1182 = vmatprep.subr.mxu0 0.0
    %1183 = vmatpush1.msra.mxu0 0.0
    %1184 = vmatprep.subr.mxu0 0.0
    %1185 = vmatpush1.msra.mxu0 0.0
    %1186 = vmatprep.subr.mxu0 0.0
    %1187 = vmatpush1.msra.mxu0 0.0
    %1188 = vmatprep.subr.mxu0 0.0
    %1189 = vmatpush1.msra.mxu0 0.0
    %1190 = vmatprep.subr.mxu0 0.0
    %1191 = vmatpush1.msra.mxu0 0.0
    %1192 = vmatprep.subr.mxu0 0.0
    %1193 = vmatpush1.msra.mxu0 0.0
    %1194 = vmatprep.subr.mxu0 0.0
    %1195 = vmatpush1.msra.mxu0 0.0
    %1196 = vmatprep.subr.mxu0 0.0
    %1197 = vmatpush1.msra.mxu0 0.0
    %1198 = vmatprep.subr.mxu0 0.0
    %1199 = vmatpush1.msra.mxu0 0.0
    %1200 = vmatprep.subr.mxu0 0.0
    %1201 = vmatpush1.msra.mxu0 0.0
    %1202 = vmatprep.subr.mxu0 0.0
    %1203 = vmatpush1.msra.mxu0 0.0
    %1204 = vmatprep.subr.mxu0 0.0
    %1205 = vmatpush1.msra.mxu0 0.0
    %1206 = vmatprep.subr.mxu0 0.0
    %1207 = vmatpush1.msra.mxu0 0.0
    %1208 = vmatprep.subr.mxu0 0.0
    %1209 = vmatpush1.msra.mxu0 0.0
    %1210 = vmatprep.subr.mxu0 0.0
    %1211 = vmatpush1.msra.mxu0 0.0
    %1212 = vmatprep.subr.mxu0 0.0
    %1213 = vmatpush1.msra.mxu0 0.0
    %1214 = vmatprep.subr.mxu0 0.0
    %1215 = vmatpush1.msra.mxu0 0.0
    %1216 = vmatprep.subr.mxu0 0.0
    %1217 = vmatpush1.msra.mxu0 0.0
    %1218 = vmatprep.mubr.f32.mxu0 0.0
    %1219 = vmatmul.mubr.f32.gmra.mrb[0].mxu0 %v1149
    %v1220 = vpop.f32.mrb[0].mxu0
    %v1221 = vadd.f32 0.0, %v1220
    %v1222 = vpop.f32.mrb[0].mxu0
    %1223 = vmatprep.mubr.f32.mxu0 0.0
    %1224 = vmatmul.mubr.f32.gmra.mrb[0].mxu0 %v1152
    %v1225 = vpop.f32.mrb[0].mxu0
    %v1226 = vadd.f32 0.0, %v1225
    %v1227 = vpop.f32.mrb[0].mxu0
    %1228 = vdwg.mxu0
    %v1230 = vsel %vm1066, %v1062, 0
    %v1233 = vsel %vm1066, %v1063, 0
    %1235 = vmatprep.subr.mxu0 0.0
    %1236 = vmatpush1.msra.mxu0 %v141
    %1237 = vmatprep.subr.mxu0 0.0
    %1238 = vmatpush1.msra.mxu0 %v142
    %1239 = vmatprep.subr.mxu0 0.0
    %1240 = vmatpush1.msra.mxu0 0.0
    %1241 = vmatprep.subr.mxu0 0.0
    %1242 = vmatpush1.msra.mxu0 0.0
    %1243 = vmatprep.subr.mxu0 0.0
    %1244 = vmatpush1.msra.mxu0 0.0
    %1245 = vmatprep.subr.mxu0 0.0
    %1246 = vmatpush1.msra.mxu0 0.0
    %1247 = vmatprep.subr.mxu0 0.0
    %1248 = vmatpush1.msra.mxu0 0.0
    %1249 = vmatprep.subr.mxu0 0.0
    %1250 = vmatpush1.msra.mxu0 0.0
    %1251 = vmatprep.subr.mxu0 0.0
    %1252 = vmatpush1.msra.mxu0 0.0
    %1253 = vmatprep.subr.mxu0 0.0
    %1254 = vmatpush1.msra.mxu0 0.0
    %1255 = vmatprep.subr.mxu0 0.0
    %1256 = vmatpush1.msra.mxu0 0.0
    %1257 = vmatprep.subr.mxu0 0.0
    %1258 = vmatpush1.msra.mxu0 0.0
    %1259 = vmatprep.subr.mxu0 0.0
    %1260 = vmatpush1.msra.mxu0 0.0
    %1261 = vmatprep.subr.mxu0 0.0
    %1262 = vmatpush1.msra.mxu0 0.0
    %1263 = vmatprep.subr.mxu0 0.0
    %1264 = vmatpush1.msra.mxu0 0.0
    %1265 = vmatprep.subr.mxu0 0.0
    %1266 = vmatpush1.msra.mxu0 0.0
    %1267 = vmatprep.subr.mxu0 0.0
    %1268 = vmatpush1.msra.mxu0 0.0
    %1269 = vmatprep.subr.mxu0 0.0
    %1270 = vmatpush1.msra.mxu0 0.0
    %1271 = vmatprep.subr.mxu0 0.0
    %1272 = vmatpush1.msra.mxu0 0.0
    %1273 = vmatprep.subr.mxu0 0.0
    %1274 = vmatpush1.msra.mxu0 0.0
    %1275 = vmatprep.subr.mxu0 0.0
    %1276 = vmatpush1.msra.mxu0 0.0
    %1277 = vmatprep.subr.mxu0 0.0
    %1278 = vmatpush1.msra.mxu0 0.0
    %1279 = vmatprep.subr.mxu0 0.0
    %1280 = vmatpush1.msra.mxu0 0.0
    %1281 = vmatprep.subr.mxu0 0.0
    %1282 = vmatpush1.msra.mxu0 0.0
    %1283 = vmatprep.subr.mxu0 0.0
    %1284 = vmatpush1.msra.mxu0 0.0
    %1285 = vmatprep.subr.mxu0 0.0
    %1286 = vmatpush1.msra.mxu0 0.0
    %1287 = vmatprep.subr.mxu0 0.0
    %1288 = vmatpush1.msra.mxu0 0.0
    %1289 = vmatprep.subr.mxu0 0.0
    %1290 = vmatpush1.msra.mxu0 0.0
    %1291 = vmatprep.subr.mxu0 0.0
    %1292 = vmatpush1.msra.mxu0 0.0
    %1293 = vmatprep.subr.mxu0 0.0
    %1294 = vmatpush1.msra.mxu0 0.0
    %1295 = vmatprep.subr.mxu0 0.0
    %1296 = vmatpush1.msra.mxu0 0.0
    %1297 = vmatprep.subr.mxu0 0.0
    %1298 = vmatpush1.msra.mxu0 0.0
    %1299 = vmatprep.mubr.f32.mxu0 0.0
    %1300 = vmatmul.mubr.f32.gmra.mrb[0].mxu0 %v1230
    %v1301 = vpop.f32.mrb[0].mxu0
    %v1302 = vadd.f32 0.0, %v1301
    %v1303 = vpop.f32.mrb[0].mxu0
    %1304 = vmatprep.mubr.f32.mxu0 0.0
    %1305 = vmatmul.mubr.f32.gmra.mrb[0].mxu0 %v1233
    %v1306 = vpop.f32.mrb[0].mxu0
    %v1307 = vadd.f32 0.0, %v1306
    %v1308 = vpop.f32.mrb[0].mxu0
    %1309 = vdwg.mxu0
    %v1311 = vsel %vm1066, %v1064, 0
    %v1314 = vsel %vm1066, %v1065, 0
    %1316 = vmatprep.subr.mxu0 0.0
    %1317 = vmatpush1.msra.mxu0 %v173
    %1318 = vmatprep.subr.mxu0 0.0
    %1319 = vmatpush1.msra.mxu0 %v174
    %1320 = vmatprep.subr.mxu0 0.0
    %1321 = vmatpush1.msra.mxu0 0.0
    %1322 = vmatprep.subr.mxu0 0.0
    %1323 = vmatpush1.msra.mxu0 0.0
    %1324 = vmatprep.subr.mxu0 0.0
    %1325 = vmatpush1.msra.mxu0 0.0
    %1326 = vmatprep.subr.mxu0 0.0
    %1327 = vmatpush1.msra.mxu0 0.0
    %1328 = vmatprep.subr.mxu0 0.0
    %1329 = vmatpush1.msra.mxu0 0.0
    %1330 = vmatprep.subr.mxu0 0.0
    %1331 = vmatpush1.msra.mxu0 0.0
    %1332 = vmatprep.subr.mxu0 0.0
    %1333 = vmatpush1.msra.mxu0 0.0
    %1334 = vmatprep.subr.mxu0 0.0
    %1335 = vmatpush1.msra.mxu0 0.0
    %1336 = vmatprep.subr.mxu0 0.0
    %1337 = vmatpush1.msra.mxu0 0.0
    %1338 = vmatprep.subr.mxu0 0.0
    %1339 = vmatpush1.msra.mxu0 0.0
    %1340 = vmatprep.subr.mxu0 0.0
    %1341 = vmatpush1.msra.mxu0 0.0
    %1342 = vmatprep.subr.mxu0 0.0
    %1343 = vmatpush1.msra.mxu0 0.0
    %1344 = vmatprep.subr.mxu0 0.0
    %1345 = vmatpush1.msra.mxu0 0.0
    %1346 = vmatprep.subr.mxu0 0.0
    %1347 = vmatpush1.msra.mxu0 0.0
    %1348 = vmatprep.subr.mxu0 0.0
    %1349 = vmatpush1.msra.mxu0 0.0
    %1350 = vmatprep.subr.mxu0 0.0
    %1351 = vmatpush1.msra.mxu0 0.0
    %1352 = vmatprep.subr.mxu0 0.0
    %1353 = vmatpush1.msra.mxu0 0.0
    %1354 = vmatprep.subr.mxu0 0.0
    %1355 = vmatpush1.msra.mxu0 0.0
    %1356 = vmatprep.subr.mxu0 0.0
    %1357 = vmatpush1.msra.mxu0 0.0
    %1358 = vmatprep.subr.mxu0 0.0
    %1359 = vmatpush1.msra.mxu0 0.0
    %1360 = vmatprep.subr.mxu0 0.0
    %1361 = vmatpush1.msra.mxu0 0.0
    %1362 = vmatprep.subr.mxu0 0.0
    %1363 = vmatpush1.msra.mxu0 0.0
    %1364 = vmatprep.subr.mxu0 0.0
    %1365 = vmatpush1.msra.mxu0 0.0
    %1366 = vmatprep.subr.mxu0 0.0
    %1367 = vmatpush1.msra.mxu0 0.0
    %1368 = vmatprep.subr.mxu0 0.0
    %1369 = vmatpush1.msra.mxu0 0.0
    %1370 = vmatprep.subr.mxu0 0.0
    %1371 = vmatpush1.msra.mxu0 0.0
    %1372 = vmatprep.subr.mxu0 0.0
    %1373 = vmatpush1.msra.mxu0 0.0
    %1374 = vmatprep.subr.mxu0 0.0
    %1375 = vmatpush1.msra.mxu0 0.0
    %1376 = vmatprep.subr.mxu0 0.0
    %1377 = vmatpush1.msra.mxu0 0.0
    %1378 = vmatprep.subr.mxu0 0.0
    %1379 = vmatpush1.msra.mxu0 0.0
    %1380 = vmatprep.mubr.f32.mxu0 0.0
    %1381 = vmatmul.mubr.f32.gmra.mrb[0].mxu0 %v1311
    %v1382 = vpop.f32.mrb[0].mxu0
    %v1383 = vadd.f32 0.0, %v1382
    %v1384 = vpop.f32.mrb[0].mxu0
    %1385 = vmatprep.mubr.f32.mxu0 0.0
    %1386 = vmatmul.mubr.f32.gmra.mrb[0].mxu0 %v1314
    %v1387 = vpop.f32.mrb[0].mxu0
    %v1388 = vadd.f32 0.0, %v1387
    %v1389 = vpop.f32.mrb[0].mxu0
    %1390 = vdwg.mxu0
    %v1392 = vsel %vm203, %v1140, 0
    %v1395 = vsel %vm203, %v1145, 0
    %v1398 = vsel %vm203, %v1221, 0
    %v1401 = vsel %vm203, %v1226, 0
    %v1404 = vsel %vm203, %v1302, 0
    %v1407 = vsel %vm203, %v1307, 0
    %v1410 = vsel %vm203, %v1383, 0
    %v1413 = vsel %vm203, %v1388, 0
    %1415 = vmatprep.subr.mxu0 0.0
    %1416 = vmatpush1.msra.mxu0 %v189
    %1417 = vmatprep.subr.mxu0 0.0
    %1418 = vmatpush1.msra.mxu0 %v190
    %1419 = vmatprep.subr.mxu0 0.0
    %1420 = vmatpush1.msra.mxu0 %v191
    %1421 = vmatprep.subr.mxu0 0.0
    %1422 = vmatpush1.msra.mxu0 %v192
    %1423 = vmatprep.subr.mxu0 0.0
    %1424 = vmatpush1.msra.mxu0 0.0
    %1425 = vmatprep.subr.mxu0 0.0
    %1426 = vmatpush1.msra.mxu0 0.0
    %1427 = vmatprep.subr.mxu0 0.0
    %1428 = vmatpush1.msra.mxu0 0.0
    %1429 = vmatprep.subr.mxu0 0.0
    %1430 = vmatpush1.msra.mxu0 0.0
    %1431 = vmatprep.subr.mxu0 0.0
    %1432 = vmatpush1.msra.mxu0 0.0
    %1433 = vmatprep.subr.mxu0 0.0
    %1434 = vmatpush1.msra.mxu0 0.0
    %1435 = vmatprep.subr.mxu0 0.0
    %1436 = vmatpush1.msra.mxu0 0.0
    %1437 = vmatprep.subr.mxu0 0.0
    %1438 = vmatpush1.msra.mxu0 0.0
    %1439 = vmatprep.subr.mxu0 0.0
    %1440 = vmatpush1.msra.mxu0 0.0
    %1441 = vmatprep.subr.mxu0 0.0
    %1442 = vmatpush1.msra.mxu0 0.0
    %1443 = vmatprep.subr.mxu0 0.0
    %1444 = vmatpush1.msra.mxu0 0.0
    %1445 = vmatprep.subr.mxu0 0.0
    %1446 = vmatpush1.msra.mxu0 0.0
    %1447 = vmatprep.subr.mxu0 0.0
    %1448 = vmatpush1.msra.mxu0 0.0
    %1449 = vmatprep.subr.mxu0 0.0
    %1450 = vmatpush1.msra.mxu0 0.0
    %1451 = vmatprep.subr.mxu0 0.0
    %1452 = vmatpush1.msra.mxu0 0.0
    %1453 = vmatprep.subr.mxu0 0.0
    %1454 = vmatpush1.msra.mxu0 0.0
    %1455 = vmatprep.subr.mxu0 0.0
    %1456 = vmatpush1.msra.mxu0 0.0
    %1457 = vmatprep.subr.mxu0 0.0
    %1458 = vmatpush1.msra.mxu0 0.0
    %1459 = vmatprep.subr.mxu0 0.0
    %1460 = vmatpush1.msra.mxu0 0.0
    %1461 = vmatprep.subr.mxu0 0.0
    %1462 = vmatpush1.msra.mxu0 0.0
    %1463 = vmatprep.subr.mxu0 0.0
    %1464 = vmatpush1.msra.mxu0 0.0
    %1465 = vmatprep.subr.mxu0 0.0
    %1466 = vmatpush1.msra.mxu0 0.0
    %1467 = vmatprep.subr.mxu0 0.0
    %1468 = vmatpush1.msra.mxu0 0.0
    %1469 = vmatprep.subr.mxu0 0.0
    %1470 = vmatpush1.msra.mxu0 0.0
    %1471 = vmatprep.subr.mxu0 0.0
    %1472 = vmatpush1.msra.mxu0 0.0
    %1473 = vmatprep.subr.mxu0 0.0
    %1474 = vmatpush1.msra.mxu0 0.0
    %1475 = vmatprep.subr.mxu0 0.0
    %1476 = vmatpush1.msra.mxu0 0.0
    %1477 = vmatprep.subr.mxu0 0.0
    %1478 = vmatpush1.msra.mxu0 0.0
    %1479 = vmatprep.mubr.f32.mxu0 0.0
    %1480 = vmatmul.mubr.f32.gmra.mrb[0].mxu0 %v1392
    %v1481 = vpop.f32.mrb[0].mxu0
    %v1482 = vadd.f32 %v202, %v1481
    %v1483 = vpop.f32.mrb[0].mxu0
    %1484 = vmatprep.mubr.f32.mxu0 0.0
    %1485 = vmatmul.mubr.f32.gmra.mrb[0].mxu0 %v1395
    %v1486 = vpop.f32.mrb[0].mxu0
    %v1487 = vadd.f32 %v202, %v1486
    %v1488 = vpop.f32.mrb[0].mxu0
    %1489 = vmatprep.mubr.f32.mxu0 0.0
    %1490 = vmatmul.mubr.f32.gmra.mrb[0].mxu0 %v1398
    %v1491 = vpop.f32.mrb[0].mxu0
    %v1492 = vadd.f32 %v202, %v1491
    %v1493 = vpop.f32.mrb[0].mxu0
    %1494 = vmatprep.mubr.f32.mxu0 0.0
    %1495 = vmatmul.mubr.f32.gmra.mrb[0].mxu0 %v1401
    %v1496 = vpop.f32.mrb[0].mxu0
    %v1497 = vadd.f32 %v202, %v1496
    %v1498 = vpop.f32.mrb[0].mxu0
    %1499 = vmatprep.mubr.f32.mxu0 0.0
    %1500 = vmatmul.mubr.f32.gmra.mrb[0].mxu0 %v1404
    %v1501 = vpop.f32.mrb[0].mxu0
    %v1502 = vadd.f32 %v202, %v1501
    %v1503 = vpop.f32.mrb[0].mxu0
    %1504 = vmatprep.mubr.f32.mxu0 0.0
    %1505 = vmatmul.mubr.f32.gmra.mrb[0].mxu0 %v1407
    %v1506 = vpop.f32.mrb[0].mxu0
    %v1507 = vadd.f32 %v202, %v1506
    %v1508 = vpop.f32.mrb[0].mxu0
    %1509 = vmatprep.mubr.f32.mxu0 0.0
    %1510 = vmatmul.mubr.f32.gmra.mrb[0].mxu0 %v1410
    %v1511 = vpop.f32.mrb[0].mxu0
    %v1512 = vadd.f32 %v202, %v1511
    %v1513 = vpop.f32.mrb[0].mxu0
    %1514 = vmatprep.mubr.f32.mxu0 0.0
    %1515 = vmatmul.mubr.f32.gmra.mrb[0].mxu0 %v1413
    %v1516 = vpop.f32.mrb[0].mxu0
    %v1517 = vadd.f32 %v202, %v1516
    %v1518 = vpop.f32.mrb[0].mxu0
    %1519 = vdwg.mxu0
    %vm1520 = vcmp.gt.f32.partialorder %v1482, 0.0
    %vm1521 = vcmp.gt.f32.partialorder %v1487, 0.0
    %vm1522 = vcmp.gt.f32.partialorder %v1492, 0.0
    %vm1523 = vcmp.gt.f32.partialorder %v1497, 0.0
    %vm1524 = vcmp.gt.f32.partialorder %v1502, 0.0
    %vm1525 = vcmp.gt.f32.partialorder %v1507, 0.0
    %vm1526 = vcmp.gt.f32.partialorder %v1512, 0.0
    %vm1527 = vcmp.gt.f32.partialorder %v1517, 0.0
    %v1528 = vmul.f32 %v1482, 1.442695
    %v1529 = vpow.pop %v1528
    %v1530 = vmul.f32 %v1487, 1.442695
    %v1531 = vpow.pop %v1530
    %v1532 = vmul.f32 %v1492, 1.442695
    %v1533 = vpow.pop %v1532
    %v1534 = vmul.f32 %v1497, 1.442695
    %v1535 = vpow.pop %v1534
    %v1536 = vmul.f32 %v1502, 1.442695
    %v1537 = vpow.pop %v1536
    %v1538 = vmul.f32 %v1507, 1.442695
    %v1539 = vpow.pop %v1538
    %v1540 = vmul.f32 %v1512, 1.442695
    %v1541 = vpow.pop %v1540
    %v1542 = vmul.f32 %v1517, 1.442695
    %v1543 = vpow.pop %v1542
    %v1544 = vsub.f32 %v1529, 1.0
    %v1545 = vsub.f32 %v1531, 1.0
    %v1546 = vsub.f32 %v1533, 1.0
    %v1547 = vsub.f32 %v1535, 1.0
    %v1548 = vsub.f32 %v1537, 1.0
    %v1549 = vsub.f32 %v1539, 1.0
    %v1550 = vsub.f32 %v1541, 1.0
    %v1551 = vsub.f32 %v1543, 1.0
    %v1552 = vmul.f32 %v1544, 1.6732632
    %v1553 = vmul.f32 %v1545, 1.6732632
    %v1554 = vmul.f32 %v1546, 1.6732632
    %v1555 = vmul.f32 %v1547, 1.6732632
    %v1556 = vmul.f32 %v1548, 1.6732632
    %v1557 = vmul.f32 %v1549, 1.6732632
    %v1558 = vmul.f32 %v1550, 1.6732632
    %v1559 = vmul.f32 %v1551, 1.6732632
    %v1560 = vsel %vm1520, %v1482, %v1552
    %v1561 = vsel %vm1521, %v1487, %v1553
    %v1562 = vsel %vm1522, %v1492, %v1554
    %v1563 = vsel %vm1523, %v1497, %v1555
    %v1564 = vsel %vm1524, %v1502, %v1556
    %v1565 = vsel %vm1525, %v1507, %v1557
    %v1566 = vsel %vm1526, %v1512, %v1558
    %v1567 = vsel %vm1527, %v1517, %v1559
    %v1568 = vmul.f32 %v1560, 1.050701
    %v1569 = vmul.f32 %v1561, 1.050701
    %v1570 = vmul.f32 %v1562, 1.050701
    %v1571 = vmul.f32 %v1563, 1.050701
    %v1572 = vmul.f32 %v1564, 1.050701
    %v1573 = vmul.f32 %v1565, 1.050701
    %v1574 = vmul.f32 %v1566, 1.050701
    %v1575 = vmul.f32 %v1567, 1.050701
    %v1577 = vsel %vm203, %v1568, 0
    %v1580 = vsel %vm203, %v1569, 0
    %v1583 = vsel %vm203, %v1570, 0
    %v1586 = vsel %vm203, %v1571, 0
    %v1589 = vsel %vm203, %v1572, 0
    %v1592 = vsel %vm203, %v1573, 0
    %v1595 = vsel %vm203, %v1574, 0
    %v1598 = vsel %vm203, %v1575, 0
    %1600 = vmatprep.subr.mxu0 0.0
    %1601 = vmatpush1.msra.mxu0 %v194
    %1602 = vmatprep.subr.mxu0 0.0
    %1603 = vmatpush1.msra.mxu0 %v195
    %1604 = vmatprep.subr.mxu0 0.0
    %1605 = vmatpush1.msra.mxu0 %v196
    %1606 = vmatprep.subr.mxu0 0.0
    %1607 = vmatpush1.msra.mxu0 %v197
    %1608 = vmatprep.subr.mxu0 0.0
    %1609 = vmatpush1.msra.mxu0 0.0
    %1610 = vmatprep.subr.mxu0 0.0
    %1611 = vmatpush1.msra.mxu0 0.0
    %1612 = vmatprep.subr.mxu0 0.0
    %1613 = vmatpush1.msra.mxu0 0.0
    %1614 = vmatprep.subr.mxu0 0.0
    %1615 = vmatpush1.msra.mxu0 0.0
    %1616 = vmatprep.subr.mxu0 0.0
    %1617 = vmatpush1.msra.mxu0 0.0
    %1618 = vmatprep.subr.mxu0 0.0
    %1619 = vmatpush1.msra.mxu0 0.0
    %1620 = vmatprep.subr.mxu0 0.0
    %1621 = vmatpush1.msra.mxu0 0.0
    %1622 = vmatprep.subr.mxu0 0.0
    %1623 = vmatpush1.msra.mxu0 0.0
    %1624 = vmatprep.subr.mxu0 0.0
    %1625 = vmatpush1.msra.mxu0 0.0
    %1626 = vmatprep.subr.mxu0 0.0
    %1627 = vmatpush1.msra.mxu0 0.0
    %1628 = vmatprep.subr.mxu0 0.0
    %1629 = vmatpush1.msra.mxu0 0.0
    %1630 = vmatprep.subr.mxu0 0.0
    %1631 = vmatpush1.msra.mxu0 0.0
    %1632 = vmatprep.subr.mxu0 0.0
    %1633 = vmatpush1.msra.mxu0 0.0
    %1634 = vmatprep.subr.mxu0 0.0
    %1635 = vmatpush1.msra.mxu0 0.0
    %1636 = vmatprep.subr.mxu0 0.0
    %1637 = vmatpush1.msra.mxu0 0.0
    %1638 = vmatprep.subr.mxu0 0.0
    %1639 = vmatpush1.msra.mxu0 0.0
    %1640 = vmatprep.subr.mxu0 0.0
    %1641 = vmatpush1.msra.mxu0 0.0
    %1642 = vmatprep.subr.mxu0 0.0
    %1643 = vmatpush1.msra.mxu0 0.0
    %1644 = vmatprep.subr.mxu0 0.0
    %1645 = vmatpush1.msra.mxu0 0.0
    %1646 = vmatprep.subr.mxu0 0.0
    %1647 = vmatpush1.msra.mxu0 0.0
    %1648 = vmatprep.subr.mxu0 0.0
    %1649 = vmatpush1.msra.mxu0 0.0
    %1650 = vmatprep.subr.mxu0 0.0
    %1651 = vmatpush1.msra.mxu0 0.0
    %1652 = vmatprep.subr.mxu0 0.0
    %1653 = vmatpush1.msra.mxu0 0.0
    %1654 = vmatprep.subr.mxu0 0.0
    %1655 = vmatpush1.msra.mxu0 0.0
    %1656 = vmatprep.subr.mxu0 0.0
    %1657 = vmatpush1.msra.mxu0 0.0
    %1658 = vmatprep.subr.mxu0 0.0
    %1659 = vmatpush1.msra.mxu0 0.0
    %1660 = vmatprep.subr.mxu0 0.0
    %1661 = vmatpush1.msra.mxu0 0.0
    %1662 = vmatprep.subr.mxu0 0.0
    %1663 = vmatpush1.msra.mxu0 0.0
    %1664 = vmatprep.mubr.f32.mxu0 0.0
    %1665 = vmatmul.mubr.f32.gmra.mrb[0].mxu0 %v1577
    %v1666 = vpop.f32.mrb[0].mxu0
    %v1667 = vadd.f32 %v392, %v1666
    %v1668 = vpop.f32.mrb[0].mxu0
    %1669 = vmatprep.mubr.f32.mxu0 0.0
    %1670 = vmatmul.mubr.f32.gmra.mrb[0].mxu0 %v1580
    %v1671 = vpop.f32.mrb[0].mxu0
    %v1672 = vadd.f32 %v392, %v1671
    %v1673 = vpop.f32.mrb[0].mxu0
    %1674 = vmatprep.mubr.f32.mxu0 0.0
    %1675 = vmatmul.mubr.f32.gmra.mrb[0].mxu0 %v1583
    %v1676 = vpop.f32.mrb[0].mxu0
    %v1677 = vadd.f32 %v392, %v1676
    %v1678 = vpop.f32.mrb[0].mxu0
    %1679 = vmatprep.mubr.f32.mxu0 0.0
    %1680 = vmatmul.mubr.f32.gmra.mrb[0].mxu0 %v1586
    %v1681 = vpop.f32.mrb[0].mxu0
    %v1682 = vadd.f32 %v392, %v1681
    %v1683 = vpop.f32.mrb[0].mxu0
    %1684 = vmatprep.mubr.f32.mxu0 0.0
    %1685 = vmatmul.mubr.f32.gmra.mrb[0].mxu0 %v1589
    %v1686 = vpop.f32.mrb[0].mxu0
    %v1687 = vadd.f32 %v392, %v1686
    %v1688 = vpop.f32.mrb[0].mxu0
    %1689 = vmatprep.mubr.f32.mxu0 0.0
    %1690 = vmatmul.mubr.f32.gmra.mrb[0].mxu0 %v1592
    %v1691 = vpop.f32.mrb[0].mxu0
    %v1692 = vadd.f32 %v392, %v1691
    %v1693 = vpop.f32.mrb[0].mxu0
    %1694 = vmatprep.mubr.f32.mxu0 0.0
    %1695 = vmatmul.mubr.f32.gmra.mrb[0].mxu0 %v1595
    %v1696 = vpop.f32.mrb[0].mxu0
    %v1697 = vadd.f32 %v392, %v1696
    %v1698 = vpop.f32.mrb[0].mxu0
    %1699 = vmatprep.mubr.f32.mxu0 0.0
    %1700 = vmatmul.mubr.f32.gmra.mrb[0].mxu0 %v1598
    %v1701 = vpop.f32.mrb[0].mxu0
    %v1702 = vadd.f32 %v392, %v1701
    %v1703 = vpop.f32.mrb[0].mxu0
    %1704 = vdwg.mxu0
    %v1705 = vmul.f32 %v1667, %v1667
    %v1706 = vmul.f32 %v1672, %v1672
    %v1707 = vmul.f32 %v1677, %v1677
    %v1708 = vmul.f32 %v1682, %v1682
    %v1709 = vmul.f32 %v1687, %v1687
    %v1710 = vmul.f32 %v1692, %v1692
    %v1711 = vmul.f32 %v1697, %v1697
    %v1712 = vmul.f32 %v1702, %v1702
    %v1713 = vsel %vm203, %v1705, 0.0
    %v1714 = vsel %vm203, %v1706, 0.0
    %v1715 = vadd.f32 %v1713, %v1714
    %v1716 = vrot.slane %v1715, 4
    %v1717 = vadd.f32 %v1715, %v1716
    %v1718 = vrot.slane %v1717, 2
    %v1719 = vadd.f32 %v1717, %v1718
    %v1720 = vrot.slane %v1719, 1
    %v1721 = vadd.f32 %v1719, %v1720
    %v1722 = vsel %vm203, %v1707, 0.0
    %v1723 = vsel %vm203, %v1708, 0.0
    %v1724 = vadd.f32 %v1722, %v1723
    %v1725 = vrot.slane %v1724, 4
    %v1726 = vadd.f32 %v1724, %v1725
    %v1727 = vrot.slane %v1726, 2
    %v1728 = vadd.f32 %v1726, %v1727
    %v1729 = vrot.slane %v1728, 1
    %v1730 = vadd.f32 %v1728, %v1729
    %v1731 = vsel %vm203, %v1709, 0.0
    %v1732 = vsel %vm203, %v1710, 0.0
    %v1733 = vadd.f32 %v1731, %v1732
    %v1734 = vrot.slane %v1733, 4
    %v1735 = vadd.f32 %v1733, %v1734
    %v1736 = vrot.slane %v1735, 2
    %v1737 = vadd.f32 %v1735, %v1736
    %v1738 = vrot.slane %v1737, 1
    %v1739 = vadd.f32 %v1737, %v1738
    %v1740 = vsel %vm203, %v1711, 0.0
    %v1741 = vsel %vm203, %v1712, 0.0
    %v1742 = vadd.f32 %v1740, %v1741
    %v1743 = vrot.slane %v1742, 4
    %v1744 = vadd.f32 %v1742, %v1743
    %v1745 = vrot.slane %v1744, 2
    %v1746 = vadd.f32 %v1744, %v1745
    %v1747 = vrot.slane %v1746, 1
    %v1748 = vadd.f32 %v1746, %v1747
    %v1749 = vmax.f32 %v1721, 1e-24
    %v1750 = vmax.f32 %v1730, 1e-24
    %v1751 = vmax.f32 %v1739, 1e-24
    %v1752 = vmax.f32 %v1748, 1e-24
    %v1753 = vrsqrt.pop %v1749
    %v1754 = vrsqrt.pop %v1750
    %v1755 = vrsqrt.pop %v1751
    %v1756 = vrsqrt.pop %v1752
    %v1757 = vmul.f32 %v1667, %v1753
    %v1758 = vmul.f32 %v1672, %v1753
    %v1759 = vmul.f32 %v1677, %v1754
    %v1760 = vmul.f32 %v1682, %v1754
    %v1761 = vmul.f32 %v1687, %v1755
    %v1762 = vmul.f32 %v1692, %v1755
    %v1763 = vmul.f32 %v1697, %v1756
    %v1764 = vmul.f32 %v1702, %v1756
    %v1765 = vmul.f32 %v1757, 0.1
    %v1766 = vmul.f32 %v1758, 0.1
    %v1767 = vmul.f32 %v1759, 0.1
    %v1768 = vmul.f32 %v1760, 0.1
    %v1769 = vmul.f32 %v1761, 0.1
    %v1770 = vmul.f32 %v1762, 0.1
    %v1771 = vmul.f32 %v1763, 0.1
    %v1772 = vmul.f32 %v1764, 0.1
    %v1773 = vadd.f32 %v1765, %v77
    %v1774 = vadd.f32 %v1766, %v78
    %v1775 = vadd.f32 %v1767, %v109
    %v1776 = vadd.f32 %v1768, %v110
    %v1777 = vadd.f32 %v1769, %v141
    %v1778 = vadd.f32 %v1770, %v142
    %v1779 = vadd.f32 %v1771, %v173
    %v1780 = vadd.f32 %v1772, %v174
    %v1781 = vld [vmem:[%s4] sm:$0xf]
    %v1782 = vld [vmem:[%s5] sm:$0xff]
    %v1783 = vlaneseq
    %v1784 = vshrl.u32 %v1783, 7
    %v1785 = vsub.s32 0, %v1784
    %v1786 = vrot.slane %v1782, %v1785
    %v1787 = vmul.f32 %v1773, %v1786
    %v1788 = vmul.f32 %v1774, %v1786
    %v1789 = vmul.f32 %v1775, %v1786
    %v1790 = vmul.f32 %v1776, %v1786
    %v1791 = vlaneseq
    %v1792 = vshrl.u32 %v1791, 7
    %v1793 = vsub.s32 1, %v1792
    %v1794 = vrot.slane %v1782, %v1793
    %v1795 = vmul.f32 %v1777, %v1794
    %v1796 = vmul.f32 %v1778, %v1794
    %v1797 = vmul.f32 %v1779, %v1794
    %v1798 = vmul.f32 %v1780, %v1794
    %v1799 = vadd.f32 %v1787, %v1795
    %v1800 = vadd.f32 %v1788, %v1796
    %v1801 = vadd.f32 %v1789, %v1797
    %v1802 = vadd.f32 %v1790, %v1798
    %v1803 = vsel %vm203, %v1799, 0.0
    %1804 = vadd.xlane.f32.xlu0 %v1803
    %v1805 = vpop.xlane.xlu0 %1804
    %v1806 = vsel %vm203, %v1800, 0.0
    %1807 = vadd.xlane.f32.xlu0 %v1806
    %v1808 = vpop.xlane.xlu0 %1807
    %v1809 = vsel %vm203, %v1801, 0.0
    %1810 = vadd.xlane.f32.xlu0 %v1809
    %v1811 = vpop.xlane.xlu0 %1810
    %v1812 = vsel %vm203, %v1802, 0.0
    %1813 = vadd.xlane.f32.xlu0 %v1812
    %v1814 = vpop.xlane.xlu0 %1813
    %s1815 = sld [smem:[#allocation2]]
    %v1816 = vstv %s1815
    %v1817 = vadd.f32 %v1805, %v1816
    %v1818 = vadd.f32 %v1808, %v1816
    %v1819 = vadd.f32 %v1811, %v1816
    %v1820 = vadd.f32 %v1814, %v1816
    %v1821 = vsub.f32 0.0, %v1817
    %v1822 = vsub.f32 0.0, %v1818
    %v1823 = vsub.f32 0.0, %v1819
    %v1824 = vsub.f32 0.0, %v1820
    %v1825 = vmul.f32 %v1821, 1.442695
    %v1826 = vpow.pop %v1825
    %v1827 = vmul.f32 %v1822, 1.442695
    %v1828 = vpow.pop %v1827
    %v1829 = vmul.f32 %v1823, 1.442695
    %v1830 = vpow.pop %v1829
    %v1831 = vmul.f32 %v1824, 1.442695
    %v1832 = vpow.pop %v1831
    %v1833 = vadd.f32 %v1826, 1.0
    %v1834 = vadd.f32 %v1828, 1.0
    %v1835 = vadd.f32 %v1830, 1.0
    %v1836 = vadd.f32 %v1832, 1.0
    %v1837 = vrcp.pop %v1833
    %v1838 = vrcp.pop %v1834
    %v1839 = vrcp.pop %v1835
    %v1840 = vrcp.pop %v1836
    %v1841 = vlaneseq
    %v1842 = vshrl.u32 %v1841, 7
    %v1843 = vsub.s32 2, %v1842
    %v1844 = vrot.slane %v1782, %v1843
    %v1845 = vmul.f32 %v1773, %v1844
    %v1846 = vmul.f32 %v1774, %v1844
    %v1847 = vmul.f32 %v1775, %v1844
    %v1848 = vmul.f32 %v1776, %v1844
    %v1849 = vlaneseq
    %v1850 = vshrl.u32 %v1849, 7
    %v1851 = vsub.s32 3, %v1850
    %v1852 = vrot.slane %v1782, %v1851
    %v1853 = vmul.f32 %v1777, %v1852
    %v1854 = vmul.f32 %v1778, %v1852
    %v1855 = vmul.f32 %v1779, %v1852
    %v1856 = vmul.f32 %v1780, %v1852
    %v1857 = vadd.f32 %v1845, %v1853
    %v1858 = vadd.f32 %v1846, %v1854
    %v1859 = vadd.f32 %v1847, %v1855
    %v1860 = vadd.f32 %v1848, %v1856
    %v1861 = vsel %vm203, %v1857, 0.0
    %1862 = vadd.xlane.f32.xlu0 %v1861
    %v1863 = vpop.xlane.xlu0 %1862
    %v1864 = vsel %vm203, %v1858, 0.0
    %1865 = vadd.xlane.f32.xlu0 %v1864
    %v1866 = vpop.xlane.xlu0 %1865
    %v1867 = vsel %vm203, %v1859, 0.0
    %1868 = vadd.xlane.f32.xlu0 %v1867
    %v1869 = vpop.xlane.xlu0 %1868
    %v1870 = vsel %vm203, %v1860, 0.0
    %1871 = vadd.xlane.f32.xlu0 %v1870
    %v1872 = vpop.xlane.xlu0 %1871
    %s1873 = sld [smem:[#allocation2 + $0x1]]
    %v1874 = vstv %s1873
    %v1875 = vadd.f32 %v1863, %v1874
    %v1876 = vadd.f32 %v1866, %v1874
    %v1877 = vadd.f32 %v1869, %v1874
    %v1878 = vadd.f32 %v1872, %v1874
    %v1879 = vsub.f32 0.0, %v1875
    %v1880 = vsub.f32 0.0, %v1876
    %v1881 = vsub.f32 0.0, %v1877
    %v1882 = vsub.f32 0.0, %v1878
    %v1883 = vmul.f32 %v1879, 1.442695
    %v1884 = vpow.pop %v1883
    %v1885 = vmul.f32 %v1880, 1.442695
    %v1886 = vpow.pop %v1885
    %v1887 = vmul.f32 %v1881, 1.442695
    %v1888 = vpow.pop %v1887
    %v1889 = vmul.f32 %v1882, 1.442695
    %v1890 = vpow.pop %v1889
    %v1891 = vadd.f32 %v1884, 1.0
    %v1892 = vadd.f32 %v1886, 1.0
    %v1893 = vadd.f32 %v1888, 1.0
    %v1894 = vadd.f32 %v1890, 1.0
    %v1895 = vrcp.pop %v1891
    %v1896 = vrcp.pop %v1892
    %v1897 = vrcp.pop %v1893
    %v1898 = vrcp.pop %v1894
    %v1899 = vmul.f32 %v1773, %v1837
    %v1900 = vmul.f32 %v1774, %v1838
    %v1901 = vmul.f32 %v1775, %v1839
    %v1902 = vmul.f32 %v1776, %v1840
    %v1903 = vmul.f32 %v1777, %v1895
    %v1904 = vmul.f32 %v1778, %v1896
    %v1905 = vmul.f32 %v1779, %v1897
    %v1906 = vmul.f32 %v1780, %v1898
    %v1907 = vld [vmem:[%s3] sm:$0xff]
    %v1908 = vld [vmem:[%s3 + $0x8] sm:$0xff]
    %v1909 = vld [vmem:[%s3 + $0x10] sm:$0xff]
    %v1910 = vld [vmem:[%s3 + $0x18] sm:$0xff]
    %v1911 = vlaneseq
    %v1912 = vshrl.u32 %v1911, 7
    %v1913 = vsub.s32 0, %v1912
    %v1914 = vrot.slane %v1781, %v1913
    %v1916 = vsel %vm203, %v1899, 0
    %v1919 = vsel %vm203, %v1900, 0
    %v1922 = vsel %vm203, %v1901, 0
    %v1925 = vsel %vm203, %v1902, 0
    %1927 = vmatprep.subr.mxu0 0.0
    %1928 = vmatpush1.msra.mxu0 %v1907
    %1929 = vmatprep.subr.mxu0 0.0
    %1930 = vmatpush1.msra.mxu0 %v1908
    %1931 = vmatprep.subr.mxu0 0.0
    %1932 = vmatpush1.msra.mxu0 %v1909
    %1933 = vmatprep.subr.mxu0 0.0
    %1934 = vmatpush1.msra.mxu0 %v1910
    %1935 = vmatprep.subr.mxu0 0.0
    %1936 = vmatpush1.msra.mxu0 0.0
    %1937 = vmatprep.subr.mxu0 0.0
    %1938 = vmatpush1.msra.mxu0 0.0
    %1939 = vmatprep.subr.mxu0 0.0
    %1940 = vmatpush1.msra.mxu0 0.0
    %1941 = vmatprep.subr.mxu0 0.0
    %1942 = vmatpush1.msra.mxu0 0.0
    %1943 = vmatprep.subr.mxu0 0.0
    %1944 = vmatpush1.msra.mxu0 0.0
    %1945 = vmatprep.subr.mxu0 0.0
    %1946 = vmatpush1.msra.mxu0 0.0
    %1947 = vmatprep.subr.mxu0 0.0
    %1948 = vmatpush1.msra.mxu0 0.0
    %1949 = vmatprep.subr.mxu0 0.0
    %1950 = vmatpush1.msra.mxu0 0.0
    %1951 = vmatprep.subr.mxu0 0.0
    %1952 = vmatpush1.msra.mxu0 0.0
    %1953 = vmatprep.subr.mxu0 0.0
    %1954 = vmatpush1.msra.mxu0 0.0
    %1955 = vmatprep.subr.mxu0 0.0
    %1956 = vmatpush1.msra.mxu0 0.0
    %1957 = vmatprep.subr.mxu0 0.0
    %1958 = vmatpush1.msra.mxu0 0.0
    %1959 = vmatprep.subr.mxu0 0.0
    %1960 = vmatpush1.msra.mxu0 0.0
    %1961 = vmatprep.subr.mxu0 0.0
    %1962 = vmatpush1.msra.mxu0 0.0
    %1963 = vmatprep.subr.mxu0 0.0
    %1964 = vmatpush1.msra.mxu0 0.0
    %1965 = vmatprep.subr.mxu0 0.0
    %1966 = vmatpush1.msra.mxu0 0.0
    %1967 = vmatprep.subr.mxu0 0.0
    %1968 = vmatpush1.msra.mxu0 0.0
    %1969 = vmatprep.subr.mxu0 0.0
    %1970 = vmatpush1.msra.mxu0 0.0
    %1971 = vmatprep.subr.mxu0 0.0
    %1972 = vmatpush1.msra.mxu0 0.0
    %1973 = vmatprep.subr.mxu0 0.0
    %1974 = vmatpush1.msra.mxu0 0.0
    %1975 = vmatprep.subr.mxu0 0.0
    %1976 = vmatpush1.msra.mxu0 0.0
    %1977 = vmatprep.subr.mxu0 0.0
    %1978 = vmatpush1.msra.mxu0 0.0
    %1979 = vmatprep.subr.mxu0 0.0
    %1980 = vmatpush1.msra.mxu0 0.0
    %1981 = vmatprep.subr.mxu0 0.0
    %1982 = vmatpush1.msra.mxu0 0.0
    %1983 = vmatprep.subr.mxu0 0.0
    %1984 = vmatpush1.msra.mxu0 0.0
    %1985 = vmatprep.subr.mxu0 0.0
    %1986 = vmatpush1.msra.mxu0 0.0
    %1987 = vmatprep.subr.mxu0 0.0
    %1988 = vmatpush1.msra.mxu0 0.0
    %1989 = vmatprep.subr.mxu0 0.0
    %1990 = vmatpush1.msra.mxu0 0.0
    %1991 = vmatprep.mubr.f32.mxu0 0.0
    %1992 = vmatmul.mubr.f32.gmra.mrb[0].mxu0 %v1916
    %v1993 = vpop.f32.mrb[0].mxu0
    %v1994 = vadd.f32 %v1914, %v1993
    %v1995 = vpop.f32.mrb[0].mxu0
    %1996 = vmatprep.mubr.f32.mxu0 0.0
    %1997 = vmatmul.mubr.f32.gmra.mrb[0].mxu0 %v1919
    %v1998 = vpop.f32.mrb[0].mxu0
    %v1999 = vadd.f32 %v1914, %v1998
    %v2000 = vpop.f32.mrb[0].mxu0
    %2001 = vmatprep.mubr.f32.mxu0 0.0
    %2002 = vmatmul.mubr.f32.gmra.mrb[0].mxu0 %v1922
    %v2003 = vpop.f32.mrb[0].mxu0
    %v2004 = vadd.f32 %v1914, %v2003
    %v2005 = vpop.f32.mrb[0].mxu0
    %2006 = vmatprep.mubr.f32.mxu0 0.0
    %2007 = vmatmul.mubr.f32.gmra.mrb[0].mxu0 %v1925
    %v2008 = vpop.f32.mrb[0].mxu0
    %v2009 = vadd.f32 %v1914, %v2008
    %v2010 = vpop.f32.mrb[0].mxu0
    %2011 = vdwg.mxu0
    %v2012 = vmax.f32 %v1994, 0.0
    %v2013 = vmax.f32 %v1999, 0.0
    %v2014 = vmax.f32 %v2004, 0.0
    %v2015 = vmax.f32 %v2009, 0.0
    %s2016 = scalar_lea.vmem %s3, 32
    %v2017 = vld [vmem:[%s2016] sm:$0xff]
    %v2018 = vld [vmem:[%s2016 + $0x8] sm:$0xff]
    %v2019 = vld [vmem:[%s2016 + $0x10] sm:$0xff]
    %v2020 = vld [vmem:[%s2016 + $0x18] sm:$0xff]
    %v2021 = vlaneseq
    %v2022 = vshrl.u32 %v2021, 7
    %v2023 = vsub.s32 1, %v2022
    %v2024 = vrot.slane %v1781, %v2023
    %v2026 = vsel %vm203, %v1903, 0
    %v2029 = vsel %vm203, %v1904, 0
    %v2032 = vsel %vm203, %v1905, 0
    %v2035 = vsel %vm203, %v1906, 0
    %2037 = vmatprep.subr.mxu0 0.0
    %2038 = vmatpush1.msra.mxu0 %v2017
    %2039 = vmatprep.subr.mxu0 0.0
    %2040 = vmatpush1.msra.mxu0 %v2018
    %2041 = vmatprep.subr.mxu0 0.0
    %2042 = vmatpush1.msra.mxu0 %v2019
    %2043 = vmatprep.subr.mxu0 0.0
    %2044 = vmatpush1.msra.mxu0 %v2020
    %2045 = vmatprep.subr.mxu0 0.0
    %2046 = vmatpush1.msra.mxu0 0.0
    %2047 = vmatprep.subr.mxu0 0.0
    %2048 = vmatpush1.msra.mxu0 0.0
    %2049 = vmatprep.subr.mxu0 0.0
    %2050 = vmatpush1.msra.mxu0 0.0
    %2051 = vmatprep.subr.mxu0 0.0
    %2052 = vmatpush1.msra.mxu0 0.0
    %2053 = vmatprep.subr.mxu0 0.0
    %2054 = vmatpush1.msra.mxu0 0.0
    %2055 = vmatprep.subr.mxu0 0.0
    %2056 = vmatpush1.msra.mxu0 0.0
    %2057 = vmatprep.subr.mxu0 0.0
    %2058 = vmatpush1.msra.mxu0 0.0
    %2059 = vmatprep.subr.mxu0 0.0
    %2060 = vmatpush1.msra.mxu0 0.0
    %2061 = vmatprep.subr.mxu0 0.0
    %2062 = vmatpush1.msra.mxu0 0.0
    %2063 = vmatprep.subr.mxu0 0.0
    %2064 = vmatpush1.msra.mxu0 0.0
    %2065 = vmatprep.subr.mxu0 0.0
    %2066 = vmatpush1.msra.mxu0 0.0
    %2067 = vmatprep.subr.mxu0 0.0
    %2068 = vmatpush1.msra.mxu0 0.0
    %2069 = vmatprep.subr.mxu0 0.0
    %2070 = vmatpush1.msra.mxu0 0.0
    %2071 = vmatprep.subr.mxu0 0.0
    %2072 = vmatpush1.msra.mxu0 0.0
    %2073 = vmatprep.subr.mxu0 0.0
    %2074 = vmatpush1.msra.mxu0 0.0
    %2075 = vmatprep.subr.mxu0 0.0
    %2076 = vmatpush1.msra.mxu0 0.0
    %2077 = vmatprep.subr.mxu0 0.0
    %2078 = vmatpush1.msra.mxu0 0.0
    %2079 = vmatprep.subr.mxu0 0.0
    %2080 = vmatpush1.msra.mxu0 0.0
    %2081 = vmatprep.subr.mxu0 0.0
    %2082 = vmatpush1.msra.mxu0 0.0
    %2083 = vmatprep.subr.mxu0 0.0
    %2084 = vmatpush1.msra.mxu0 0.0
    %2085 = vmatprep.subr.mxu0 0.0
    %2086 = vmatpush1.msra.mxu0 0.0
    %2087 = vmatprep.subr.mxu0 0.0
    %2088 = vmatpush1.msra.mxu0 0.0
    %2089 = vmatprep.subr.mxu0 0.0
    %2090 = vmatpush1.msra.mxu0 0.0
    %2091 = vmatprep.subr.mxu0 0.0
    %2092 = vmatpush1.msra.mxu0 0.0
    %2093 = vmatprep.subr.mxu0 0.0
    %2094 = vmatpush1.msra.mxu0 0.0
    %2095 = vmatprep.subr.mxu0 0.0
    %2096 = vmatpush1.msra.mxu0 0.0
    %2097 = vmatprep.subr.mxu0 0.0
    %2098 = vmatpush1.msra.mxu0 0.0
    %2099 = vmatprep.subr.mxu0 0.0
    %2100 = vmatpush1.msra.mxu0 0.0
    %2101 = vmatprep.mubr.f32.mxu0 0.0
    %2102 = vmatmul.mubr.f32.gmra.mrb[0].mxu0 %v2026
    %v2103 = vpop.f32.mrb[0].mxu0
    %v2104 = vadd.f32 %v2024, %v2103
    %v2105 = vpop.f32.mrb[0].mxu0
    %2106 = vmatprep.mubr.f32.mxu0 0.0
    %2107 = vmatmul.mubr.f32.gmra.mrb[0].mxu0 %v2029
    %v2108 = vpop.f32.mrb[0].mxu0
    %v2109 = vadd.f32 %v2024, %v2108
    %v2110 = vpop.f32.mrb[0].mxu0
    %2111 = vmatprep.mubr.f32.mxu0 0.0
    %2112 = vmatmul.mubr.f32.gmra.mrb[0].mxu0 %v2032
    %v2113 = vpop.f32.mrb[0].mxu0
    %v2114 = vadd.f32 %v2024, %v2113
    %v2115 = vpop.f32.mrb[0].mxu0
    %2116 = vmatprep.mubr.f32.mxu0 0.0
    %2117 = vmatmul.mubr.f32.gmra.mrb[0].mxu0 %v2035
    %v2118 = vpop.f32.mrb[0].mxu0
    %v2119 = vadd.f32 %v2024, %v2118
    %v2120 = vpop.f32.mrb[0].mxu0
    %2121 = vdwg.mxu0
    %v2122 = vmax.f32 %v2104, 0.0
    %v2123 = vmax.f32 %v2109, 0.0
    %v2124 = vmax.f32 %v2114, 0.0
    %v2125 = vmax.f32 %v2119, 0.0
    %v2126 = vlaneseq
    %v2127 = vshrl.u32 %v2126, 7
    %v2128 = vsub.s32 4, %v2127
    %v2129 = vrot.slane %v1782, %v2128
    %v2130 = vmul.f32 %v2012, %v2129
    %v2131 = vmul.f32 %v2013, %v2129
    %v2132 = vmul.f32 %v2014, %v2129
    %v2133 = vmul.f32 %v2015, %v2129
    %v2134 = vlaneseq
    %v2135 = vshrl.u32 %v2134, 7
    %v2136 = vsub.s32 5, %v2135
    %v2137 = vrot.slane %v1782, %v2136
    %v2138 = vmul.f32 %v2122, %v2137
    %v2139 = vmul.f32 %v2123, %v2137
    %v2140 = vmul.f32 %v2124, %v2137
    %v2141 = vmul.f32 %v2125, %v2137
    %v2142 = vadd.f32 %v2130, %v2138
    %v2143 = vadd.f32 %v2131, %v2139
    %v2144 = vadd.f32 %v2132, %v2140
    %v2145 = vadd.f32 %v2133, %v2141
    %v2146 = vsel %vm203, %v2142, 0.0
    %2147 = vadd.xlane.f32.xlu0 %v2146
    %v2148 = vpop.xlane.xlu0 %2147
    %v2149 = vsel %vm203, %v2143, 0.0
    %2150 = vadd.xlane.f32.xlu0 %v2149
    %v2151 = vpop.xlane.xlu0 %2150
    %v2152 = vsel %vm203, %v2144, 0.0
    %2153 = vadd.xlane.f32.xlu0 %v2152
    %v2154 = vpop.xlane.xlu0 %2153
    %v2155 = vsel %vm203, %v2145, 0.0
    %2156 = vadd.xlane.f32.xlu0 %v2155
    %v2157 = vpop.xlane.xlu0 %2156
    %s2158 = sld [smem:[#allocation2 + $0x80]]
    %v2159 = vstv %s2158
    %v2160 = vadd.f32 %v2148, %v2159
    %v2161 = vadd.f32 %v2151, %v2159
    %v2162 = vadd.f32 %v2154, %v2159
    %v2163 = vadd.f32 %v2157, %v2159
    %v2164 = vsub.f32 0.0, %v2160
    %v2165 = vsub.f32 0.0, %v2161
    %v2166 = vsub.f32 0.0, %v2162
    %v2167 = vsub.f32 0.0, %v2163
    %v2168 = vmul.f32 %v2164, 1.442695
    %v2169 = vpow.pop %v2168
    %v2170 = vmul.f32 %v2165, 1.442695
    %v2171 = vpow.pop %v2170
    %v2172 = vmul.f32 %v2166, 1.442695
    %v2173 = vpow.pop %v2172
    %v2174 = vmul.f32 %v2167, 1.442695
    %v2175 = vpow.pop %v2174
    %v2176 = vadd.f32 %v2169, 1.0
    %v2177 = vadd.f32 %v2171, 1.0
    %v2178 = vadd.f32 %v2173, 1.0
    %v2179 = vadd.f32 %v2175, 1.0
    %v2180 = vrcp.pop %v2176
    %v2181 = vrcp.pop %v2177
    %v2182 = vrcp.pop %v2178
    %v2183 = vrcp.pop %v2179
    %v2184 = vlaneseq
    %v2185 = vshrl.u32 %v2184, 7
    %v2186 = vsub.s32 6, %v2185
    %v2187 = vrot.slane %v1782, %v2186
    %v2188 = vmul.f32 %v2012, %v2187
    %v2189 = vmul.f32 %v2013, %v2187
    %v2190 = vmul.f32 %v2014, %v2187
    %v2191 = vmul.f32 %v2015, %v2187
    %v2192 = vlaneseq
    %v2193 = vshrl.u32 %v2192, 7
    %v2194 = vsub.s32 7, %v2193
    %v2195 = vrot.slane %v1782, %v2194
    %v2196 = vmul.f32 %v2122, %v2195
    %v2197 = vmul.f32 %v2123, %v2195
    %v2198 = vmul.f32 %v2124, %v2195
    %v2199 = vmul.f32 %v2125, %v2195
    %v2200 = vadd.f32 %v2188, %v2196
    %v2201 = vadd.f32 %v2189, %v2197
    %v2202 = vadd.f32 %v2190, %v2198
    %v2203 = vadd.f32 %v2191, %v2199
    %v2204 = vsel %vm203, %v2200, 0.0
    %2205 = vadd.xlane.f32.xlu0 %v2204
    %v2206 = vpop.xlane.xlu0 %2205
    %v2207 = vsel %vm203, %v2201, 0.0
    %2208 = vadd.xlane.f32.xlu0 %v2207
    %v2209 = vpop.xlane.xlu0 %2208
    %v2210 = vsel %vm203, %v2202, 0.0
    %2211 = vadd.xlane.f32.xlu0 %v2210
    %v2212 = vpop.xlane.xlu0 %2211
    %v2213 = vsel %vm203, %v2203, 0.0
    %2214 = vadd.xlane.f32.xlu0 %v2213
    %v2215 = vpop.xlane.xlu0 %2214
    %s2216 = sld [smem:[#allocation2 + $0x81]]
    %v2217 = vstv %s2216
    %v2218 = vadd.f32 %v2206, %v2217
    %v2219 = vadd.f32 %v2209, %v2217
    %v2220 = vadd.f32 %v2212, %v2217
    %v2221 = vadd.f32 %v2215, %v2217
    %v2222 = vsub.f32 0.0, %v2218
    %v2223 = vsub.f32 0.0, %v2219
    %v2224 = vsub.f32 0.0, %v2220
    %v2225 = vsub.f32 0.0, %v2221
    %v2226 = vmul.f32 %v2222, 1.442695
    %v2227 = vpow.pop %v2226
    %v2228 = vmul.f32 %v2223, 1.442695
    %v2229 = vpow.pop %v2228
    %v2230 = vmul.f32 %v2224, 1.442695
    %v2231 = vpow.pop %v2230
    %v2232 = vmul.f32 %v2225, 1.442695
    %v2233 = vpow.pop %v2232
    %v2234 = vadd.f32 %v2227, 1.0
    %v2235 = vadd.f32 %v2229, 1.0
    %v2236 = vadd.f32 %v2231, 1.0
    %v2237 = vadd.f32 %v2233, 1.0
    %v2238 = vrcp.pop %v2234
    %v2239 = vrcp.pop %v2235
    %v2240 = vrcp.pop %v2236
    %v2241 = vrcp.pop %v2237
    %v2242 = vmul.f32 %v2012, %v2180
    %v2243 = vmul.f32 %v2013, %v2181
    %v2244 = vmul.f32 %v2014, %v2182
    %v2245 = vmul.f32 %v2015, %v2183
    %v2246 = vmul.f32 %v2122, %v2238
    %v2247 = vmul.f32 %v2123, %v2239
    %v2248 = vmul.f32 %v2124, %v2240
    %v2249 = vmul.f32 %v2125, %v2241
    %s2250 = scalar_lea.vmem %s3, 64
    %v2251 = vld [vmem:[%s2250] sm:$0xff]
    %v2252 = vld [vmem:[%s2250 + $0x8] sm:$0xff]
    %v2253 = vld [vmem:[%s2250 + $0x10] sm:$0xff]
    %v2254 = vld [vmem:[%s2250 + $0x18] sm:$0xff]
    %v2255 = vlaneseq
    %v2256 = vshrl.u32 %v2255, 7
    %v2257 = vsub.s32 2, %v2256
    %v2258 = vrot.slane %v1781, %v2257
    %v2260 = vsel %vm203, %v2242, 0
    %v2263 = vsel %vm203, %v2243, 0
    %v2266 = vsel %vm203, %v2244, 0
    %v2269 = vsel %vm203, %v2245, 0
    %2271 = vmatprep.subr.mxu0 0.0
    %2272 = vmatpush1.msra.mxu0 %v2251
    %2273 = vmatprep.subr.mxu0 0.0
    %2274 = vmatpush1.msra.mxu0 %v2252
    %2275 = vmatprep.subr.mxu0 0.0
    %2276 = vmatpush1.msra.mxu0 %v2253
    %2277 = vmatprep.subr.mxu0 0.0
    %2278 = vmatpush1.msra.mxu0 %v2254
    %2279 = vmatprep.subr.mxu0 0.0
    %2280 = vmatpush1.msra.mxu0 0.0
    %2281 = vmatprep.subr.mxu0 0.0
    %2282 = vmatpush1.msra.mxu0 0.0
    %2283 = vmatprep.subr.mxu0 0.0
    %2284 = vmatpush1.msra.mxu0 0.0
    %2285 = vmatprep.subr.mxu0 0.0
    %2286 = vmatpush1.msra.mxu0 0.0
    %2287 = vmatprep.subr.mxu0 0.0
    %2288 = vmatpush1.msra.mxu0 0.0
    %2289 = vmatprep.subr.mxu0 0.0
    %2290 = vmatpush1.msra.mxu0 0.0
    %2291 = vmatprep.subr.mxu0 0.0
    %2292 = vmatpush1.msra.mxu0 0.0
    %2293 = vmatprep.subr.mxu0 0.0
    %2294 = vmatpush1.msra.mxu0 0.0
    %2295 = vmatprep.subr.mxu0 0.0
    %2296 = vmatpush1.msra.mxu0 0.0
    %2297 = vmatprep.subr.mxu0 0.0
    %2298 = vmatpush1.msra.mxu0 0.0
    %2299 = vmatprep.subr.mxu0 0.0
    %2300 = vmatpush1.msra.mxu0 0.0
    %2301 = vmatprep.subr.mxu0 0.0
    %2302 = vmatpush1.msra.mxu0 0.0
    %2303 = vmatprep.subr.mxu0 0.0
    %2304 = vmatpush1.msra.mxu0 0.0
    %2305 = vmatprep.subr.mxu0 0.0
    %2306 = vmatpush1.msra.mxu0 0.0
    %2307 = vmatprep.subr.mxu0 0.0
    %2308 = vmatpush1.msra.mxu0 0.0
    %2309 = vmatprep.subr.mxu0 0.0
    %2310 = vmatpush1.msra.mxu0 0.0
    %2311 = vmatprep.subr.mxu0 0.0
    %2312 = vmatpush1.msra.mxu0 0.0
    %2313 = vmatprep.subr.mxu0 0.0
    %2314 = vmatpush1.msra.mxu0 0.0
    %2315 = vmatprep.subr.mxu0 0.0
    %2316 = vmatpush1.msra.mxu0 0.0
    %2317 = vmatprep.subr.mxu0 0.0
    %2318 = vmatpush1.msra.mxu0 0.0
    %2319 = vmatprep.subr.mxu0 0.0
    %2320 = vmatpush1.msra.mxu0 0.0
    %2321 = vmatprep.subr.mxu0 0.0
    %2322 = vmatpush1.msra.mxu0 0.0
    %2323 = vmatprep.subr.mxu0 0.0
    %2324 = vmatpush1.msra.mxu0 0.0
    %2325 = vmatprep.subr.mxu0 0.0
    %2326 = vmatpush1.msra.mxu0 0.0
    %2327 = vmatprep.subr.mxu0 0.0
    %2328 = vmatpush1.msra.mxu0 0.0
    %2329 = vmatprep.subr.mxu0 0.0
    %2330 = vmatpush1.msra.mxu0 0.0
    %2331 = vmatprep.subr.mxu0 0.0
    %2332 = vmatpush1.msra.mxu0 0.0
    %2333 = vmatprep.subr.mxu0 0.0
    %2334 = vmatpush1.msra.mxu0 0.0
    %2335 = vmatprep.mubr.f32.mxu0 0.0
    %2336 = vmatmul.mubr.f32.gmra.mrb[0].mxu0 %v2260
    %v2337 = vpop.f32.mrb[0].mxu0
    %v2338 = vadd.f32 %v2258, %v2337
    %v2339 = vpop.f32.mrb[0].mxu0
    %2340 = vmatprep.mubr.f32.mxu0 0.0
    %2341 = vmatmul.mubr.f32.gmra.mrb[0].mxu0 %v2263
    %v2342 = vpop.f32.mrb[0].mxu0
    %v2343 = vadd.f32 %v2258, %v2342
    %v2344 = vpop.f32.mrb[0].mxu0
    %2345 = vmatprep.mubr.f32.mxu0 0.0
    %2346 = vmatmul.mubr.f32.gmra.mrb[0].mxu0 %v2266
    %v2347 = vpop.f32.mrb[0].mxu0
    %v2348 = vadd.f32 %v2258, %v2347
    %v2349 = vpop.f32.mrb[0].mxu0
    %2350 = vmatprep.mubr.f32.mxu0 0.0
    %2351 = vmatmul.mubr.f32.gmra.mrb[0].mxu0 %v2269
    %v2352 = vpop.f32.mrb[0].mxu0
    %v2353 = vadd.f32 %v2258, %v2352
    %v2354 = vpop.f32.mrb[0].mxu0
    %2355 = vdwg.mxu0
    %v2356 = vmax.f32 %v2338, 0.0
    %v2357 = vmax.f32 %v2343, 0.0
    %v2358 = vmax.f32 %v2348, 0.0
    %v2359 = vmax.f32 %v2353, 0.0
    %s2360 = scalar_lea.vmem %s3, 96
    %v2361 = vld [vmem:[%s2360] sm:$0xff]
    %v2362 = vld [vmem:[%s2360 + $0x8] sm:$0xff]
    %v2363 = vld [vmem:[%s2360 + $0x10] sm:$0xff]
    %v2364 = vld [vmem:[%s2360 + $0x18] sm:$0xff]
    %v2365 = vlaneseq
    %v2366 = vshrl.u32 %v2365, 7
    %v2367 = vsub.s32 3, %v2366
    %v2368 = vrot.slane %v1781, %v2367
    %v2370 = vsel %vm203, %v2246, 0
    %v2373 = vsel %vm203, %v2247, 0
    %v2376 = vsel %vm203, %v2248, 0
    %v2379 = vsel %vm203, %v2249, 0
    %2381 = vmatprep.subr.mxu0 0.0
    %2382 = vmatpush1.msra.mxu0 %v2361
    %2383 = vmatprep.subr.mxu0 0.0
    %2384 = vmatpush1.msra.mxu0 %v2362
    %2385 = vmatprep.subr.mxu0 0.0
    %2386 = vmatpush1.msra.mxu0 %v2363
    %2387 = vmatprep.subr.mxu0 0.0
    %2388 = vmatpush1.msra.mxu0 %v2364
    %2389 = vmatprep.subr.mxu0 0.0
    %2390 = vmatpush1.msra.mxu0 0.0
    %2391 = vmatprep.subr.mxu0 0.0
    %2392 = vmatpush1.msra.mxu0 0.0
    %2393 = vmatprep.subr.mxu0 0.0
    %2394 = vmatpush1.msra.mxu0 0.0
    %2395 = vmatprep.subr.mxu0 0.0
    %2396 = vmatpush1.msra.mxu0 0.0
    %2397 = vmatprep.subr.mxu0 0.0
    %2398 = vmatpush1.msra.mxu0 0.0
    %2399 = vmatprep.subr.mxu0 0.0
    %2400 = vmatpush1.msra.mxu0 0.0
    %2401 = vmatprep.subr.mxu0 0.0
    %2402 = vmatpush1.msra.mxu0 0.0
    %2403 = vmatprep.subr.mxu0 0.0
    %2404 = vmatpush1.msra.mxu0 0.0
    %2405 = vmatprep.subr.mxu0 0.0
    %2406 = vmatpush1.msra.mxu0 0.0
    %2407 = vmatprep.subr.mxu0 0.0
    %2408 = vmatpush1.msra.mxu0 0.0
    %2409 = vmatprep.subr.mxu0 0.0
    %2410 = vmatpush1.msra.mxu0 0.0
    %2411 = vmatprep.subr.mxu0 0.0
    %2412 = vmatpush1.msra.mxu0 0.0
    %2413 = vmatprep.subr.mxu0 0.0
    %2414 = vmatpush1.msra.mxu0 0.0
    %2415 = vmatprep.subr.mxu0 0.0
    %2416 = vmatpush1.msra.mxu0 0.0
    %2417 = vmatprep.subr.mxu0 0.0
    %2418 = vmatpush1.msra.mxu0 0.0
    %2419 = vmatprep.subr.mxu0 0.0
    %2420 = vmatpush1.msra.mxu0 0.0
    %2421 = vmatprep.subr.mxu0 0.0
    %2422 = vmatpush1.msra.mxu0 0.0
    %2423 = vmatprep.subr.mxu0 0.0
    %2424 = vmatpush1.msra.mxu0 0.0
    %2425 = vmatprep.subr.mxu0 0.0
    %2426 = vmatpush1.msra.mxu0 0.0
    %2427 = vmatprep.subr.mxu0 0.0
    %2428 = vmatpush1.msra.mxu0 0.0
    %2429 = vmatprep.subr.mxu0 0.0
    %2430 = vmatpush1.msra.mxu0 0.0
    %2431 = vmatprep.subr.mxu0 0.0
    %2432 = vmatpush1.msra.mxu0 0.0
    %2433 = vmatprep.subr.mxu0 0.0
    %2434 = vmatpush1.msra.mxu0 0.0
    %2435 = vmatprep.subr.mxu0 0.0
    %2436 = vmatpush1.msra.mxu0 0.0
    %2437 = vmatprep.subr.mxu0 0.0
    %2438 = vmatpush1.msra.mxu0 0.0
    %2439 = vmatprep.subr.mxu0 0.0
    %2440 = vmatpush1.msra.mxu0 0.0
    %2441 = vmatprep.subr.mxu0 0.0
    %2442 = vmatpush1.msra.mxu0 0.0
    %2443 = vmatprep.subr.mxu0 0.0
    %2444 = vmatpush1.msra.mxu0 0.0
    %2445 = vmatprep.mubr.f32.mxu0 0.0
    %2446 = vmatmul.mubr.f32.gmra.mrb[0].mxu0 %v2370
    %v2447 = vpop.f32.mrb[0].mxu0
    %v2448 = vadd.f32 %v2368, %v2447
    %v2449 = vpop.f32.mrb[0].mxu0
    %2450 = vmatprep.mubr.f32.mxu0 0.0
    %2451 = vmatmul.mubr.f32.gmra.mrb[0].mxu0 %v2373
    %v2452 = vpop.f32.mrb[0].mxu0
    %v2453 = vadd.f32 %v2368, %v2452
    %v2454 = vpop.f32.mrb[0].mxu0
    %2455 = vmatprep.mubr.f32.mxu0 0.0
    %2456 = vmatmul.mubr.f32.gmra.mrb[0].mxu0 %v2376
    %v2457 = vpop.f32.mrb[0].mxu0
    %v2458 = vadd.f32 %v2368, %v2457
    %v2459 = vpop.f32.mrb[0].mxu0
    %2460 = vmatprep.mubr.f32.mxu0 0.0
    %2461 = vmatmul.mubr.f32.gmra.mrb[0].mxu0 %v2379
    %v2462 = vpop.f32.mrb[0].mxu0
    %v2463 = vadd.f32 %v2368, %v2462
    %v2464 = vpop.f32.mrb[0].mxu0
    %2465 = vdwg.mxu0
    %v2466 = vmax.f32 %v2448, 0.0
    %v2467 = vmax.f32 %v2453, 0.0
    %v2468 = vmax.f32 %v2458, 0.0
    %v2469 = vmax.f32 %v2463, 0.0
    %v2470 = vld [vmem:[%s7] sm:$0xff]
    %v2471 = vld [vmem:[%s7 + $0x8] sm:$0xff]
    %v2472 = vld [vmem:[%s7 + $0x10] sm:$0xff]
    %v2473 = vld [vmem:[%s7 + $0x18] sm:$0xff]
    %s2474 = scalar_lea.vmem %s7, 32
    %v2475 = vld [vmem:[%s2474] sm:$0xff]
    %v2476 = vld [vmem:[%s2474 + $0x8] sm:$0xff]
    %v2477 = vld [vmem:[%s2474 + $0x10] sm:$0xff]
    %v2478 = vld [vmem:[%s2474 + $0x18] sm:$0xff]
    %v2480 = vsel %vm203, %v2356, 0
    %v2483 = vsel %vm203, %v2357, 0
    %v2486 = vsel %vm203, %v2358, 0
    %v2489 = vsel %vm203, %v2359, 0
    %2491 = vmatprep.subr.mxu0 0.0
    %2492 = vmatpush1.msra.mxu0 %v2475
    %2493 = vmatprep.subr.mxu0 0.0
    %2494 = vmatpush1.msra.mxu0 %v2476
    %2495 = vmatprep.subr.mxu0 0.0
    %2496 = vmatpush1.msra.mxu0 %v2477
    %2497 = vmatprep.subr.mxu0 0.0
    %2498 = vmatpush1.msra.mxu0 %v2478
    %2499 = vmatprep.subr.mxu0 0.0
    %2500 = vmatpush1.msra.mxu0 0.0
    %2501 = vmatprep.subr.mxu0 0.0
    %2502 = vmatpush1.msra.mxu0 0.0
    %2503 = vmatprep.subr.mxu0 0.0
    %2504 = vmatpush1.msra.mxu0 0.0
    %2505 = vmatprep.subr.mxu0 0.0
    %2506 = vmatpush1.msra.mxu0 0.0
    %2507 = vmatprep.subr.mxu0 0.0
    %2508 = vmatpush1.msra.mxu0 0.0
    %2509 = vmatprep.subr.mxu0 0.0
    %2510 = vmatpush1.msra.mxu0 0.0
    %2511 = vmatprep.subr.mxu0 0.0
    %2512 = vmatpush1.msra.mxu0 0.0
    %2513 = vmatprep.subr.mxu0 0.0
    %2514 = vmatpush1.msra.mxu0 0.0
    %2515 = vmatprep.subr.mxu0 0.0
    %2516 = vmatpush1.msra.mxu0 0.0
    %2517 = vmatprep.subr.mxu0 0.0
    %2518 = vmatpush1.msra.mxu0 0.0
    %2519 = vmatprep.subr.mxu0 0.0
    %2520 = vmatpush1.msra.mxu0 0.0
    %2521 = vmatprep.subr.mxu0 0.0
    %2522 = vmatpush1.msra.mxu0 0.0
    %2523 = vmatprep.subr.mxu0 0.0
    %2524 = vmatpush1.msra.mxu0 0.0
    %2525 = vmatprep.subr.mxu0 0.0
    %2526 = vmatpush1.msra.mxu0 0.0
    %2527 = vmatprep.subr.mxu0 0.0
    %2528 = vmatpush1.msra.mxu0 0.0
    %2529 = vmatprep.subr.mxu0 0.0
    %2530 = vmatpush1.msra.mxu0 0.0
    %2531 = vmatprep.subr.mxu0 0.0
    %2532 = vmatpush1.msra.mxu0 0.0
    %2533 = vmatprep.subr.mxu0 0.0
    %2534 = vmatpush1.msra.mxu0 0.0
    %2535 = vmatprep.subr.mxu0 0.0
    %2536 = vmatpush1.msra.mxu0 0.0
    %2537 = vmatprep.subr.mxu0 0.0
    %2538 = vmatpush1.msra.mxu0 0.0
    %2539 = vmatprep.subr.mxu0 0.0
    %2540 = vmatpush1.msra.mxu0 0.0
    %2541 = vmatprep.subr.mxu0 0.0
    %2542 = vmatpush1.msra.mxu0 0.0
    %2543 = vmatprep.subr.mxu0 0.0
    %2544 = vmatpush1.msra.mxu0 0.0
    %2545 = vmatprep.subr.mxu0 0.0
    %2546 = vmatpush1.msra.mxu0 0.0
    %2547 = vmatprep.subr.mxu0 0.0
    %2548 = vmatpush1.msra.mxu0 0.0
    %2549 = vmatprep.subr.mxu0 0.0
    %2550 = vmatpush1.msra.mxu0 0.0
    %2551 = vmatprep.subr.mxu0 0.0
    %2552 = vmatpush1.msra.mxu0 0.0
    %2553 = vmatprep.subr.mxu0 0.0
    %2554 = vmatpush1.msra.mxu0 0.0
    %2555 = vmatprep.mubr.f32.mxu0 0.0
    %2556 = vmatmul.mubr.f32.gmra.mrb[0].mxu0 %v2480
    %v2557 = vpop.f32.mrb[0].mxu0
    %v2558 = vadd.f32 0.0, %v2557
    %v2559 = vpop.f32.mrb[0].mxu0
    %2560 = vmatprep.mubr.f32.mxu0 0.0
    %2561 = vmatmul.mubr.f32.gmra.mrb[0].mxu0 %v2483
    %v2562 = vpop.f32.mrb[0].mxu0
    %v2563 = vadd.f32 0.0, %v2562
    %v2564 = vpop.f32.mrb[0].mxu0
    %2565 = vmatprep.mubr.f32.mxu0 0.0
    %2566 = vmatmul.mubr.f32.gmra.mrb[0].mxu0 %v2486
    %v2567 = vpop.f32.mrb[0].mxu0
    %v2568 = vadd.f32 0.0, %v2567
    %v2569 = vpop.f32.mrb[0].mxu0
    %2570 = vmatprep.mubr.f32.mxu0 0.0
    %2571 = vmatmul.mubr.f32.gmra.mrb[0].mxu0 %v2489
    %v2572 = vpop.f32.mrb[0].mxu0
    %v2573 = vadd.f32 0.0, %v2572
    %v2574 = vpop.f32.mrb[0].mxu0
    %2575 = vdwg.mxu0
    %v2577 = vsel %vm203, %v2466, 0
    %v2580 = vsel %vm203, %v2467, 0
    %v2583 = vsel %vm203, %v2468, 0
    %v2586 = vsel %vm203, %v2469, 0
    %2588 = vmatprep.subr.mxu0 0.0
    %2589 = vmatpush1.msra.mxu0 %v2470
    %2590 = vmatprep.subr.mxu0 0.0
    %2591 = vmatpush1.msra.mxu0 %v2471
    %2592 = vmatprep.subr.mxu0 0.0
    %2593 = vmatpush1.msra.mxu0 %v2472
    %2594 = vmatprep.subr.mxu0 0.0
    %2595 = vmatpush1.msra.mxu0 %v2473
    %2596 = vmatprep.subr.mxu0 0.0
    %2597 = vmatpush1.msra.mxu0 0.0
    %2598 = vmatprep.subr.mxu0 0.0
    %2599 = vmatpush1.msra.mxu0 0.0
    %2600 = vmatprep.subr.mxu0 0.0
    %2601 = vmatpush1.msra.mxu0 0.0
    %2602 = vmatprep.subr.mxu0 0.0
    %2603 = vmatpush1.msra.mxu0 0.0
    %2604 = vmatprep.subr.mxu0 0.0
    %2605 = vmatpush1.msra.mxu0 0.0
    %2606 = vmatprep.subr.mxu0 0.0
    %2607 = vmatpush1.msra.mxu0 0.0
    %2608 = vmatprep.subr.mxu0 0.0
    %2609 = vmatpush1.msra.mxu0 0.0
    %2610 = vmatprep.subr.mxu0 0.0
    %2611 = vmatpush1.msra.mxu0 0.0
    %2612 = vmatprep.subr.mxu0 0.0
    %2613 = vmatpush1.msra.mxu0 0.0
    %2614 = vmatprep.subr.mxu0 0.0
    %2615 = vmatpush1.msra.mxu0 0.0
    %2616 = vmatprep.subr.mxu0 0.0
    %2617 = vmatpush1.msra.mxu0 0.0
    %2618 = vmatprep.subr.mxu0 0.0
    %2619 = vmatpush1.msra.mxu0 0.0
    %2620 = vmatprep.subr.mxu0 0.0
    %2621 = vmatpush1.msra.mxu0 0.0
    %2622 = vmatprep.subr.mxu0 0.0
    %2623 = vmatpush1.msra.mxu0 0.0
    %2624 = vmatprep.subr.mxu0 0.0
    %2625 = vmatpush1.msra.mxu0 0.0
    %2626 = vmatprep.subr.mxu0 0.0
    %2627 = vmatpush1.msra.mxu0 0.0
    %2628 = vmatprep.subr.mxu0 0.0
    %2629 = vmatpush1.msra.mxu0 0.0
    %2630 = vmatprep.subr.mxu0 0.0
    %2631 = vmatpush1.msra.mxu0 0.0
    %2632 = vmatprep.subr.mxu0 0.0
    %2633 = vmatpush1.msra.mxu0 0.0
    %2634 = vmatprep.subr.mxu0 0.0
    %2635 = vmatpush1.msra.mxu0 0.0
    %2636 = vmatprep.subr.mxu0 0.0
    %2637 = vmatpush1.msra.mxu0 0.0
    %2638 = vmatprep.subr.mxu0 0.0
    %2639 = vmatpush1.msra.mxu0 0.0
    %2640 = vmatprep.subr.mxu0 0.0
    %2641 = vmatpush1.msra.mxu0 0.0
    %2642 = vmatprep.subr.mxu0 0.0
    %2643 = vmatpush1.msra.mxu0 0.0
    %2644 = vmatprep.subr.mxu0 0.0
    %2645 = vmatpush1.msra.mxu0 0.0
    %2646 = vmatprep.subr.mxu0 0.0
    %2647 = vmatpush1.msra.mxu0 0.0
    %2648 = vmatprep.subr.mxu0 0.0
    %2649 = vmatpush1.msra.mxu0 0.0
    %2650 = vmatprep.subr.mxu0 0.0
    %2651 = vmatpush1.msra.mxu0 0.0
    %2652 = vmatprep.mubr.f32.mxu0 0.0
    %2653 = vmatmul.mubr.f32.gmra.mrb[0].mxu0 %v2577
    %v2654 = vpop.f32.mrb[0].mxu0
    %v2655 = vadd.f32 %v2558, %v2654
    %v2656 = vpop.f32.mrb[0].mxu0
    %2657 = vmatprep.mubr.f32.mxu0 0.0
    %2658 = vmatmul.mubr.f32.gmra.mrb[0].mxu0 %v2580
    %v2659 = vpop.f32.mrb[0].mxu0
    %v2660 = vadd.f32 %v2563, %v2659
    %v2661 = vpop.f32.mrb[0].mxu0
    %2662 = vmatprep.mubr.f32.mxu0 0.0
    %2663 = vmatmul.mubr.f32.gmra.mrb[0].mxu0 %v2583
    %v2664 = vpop.f32.mrb[0].mxu0
    %v2665 = vadd.f32 %v2568, %v2664
    %v2666 = vpop.f32.mrb[0].mxu0
    %2667 = vmatprep.mubr.f32.mxu0 0.0
    %2668 = vmatmul.mubr.f32.gmra.mrb[0].mxu0 %v2586
    %v2669 = vpop.f32.mrb[0].mxu0
    %v2670 = vadd.f32 %v2573, %v2669
    %v2671 = vpop.f32.mrb[0].mxu0
    %2672 = vdwg.mxu0
    %v2673 = vld [vmem:[%s8] sm:$0x1]
    %v2675 = vlaneseq
    %v2676 = vshrl.u32 %v2675, 7
    %v2677 = vsub.s32 0, %v2676
    %v2678 = vrot.slane %v2673, %v2677
    %v2680 = vadd.f32 %v2655, %v2678
    %v2681 = vadd.f32 %v2660, %v2678
    %v2682 = vadd.f32 %v2665, %v2678
    %v2683 = vadd.f32 %v2670, %v2678
    %v2684 = vmax.f32 %v2680, 0.0
    %v2685 = vmax.f32 %v2681, 0.0
    %v2686 = vmax.f32 %v2682, 0.0
    %v2687 = vmax.f32 %v2683, 0.0
    %2688 = vxpose.xlu0.b32.start [1/16] %v2684, 128
    %2689 = vxpose.xlu0.b32.cont [2/16] %v2685, 128
    %2690 = vxpose.xlu0.b32.cont [3/16] 0.0, 128
    %2691 = vxpose.xlu0.b32.cont [4/16] 0.0, 128
    %2692 = vxpose.xlu0.b32.cont [5/16] 0.0, 128
    %2693 = vxpose.xlu0.b32.cont [6/16] 0.0, 128
    %2694 = vxpose.xlu0.b32.cont [7/16] 0.0, 128
    %2695 = vxpose.xlu0.b32.cont [8/16] 0.0, 128
    %2696 = vxpose.xlu0.b32.cont [9/16] 0.0, 128
    %2697 = vxpose.xlu0.b32.cont [10/16] 0.0, 128
    %2698 = vxpose.xlu0.b32.cont [11/16] 0.0, 128
    %2699 = vxpose.xlu0.b32.cont [12/16] 0.0, 128
    %2700 = vxpose.xlu0.b32.cont [13/16] 0.0, 128
    %2701 = vxpose.xlu0.b32.cont [14/16] 0.0, 128
    %2702 = vxpose.xlu0.b32.cont [15/16] 0.0, 128
    %2703 = vxpose.xlu0.b32.end [16/16] 0.0, 128
    %v2704 = vpop.trf.xlu0
    %v2705 = vpop.trf.xlu0
    %v2706 = vpop.trf.xlu0
    %v2707 = vpop.trf.xlu0
    %v2708 = vpop.trf.xlu0
    %v2709 = vpop.trf.xlu0
    %v2710 = vpop.trf.xlu0
    %v2711 = vpop.trf.xlu0
    %v2712 = vpop.trf.xlu0
    %v2713 = vpop.trf.xlu0
    %v2714 = vpop.trf.xlu0
    %v2715 = vpop.trf.xlu0
    %v2716 = vpop.trf.xlu0
    %v2717 = vpop.trf.xlu0
    %v2718 = vpop.trf.xlu0
    %v2719 = vpop.trf.xlu0
    %2720 = vxpose.xlu0.b32.start [1/16] %v2686, 128
    %2721 = vxpose.xlu0.b32.cont [2/16] %v2687, 128
    %2722 = vxpose.xlu0.b32.cont [3/16] 0.0, 128
    %2723 = vxpose.xlu0.b32.cont [4/16] 0.0, 128
    %2724 = vxpose.xlu0.b32.cont [5/16] 0.0, 128
    %2725 = vxpose.xlu0.b32.cont [6/16] 0.0, 128
    %2726 = vxpose.xlu0.b32.cont [7/16] 0.0, 128
    %2727 = vxpose.xlu0.b32.cont [8/16] 0.0, 128
    %2728 = vxpose.xlu0.b32.cont [9/16] 0.0, 128
    %2729 = vxpose.xlu0.b32.cont [10/16] 0.0, 128
    %2730 = vxpose.xlu0.b32.cont [11/16] 0.0, 128
    %2731 = vxpose.xlu0.b32.cont [12/16] 0.0, 128
    %2732 = vxpose.xlu0.b32.cont [13/16] 0.0, 128
    %2733 = vxpose.xlu0.b32.cont [14/16] 0.0, 128
    %2734 = vxpose.xlu0.b32.cont [15/16] 0.0, 128
    %2735 = vxpose.xlu0.b32.end [16/16] 0.0, 128
    %v2736 = vpop.trf.xlu0
    %v2737 = vpop.trf.xlu0
    %v2738 = vpop.trf.xlu0
    %v2739 = vpop.trf.xlu0
    %v2740 = vpop.trf.xlu0
    %v2741 = vpop.trf.xlu0
    %v2742 = vpop.trf.xlu0
    %v2743 = vpop.trf.xlu0
    %v2744 = vpop.trf.xlu0
    %v2745 = vpop.trf.xlu0
    %v2746 = vpop.trf.xlu0
    %v2747 = vpop.trf.xlu0
    %v2748 = vpop.trf.xlu0
    %v2749 = vpop.trf.xlu0
    %v2750 = vpop.trf.xlu0
    %v2751 = vpop.trf.xlu0
    %2752 = vst.msk [vmem:[%s9] sm:$0xff] %vm1066, %v2704
    %2753 = vst.msk [vmem:[%s9 + $0x8] sm:$0xff] %vm1066, %v2705
    %2754 = vst.msk [vmem:[%s9 + $0x10] sm:$0xff] %vm1066, %v2706
    %2755 = vst.msk [vmem:[%s9 + $0x18] sm:$0xff] %vm1066, %v2707
    %2756 = vst.msk [vmem:[%s9 + $0x20] sm:$0xff] %vm1066, %v2736
    %2757 = vst.msk [vmem:[%s9 + $0x28] sm:$0xff] %vm1066, %v2737
    %2758 = vst.msk [vmem:[%s9 + $0x30] sm:$0xff] %vm1066, %v2738
    %2759 = vst.msk [vmem:[%s9 + $0x38] sm:$0xff] %vm1066, %v2739
    // Predicated region
    $region42: #{fusion3_forward.1} parent=1 // pred_check
      _
    $region43: #{fusion3_forward.1} parent=1 // pred_check_branch
      %2761 = sbr.rel (0) target = $region45
    $region44: #{fusion3_forward.1} parent=1 // pred_region
      _
    $region45: #{fusion3_forward.1} parent=1 // pred_fallthru
      _
    // Predicated region
    $region46: #{fusion3_forward.1} parent=1 // pred_check
      _
    $region47: #{fusion3_forward.1} parent=1 // pred_check_branch
      %2763 = sbr.rel (0) target = $region49
    $region48: #{fusion3_forward.1} parent=1 // pred_region
      _
    $region49: #{fusion3_forward.1} parent=1 // pred_fallthru
      _
    %2764 = vsyncpa [#allocation3], 1

</llo_original>
